<compile_context>
chip_gen: v7x
topology: tpu7x:2x2x1
jax: 0.10.0
libtpu: 0.0.40
codegen_flags: <defaults>
</compile_context>

<pallas_src>
import jax
import jax.numpy as jnp
from jax.experimental import pallas as pl
from jax.experimental.pallas import tpu as pltpu

EPSILON = 1e-8
LANE = 128


def _round_up(v, m):
    return ((v + m - 1) // m) * m


def _genblock_kernel(w_ref, sw_ref, sb_ref, wsq_ref, cw_ref, xp_ref, noise_ref,
                     ns_ref, o_ref, patch_ref):
    """One grid step == one batch sample (NHWC, channels padded to 128 lanes).

    Refs (per step):
      w_ref     (1, 1, S)               latent w for this sample
      sw_ref    (S, Cin)                style Linear weight (transposed, padded)
      sb_ref    (1, Cin)                style Linear bias (padded)
      wsq_ref   (Cin, Cout)             sum over the 9 taps of conv_weight^2
      cw_ref    (9*Cin, Cout)   bf16    shared un-modulated conv weight, tap-major
      xp_ref    (1, H+2, W+2, Cin)      input feature map, zero spatial border
      noise_ref (1, H, W, 1)            per-sample noise map
      ns_ref    (1, 1)  SMEM            noise strength scalar
      o_ref     (1, H, W, Cout)         output (NHWC)
      patch_ref (H*W, 9*Cin)    bf16    VMEM scratch: im2col patch (tap-major K)
    """
    H, W, Cout = o_ref.shape[1], o_ref.shape[2], o_ref.shape[3]
    Cin = xp_ref.shape[3]

    # ---- style = Linear(style_dim -> Cin)(w) ----
    style = (jnp.dot(w_ref[0], sw_ref[...], preferred_element_type=jnp.float32)
             + sb_ref[...])                                             # (1, Cin)

    # ---- demodulation factor per output channel (exact folded form):
    #      rsqrt(sum_{cin,k} (style[cin]*w[cout,cin,k])^2 + eps)
    #    = rsqrt((style^2) @ sum_k(w^2) + eps)
    demod = jax.lax.rsqrt(
        jnp.dot(style * style, wsq_ref[...],
                preferred_element_type=jnp.float32) + EPSILON)          # (1, Cout)

    s3 = style.reshape(1, 1, Cin)

    # ---- im2col with the style modulation fused in: for each of the 9 taps,
    #      read the shifted slab of the (host-)padded input, modulate, cast to
    #      bf16 and write a lane-aligned column block of the patch.  The zero
    #      border comes for free from the host-side pad (0 * style == 0). ----
    for ky in range(3):
        for kx in range(3):
            t = 3 * ky + kx
            slab = (xp_ref[0, ky:ky + H, kx:kx + W, :] * s3)            # (H, W, Cin) f32
            patch_ref[:, t * Cin:(t + 1) * Cin] = (
                slab.astype(patch_ref.dtype).reshape(H * W, Cin))

    # ---- single large-K bf16 matmul, f32 accumulation on the MXU ----
    acc = jnp.dot(patch_ref[...], cw_ref[...],
                  preferred_element_type=jnp.float32)                   # (H*W, Cout)
    out = acc.reshape(H, W, Cout) * demod.reshape(1, 1, Cout)

    # ---- noise add (broadcast over channel) + LeakyReLU(0.2), f32 epilogue ----
    out = out + ns_ref[0, 0] * noise_ref[0]
    out = jnp.where(out >= 0.0, out, 0.2 * out)
    o_ref[0] = out.astype(o_ref.dtype)


def generator_block_forward(x_nchw, w_lat, params, noise_b1hw, upsample=False):
    """Pallas implementation of GeneratorBlock.forward (PyTorch NCHW interface).

    x_nchw     : (B, Cin, H, W)   float32
    w_lat      : (B, style_dim)   float32
    noise_b1hw : (B, 1, H', W')   float32  (H', W' are post-upsample sizes)
    """
    if upsample:
        B, C, H, W = x_nchw.shape
        # nn.Upsample(scale_factor=2, mode='bilinear', align_corners=False)
        x_nchw = jax.image.resize(x_nchw, (B, C, 2 * H, 2 * W), method='bilinear')
        # TODO(synk): fuse the 2x bilinear upsample into the kernel's input
        # strip (and keep the whole generator NHWC) to drop the extra HBM pass.

    B, Cin, H, W = x_nchw.shape
    Cout = params['conv_weight'].shape[0]
    S = params['style_w'].shape[0]

    # Pad channels to lane width (128) for lane-dense, aligned loads/stores.
    Cin_p = _round_up(Cin, LANE)
    Cout_p = _round_up(Cout, LANE)

    # NCHW -> NHWC, channel pad to lanes, and 1-pixel spatial zero border for
    # the 3x3 SAME conv — all fused into one pad (one HBM pass).
    x_nhwc = jnp.transpose(x_nchw, (0, 2, 3, 1))                        # (B, H, W, Cin)
    x_pad = jnp.pad(x_nhwc, ((0, 0), (1, 1), (1, 1), (0, Cin_p - Cin)))  # (B, H+2, W+2, Cin_p)
    noise_nhw1 = jnp.transpose(noise_b1hw, (0, 2, 3, 1))                # (B, H, W, 1)
    w3 = w_lat.reshape(B, 1, S)

    sw = jnp.pad(params['style_w'], ((0, 0), (0, Cin_p - Cin)))         # (S, Cin_p)
    sb = jnp.pad(params['style_b'], ((0, 0), (0, Cin_p - Cin)))         # (1, Cin_p)

    cw4 = params['conv_weight']                                         # (Cout, Cin, 3, 3)
    # Per-(cin, cout) sum over the 9 taps of w^2 — feeds the folded demodulation.
    wsq = jnp.pad(jnp.transpose(jnp.sum(cw4 * cw4, axis=(2, 3)), (1, 0)),
                  ((0, Cin_p - Cin), (0, Cout_p - Cout)))               # (Cin_p, Cout_p)
    # Shared un-modulated conv weight, tap-major contraction, bf16 for the MXU.
    cw = jnp.transpose(cw4, (2, 3, 1, 0)).reshape(9, Cin, Cout)
    cw = jnp.pad(cw, ((0, 0), (0, Cin_p - Cin), (0, Cout_p - Cout)))
    cw = cw.reshape(9 * Cin_p, Cout_p).astype(jnp.bfloat16)

    out_nhwc = pl.pallas_call(
        _genblock_kernel,
        out_shape=jax.ShapeDtypeStruct((B, H, W, Cout_p), jnp.float32),
        grid_spec=pltpu.PrefetchScalarGridSpec(
            num_scalar_prefetch=0,
            grid=(B,),
            in_specs=[
                pl.BlockSpec((1, 1, S), lambda b: (b, 0, 0)),              # w latent
                pl.BlockSpec((S, Cin_p), lambda b: (0, 0)),                # style W
                pl.BlockSpec((1, Cin_p), lambda b: (0, 0)),                # style b
                pl.BlockSpec((Cin_p, Cout_p), lambda b: (0, 0)),           # sum_k w^2
                pl.BlockSpec((9 * Cin_p, Cout_p), lambda b: (0, 0)),       # conv W (bf16)
                pl.BlockSpec((1, H + 2, W + 2, Cin_p),
                             lambda b: (b, 0, 0, 0)),                      # padded x
                pl.BlockSpec((1, H, W, 1), lambda b: (b, 0, 0, 0)),        # noise
                pl.BlockSpec(memory_space=pltpu.MemorySpace.SMEM),         # strength
            ],
            out_specs=pl.BlockSpec((1, H, W, Cout_p), lambda b: (b, 0, 0, 0)),
            scratch_shapes=[
                pltpu.VMEM((H * W, 9 * Cin_p), jnp.bfloat16),              # im2col
            ],
        ),
        # Batch axis is parallel (v7x 2-TC sharding is safe: no cross-step carry).
        compiler_params=pltpu.CompilerParams(dimension_semantics=("parallel",)),
    )(w3, sw, sb, wsq, cw, x_pad, noise_nhw1, params['noise_strength'])

    # Drop channel padding, return PyTorch-style NCHW.
    return jnp.transpose(out_nhwc[..., :Cout], (0, 3, 1, 2))


def ref_forward(x_nchw, w_lat, params, noise_b1hw, upsample=False):
    """Pure-JAX f32 reference (mirrors the PyTorch code path)."""
    if upsample:
        B, C, H, W = x_nchw.shape
        x_nchw = jax.image.resize(x_nchw, (B, C, 2 * H, 2 * W), method='bilinear')
    B = x_nchw.shape[0]
    style = w_lat @ params['style_w'] + params['style_b'][0]            # (B, Cin)
    wt = params['conv_weight']                                          # (Cout, Cin, 3, 3)
    weights = style[:, None, :, None, None] * wt[None]                  # (B, Cout, Cin, 3, 3)
    d = jax.lax.rsqrt(jnp.sum(weights ** 2, axis=(2, 3, 4), keepdims=True) + EPSILON)
    weights = weights * d
    outs = []
    for b in range(B):
        outs.append(jax.lax.conv_general_dilated(
            x_nchw[b:b + 1], weights[b], window_strides=(1, 1), padding='SAME',
            dimension_numbers=('NCHW', 'OIHW', 'NCHW'),
            preferred_element_type=jnp.float32))
    out = jnp.concatenate(outs, axis=0)
    out = out + params['noise_strength'][0, 0] * noise_b1hw
    return jnp.where(out >= 0.0, out, 0.2 * out)


if __name__ == "__main__":
    B, Cin, Cout, S, H, W = 2, 4, 8, 16, 16, 16

    key = jax.random.PRNGKey(0)
    k_x, k_w, k_sw, k_cw, k_noise = jax.random.split(key, 5)

    # Deterministic parameter init (shapes match the PyTorch __init__).
    # style_converter: Linear(S -> Cin), bias initialised to ones (as in module).
    style_w = (jax.random.uniform(k_sw, (S, Cin), jnp.float32, -1.0, 1.0)
               / jnp.sqrt(S))
    style_b = jnp.ones((1, Cin), jnp.float32)
    # conv weight: kaiming_normal_ fan_in, leaky_relu(a=0) -> std = sqrt(2/fan_in)
    fan_in = Cin * 3 * 3
    conv_weight = (jax.random.normal(k_cw, (Cout, Cin, 3, 3), jnp.float32)
                   * jnp.sqrt(2.0 / fan_in))
    # noise_strength is a learnable scalar (init 0 in the module); use a nonzero
    # deterministic value so the noise path is exercised.
    noise_strength = jnp.full((1, 1), 0.1, jnp.float32)

    params = dict(style_w=style_w, style_b=style_b, conv_weight=conv_weight,
                  noise_strength=noise_strength)

    x = jax.random.normal(k_x, (B, Cin, H, W), jnp.float32)
    w_lat = jax.random.normal(k_w, (B, S), jnp.float32)
    # torch.randn noise drawn once here (deterministic) and fed to both paths.
    noise = jax.random.normal(k_noise, (B, 1, H, W), jnp.float32)

    out = generator_block_forward(x, w_lat, params, noise, upsample=False)
    out = jax.block_until_ready(out)

    ref = jax.block_until_ready(ref_forward(x, w_lat, params, noise, upsample=False))
    assert out.shape == (B, Cout, H, W), out.shape
    max_err = float(jnp.max(jnp.abs(out - ref)))
    # bf16 matmul operands (f32 accumulation) -> slightly loosened tolerance.
    tol = 1e-3 + 3e-2 * float(jnp.max(jnp.abs(ref)))
    assert max_err < tol, f"max abs error too large: {max_err} (tol {tol})"

    print("KERNEL_OK")
</pallas_src>

<mosaic_0001>
module attributes {stable_mosaic.version = 11 : i64} {
  func.func @_genblock_kernel(%arg0: i32, %arg1: memref<1x1x16xf32, #tpu.memory_space<vmem>>, %arg2: memref<16x128xf32, #tpu.memory_space<vmem>>, %arg3: memref<1x128xf32, #tpu.memory_space<vmem>>, %arg4: memref<128x128xf32, #tpu.memory_space<vmem>>, %arg5: memref<1152x128xbf16, #tpu.memory_space<vmem>>, %arg6: memref<1x18x18x128xf32, #tpu.memory_space<vmem>>, %arg7: memref<1x16x16x1xf32, #tpu.memory_space<vmem>>, %arg8: memref<1x1xf32, #tpu.memory_space<smem>>, %arg9: memref<1x16x16x128xf32, #tpu.memory_space<vmem>>, %arg10: memref<256x1152xbf16, #tpu.memory_space<vmem>>) attributes {dimension_semantics = [#tpu.dimension_semantics<parallel>], iteration_bounds = array<i64: 2>, scalar_prefetch = 0 : i64, scratch_operands = 1 : i64, tpu.core_type = #tpu.core_type<tc>, window_params = [{transform_indices = @transform_0, window_bounds = array<i64: 1, 1, 16>}, {pipeline_mode = #tpu.pipeline_mode<synchronous>, transform_indices = @transform_1, window_bounds = array<i64: 16, 128>}, {pipeline_mode = #tpu.pipeline_mode<synchronous>, transform_indices = @transform_2, window_bounds = array<i64: 1, 128>}, {pipeline_mode = #tpu.pipeline_mode<synchronous>, transform_indices = @transform_3, window_bounds = array<i64: 128, 128>}, {pipeline_mode = #tpu.pipeline_mode<synchronous>, transform_indices = @transform_4, window_bounds = array<i64: 1152, 128>}, {transform_indices = @transform_5, window_bounds = array<i64: 1, 18, 18, 128>}, {transform_indices = @transform_6, window_bounds = array<i64: 1, 16, 16, 1>}, {transform_indices = @transform_7, window_bounds = array<i64: 1, 1>}, {transform_indices = @transform_8, window_bounds = array<i64: 1, 16, 16, 128>}]} {
    %c0 = arith.constant 0 : index
    %c0_0 = arith.constant 0 : index
    %c0_1 = arith.constant 0 : index
    %0 = vector.load %arg1[%c0, %c0_0, %c0_1] : memref<1x1x16xf32, #tpu.memory_space<vmem>>, vector<1x1x16xf32>
    %1 = vector.shape_cast %0 : vector<1x1x16xf32> to vector<1x16xf32>
    %c0_2 = arith.constant 0 : index
    %c0_3 = arith.constant 0 : index
    %2 = vector.load %arg2[%c0_2, %c0_3] : memref<16x128xf32, #tpu.memory_space<vmem>>, vector<16x128xf32>
    %cst = arith.constant dense<0.000000e+00> : vector<1x128xf32>
    %3 = tpu.matmul %1, %2, %cst {dimension_numbers = #tpu.dot_dimension_numbers<[1], [0], [0], [1], [0, 0, 1, 1], [], []>} : vector<1x16xf32>, vector<16x128xf32>, vector<1x128xf32> -> vector<1x128xf32>
    %c0_4 = arith.constant 0 : index
    %c0_5 = arith.constant 0 : index
    %4 = vector.load %arg3[%c0_4, %c0_5] : memref<1x128xf32, #tpu.memory_space<vmem>>, vector<1x128xf32>
    %5 = arith.addf %3, %4 : vector<1x128xf32>
    %6 = arith.mulf %5, %5 : vector<1x128xf32>
    %c0_6 = arith.constant 0 : index
    %c0_7 = arith.constant 0 : index
    %7 = vector.load %arg4[%c0_6, %c0_7] : memref<128x128xf32, #tpu.memory_space<vmem>>, vector<128x128xf32>
    %cst_8 = arith.constant dense<0.000000e+00> : vector<1x128xf32>
    %8 = tpu.matmul %6, %7, %cst_8 {dimension_numbers = #tpu.dot_dimension_numbers<[1], [0], [0], [1], [0, 0, 1, 1], [], []>} : vector<1x128xf32>, vector<128x128xf32>, vector<1x128xf32> -> vector<1x128xf32>
    %cst_9 = arith.constant 9.99999993E-9 : f32
    %9 = vector.broadcast %cst_9 : f32 to vector<1x128xf32>
    %10 = arith.addf %8, %9 : vector<1x128xf32>
    %11 = math.rsqrt %10 : vector<1x128xf32>
    %12 = vector.shape_cast %5 : vector<1x128xf32> to vector<1x1x128xf32>
    %c0_10 = arith.constant 0 : index
    %c0_11 = arith.constant 0 : index
    %c0_12 = arith.constant 0 : index
    %c0_13 = arith.constant 0 : index
    %13 = vector.load %arg6[%c0_10, %c0_11, %c0_12, %c0_13] : memref<1x18x18x128xf32, #tpu.memory_space<vmem>>, vector<1x16x16x128xf32>
    %14 = vector.shape_cast %13 : vector<1x16x16x128xf32> to vector<16x16x128xf32>
    %15 = vector.broadcast %12 : vector<1x1x128xf32> to vector<16x16x128xf32>
    %16 = arith.mulf %14, %15 : vector<16x16x128xf32>
    %17 = arith.truncf %16 : vector<16x16x128xf32> to vector<16x16x128xbf16>
    %18 = vector.shape_cast %17 : vector<16x16x128xbf16> to vector<256x128xbf16>
    %c0_14 = arith.constant 0 : index
    %c0_15 = arith.constant 0 : index
    %19 = vector.load %arg10[%c0_14, %c0_15] : memref<256x1152xbf16, #tpu.memory_space<vmem>>, vector<256x128xbf16>
    tpu.vector_store %arg10[%c0_14, %c0_15], %18 {strides = array<i32>} : memref<256x1152xbf16, #tpu.memory_space<vmem>>, vector<256x128xbf16>,
    %c0_16 = arith.constant 0 : index
    %c0_17 = arith.constant 0 : index
    %c1 = arith.constant 1 : index
    %c0_18 = arith.constant 0 : index
    %20 = vector.load %arg6[%c0_16, %c0_17, %c1, %c0_18] : memref<1x18x18x128xf32, #tpu.memory_space<vmem>>, vector<1x16x16x128xf32>
    %21 = vector.shape_cast %20 : vector<1x16x16x128xf32> to vector<16x16x128xf32>
    %22 = vector.broadcast %12 : vector<1x1x128xf32> to vector<16x16x128xf32>
    %23 = arith.mulf %21, %22 : vector<16x16x128xf32>
    %24 = arith.truncf %23 : vector<16x16x128xf32> to vector<16x16x128xbf16>
    %25 = vector.shape_cast %24 : vector<16x16x128xbf16> to vector<256x128xbf16>
    %c0_19 = arith.constant 0 : index
    %c128 = arith.constant 128 : index
    %26 = vector.load %arg10[%c0_19, %c128] : memref<256x1152xbf16, #tpu.memory_space<vmem>>, vector<256x128xbf16>
    tpu.vector_store %arg10[%c0_19, %c128], %25 {strides = array<i32>} : memref<256x1152xbf16, #tpu.memory_space<vmem>>, vector<256x128xbf16>,
    %c0_20 = arith.constant 0 : index
    %c0_21 = arith.constant 0 : index
    %c2 = arith.constant 2 : index
    %c0_22 = arith.constant 0 : index
    %27 = vector.load %arg6[%c0_20, %c0_21, %c2, %c0_22] : memref<1x18x18x128xf32, #tpu.memory_space<vmem>>, vector<1x16x16x128xf32>
    %28 = vector.shape_cast %27 : vector<1x16x16x128xf32> to vector<16x16x128xf32>
    %29 = vector.broadcast %12 : vector<1x1x128xf32> to vector<16x16x128xf32>
    %30 = arith.mulf %28, %29 : vector<16x16x128xf32>
    %31 = arith.truncf %30 : vector<16x16x128xf32> to vector<16x16x128xbf16>
    %32 = vector.shape_cast %31 : vector<16x16x128xbf16> to vector<256x128xbf16>
    %c0_23 = arith.constant 0 : index
    %c256 = arith.constant 256 : index
    %33 = vector.load %arg10[%c0_23, %c256] : memref<256x1152xbf16, #tpu.memory_space<vmem>>, vector<256x128xbf16>
    tpu.vector_store %arg10[%c0_23, %c256], %32 {strides = array<i32>} : memref<256x1152xbf16, #tpu.memory_space<vmem>>, vector<256x128xbf16>,
    %c0_24 = arith.constant 0 : index
    %c1_25 = arith.constant 1 : index
    %c0_26 = arith.constant 0 : index
    %c0_27 = arith.constant 0 : index
    %34 = vector.load %arg6[%c0_24, %c1_25, %c0_26, %c0_27] : memref<1x18x18x128xf32, #tpu.memory_space<vmem>>, vector<1x16x16x128xf32>
    %35 = vector.shape_cast %34 : vector<1x16x16x128xf32> to vector<16x16x128xf32>
    %36 = vector.broadcast %12 : vector<1x1x128xf32> to vector<16x16x128xf32>
    %37 = arith.mulf %35, %36 : vector<16x16x128xf32>
    %38 = arith.truncf %37 : vector<16x16x128xf32> to vector<16x16x128xbf16>
    %39 = vector.shape_cast %38 : vector<16x16x128xbf16> to vector<256x128xbf16>
    %c0_28 = arith.constant 0 : index
    %c384 = arith.constant 384 : index
    %40 = vector.load %arg10[%c0_28, %c384] : memref<256x1152xbf16, #tpu.memory_space<vmem>>, vector<256x128xbf16>
    tpu.vector_store %arg10[%c0_28, %c384], %39 {strides = array<i32>} : memref<256x1152xbf16, #tpu.memory_space<vmem>>, vector<256x128xbf16>,
    %c0_29 = arith.constant 0 : index
    %c1_30 = arith.constant 1 : index
    %c1_31 = arith.constant 1 : index
    %c0_32 = arith.constant 0 : index
    %41 = vector.load %arg6[%c0_29, %c1_30, %c1_31, %c0_32] : memref<1x18x18x128xf32, #tpu.memory_space<vmem>>, vector<1x16x16x128xf32>
    %42 = vector.shape_cast %41 : vector<1x16x16x128xf32> to vector<16x16x128xf32>
    %43 = vector.broadcast %12 : vector<1x1x128xf32> to vector<16x16x128xf32>
    %44 = arith.mulf %42, %43 : vector<16x16x128xf32>
    %45 = arith.truncf %44 : vector<16x16x128xf32> to vector<16x16x128xbf16>
    %46 = vector.shape_cast %45 : vector<16x16x128xbf16> to vector<256x128xbf16>
    %c0_33 = arith.constant 0 : index
    %c512 = arith.constant 512 : index
    %47 = vector.load %arg10[%c0_33, %c512] : memref<256x1152xbf16, #tpu.memory_space<vmem>>, vector<256x128xbf16>
    tpu.vector_store %arg10[%c0_33, %c512], %46 {strides = array<i32>} : memref<256x1152xbf16, #tpu.memory_space<vmem>>, vector<256x128xbf16>,
    %c0_34 = arith.constant 0 : index
    %c1_35 = arith.constant 1 : index
    %c2_36 = arith.constant 2 : index
    %c0_37 = arith.constant 0 : index
    %48 = vector.load %arg6[%c0_34, %c1_35, %c2_36, %c0_37] : memref<1x18x18x128xf32, #tpu.memory_space<vmem>>, vector<1x16x16x128xf32>
    %49 = vector.shape_cast %48 : vector<1x16x16x128xf32> to vector<16x16x128xf32>
    %50 = vector.broadcast %12 : vector<1x1x128xf32> to vector<16x16x128xf32>
    %51 = arith.mulf %49, %50 : vector<16x16x128xf32>
    %52 = arith.truncf %51 : vector<16x16x128xf32> to vector<16x16x128xbf16>
    %53 = vector.shape_cast %52 : vector<16x16x128xbf16> to vector<256x128xbf16>
    %c0_38 = arith.constant 0 : index
    %c640 = arith.constant 640 : index
    %54 = vector.load %arg10[%c0_38, %c640] : memref<256x1152xbf16, #tpu.memory_space<vmem>>, vector<256x128xbf16>
    tpu.vector_store %arg10[%c0_38, %c640], %53 {strides = array<i32>} : memref<256x1152xbf16, #tpu.memory_space<vmem>>, vector<256x128xbf16>,
    %c0_39 = arith.constant 0 : index
    %c2_40 = arith.constant 2 : index
    %c0_41 = arith.constant 0 : index
    %c0_42 = arith.constant 0 : index
    %55 = vector.load %arg6[%c0_39, %c2_40, %c0_41, %c0_42] : memref<1x18x18x128xf32, #tpu.memory_space<vmem>>, vector<1x16x16x128xf32>
    %56 = vector.shape_cast %55 : vector<1x16x16x128xf32> to vector<16x16x128xf32>
    %57 = vector.broadcast %12 : vector<1x1x128xf32> to vector<16x16x128xf32>
    %58 = arith.mulf %56, %57 : vector<16x16x128xf32>
    %59 = arith.truncf %58 : vector<16x16x128xf32> to vector<16x16x128xbf16>
    %60 = vector.shape_cast %59 : vector<16x16x128xbf16> to vector<256x128xbf16>
    %c0_43 = arith.constant 0 : index
    %c768 = arith.constant 768 : index
    %61 = vector.load %arg10[%c0_43, %c768] : memref<256x1152xbf16, #tpu.memory_space<vmem>>, vector<256x128xbf16>
    tpu.vector_store %arg10[%c0_43, %c768], %60 {strides = array<i32>} : memref<256x1152xbf16, #tpu.memory_space<vmem>>, vector<256x128xbf16>,
    %c0_44 = arith.constant 0 : index
    %c2_45 = arith.constant 2 : index
    %c1_46 = arith.constant 1 : index
    %c0_47 = arith.constant 0 : index
    %62 = vector.load %arg6[%c0_44, %c2_45, %c1_46, %c0_47] : memref<1x18x18x128xf32, #tpu.memory_space<vmem>>, vector<1x16x16x128xf32>
    %63 = vector.shape_cast %62 : vector<1x16x16x128xf32> to vector<16x16x128xf32>
    %64 = vector.broadcast %12 : vector<1x1x128xf32> to vector<16x16x128xf32>
    %65 = arith.mulf %63, %64 : vector<16x16x128xf32>
    %66 = arith.truncf %65 : vector<16x16x128xf32> to vector<16x16x128xbf16>
    %67 = vector.shape_cast %66 : vector<16x16x128xbf16> to vector<256x128xbf16>
    %c0_48 = arith.constant 0 : index
    %c896 = arith.constant 896 : index
    %68 = vector.load %arg10[%c0_48, %c896] : memref<256x1152xbf16, #tpu.memory_space<vmem>>, vector<256x128xbf16>
    tpu.vector_store %arg10[%c0_48, %c896], %67 {strides = array<i32>} : memref<256x1152xbf16, #tpu.memory_space<vmem>>, vector<256x128xbf16>,
    %c0_49 = arith.constant 0 : index
    %c2_50 = arith.constant 2 : index
    %c2_51 = arith.constant 2 : index
    %c0_52 = arith.constant 0 : index
    %69 = vector.load %arg6[%c0_49, %c2_50, %c2_51, %c0_52] : memref<1x18x18x128xf32, #tpu.memory_space<vmem>>, vector<1x16x16x128xf32>
    %70 = vector.shape_cast %69 : vector<1x16x16x128xf32> to vector<16x16x128xf32>
    %71 = vector.broadcast %12 : vector<1x1x128xf32> to vector<16x16x128xf32>
    %72 = arith.mulf %70, %71 : vector<16x16x128xf32>
    %73 = arith.truncf %72 : vector<16x16x128xf32> to vector<16x16x128xbf16>
    %74 = vector.shape_cast %73 : vector<16x16x128xbf16> to vector<256x128xbf16>
    %c0_53 = arith.constant 0 : index
    %c1024 = arith.constant 1024 : index
    %75 = vector.load %arg10[%c0_53, %c1024] : memref<256x1152xbf16, #tpu.memory_space<vmem>>, vector<256x128xbf16>
    tpu.vector_store %arg10[%c0_53, %c1024], %74 {strides = array<i32>} : memref<256x1152xbf16, #tpu.memory_space<vmem>>, vector<256x128xbf16>,
    %c0_54 = arith.constant 0 : index
    %c0_55 = arith.constant 0 : index
    %76 = vector.load %arg10[%c0_54, %c0_55] : memref<256x1152xbf16, #tpu.memory_space<vmem>>, vector<256x1152xbf16>
    %c0_56 = arith.constant 0 : index
    %c0_57 = arith.constant 0 : index
    %77 = vector.load %arg5[%c0_56, %c0_57] : memref<1152x128xbf16, #tpu.memory_space<vmem>>, vector<1152x128xbf16>
    %cst_58 = arith.constant dense<0.000000e+00> : vector<256x128xf32>
    %78 = tpu.matmul %76, %77, %cst_58 {dimension_numbers = #tpu.dot_dimension_numbers<[1], [0], [0], [1], [0, 0, 1, 1], [], []>} : vector<256x1152xbf16>, vector<1152x128xbf16>, vector<256x128xf32> -> vector<256x128xf32>
    %79 = vector.shape_cast %78 : vector<256x128xf32> to vector<16x16x128xf32>
    %80 = vector.shape_cast %11 : vector<1x128xf32> to vector<1x1x128xf32>
    %81 = vector.broadcast %80 : vector<1x1x128xf32> to vector<16x16x128xf32>
    %82 = arith.mulf %79, %81 : vector<16x16x128xf32>
    %c0_59 = arith.constant 0 : index
    %c0_60 = arith.constant 0 : index
    %83 = memref.load %arg8[%c0_59, %c0_60] : memref<1x1xf32, #tpu.memory_space<smem>>
    %c0_61 = arith.constant 0 : index
    %c0_62 = arith.constant 0 : index
    %c0_63 = arith.constant 0 : index
    %c0_64 = arith.constant 0 : index
    %84 = vector.load %arg7[%c0_61, %c0_62, %c0_63, %c0_64] : memref<1x16x16x1xf32, #tpu.memory_space<vmem>>, vector<1x16x16x1xf32>
    %85 = vector.shape_cast %84 : vector<1x16x16x1xf32> to vector<16x16x1xf32>
    %86 = vector.broadcast %83 : f32 to vector<16x16x1xf32>
    %87 = arith.mulf %86, %85 : vector<16x16x1xf32>
    %88 = vector.broadcast %87 : vector<16x16x1xf32> to vector<16x16x128xf32>
    %89 = arith.addf %82, %88 : vector<16x16x128xf32>
    %cst_65 = arith.constant 0.000000e+00 : f32
    %90 = vector.broadcast %cst_65 : f32 to vector<16x16x128xf32>
    %91 = arith.cmpf oge, %89, %90 : vector<16x16x128xf32>
    %cst_66 = arith.constant 2.000000e-01 : f32
    %92 = vector.broadcast %cst_66 : f32 to vector<16x16x128xf32>
    %93 = arith.mulf %92, %89 : vector<16x16x128xf32>
    %94 = arith.select %91, %89, %93 : vector<16x16x128xi1>, vector<16x16x128xf32>
    %c0_67 = arith.constant 0 : index
    %c0_68 = arith.constant 0 : index
    %c0_69 = arith.constant 0 : index
    %c0_70 = arith.constant 0 : index
    %95 = vector.load %arg9[%c0_67, %c0_68, %c0_69, %c0_70] : memref<1x16x16x128xf32, #tpu.memory_space<vmem>>, vector<1x16x16x128xf32>
    %96 = vector.shape_cast %95 : vector<1x16x16x128xf32> to vector<16x16x128xf32>
    %97 = vector.shape_cast %94 : vector<16x16x128xf32> to vector<1x16x16x128xf32>
    tpu.vector_store %arg9[%c0_67, %c0_68, %c0_69, %c0_70], %97 {strides = array<i32>} : memref<1x16x16x128xf32, #tpu.memory_space<vmem>>, vector<1x16x16x128xf32>,
    return
  }
  func.func @transform_0(%arg0: i32) -> (i32, i32, i32) {
    %c0_i32 = arith.constant 0 : i32
    %c0_i32_0 = arith.constant 0 : i32
    %c0_i32_1 = arith.constant 0 : i32
    return %arg0, %c0_i32, %c0_i32_0 : i32, i32, i32
  }
  func.func @transform_1(%arg0: i32) -> (i32, i32) {
    %c0_i32 = arith.constant 0 : i32
    %c0_i32_0 = arith.constant 0 : i32
    %c0_i32_1 = arith.constant 0 : i32
    return %c0_i32, %c0_i32_0 : i32, i32
  }
  func.func @transform_2(%arg0: i32) -> (i32, i32) {
    %c0_i32 = arith.constant 0 : i32
    %c0_i32_0 = arith.constant 0 : i32
    %c0_i32_1 = arith.constant 0 : i32
    return %c0_i32, %c0_i32_0 : i32, i32
  }
  func.func @transform_3(%arg0: i32) -> (i32, i32) {
    %c0_i32 = arith.constant 0 : i32
    %c0_i32_0 = arith.constant 0 : i32
    %c0_i32_1 = arith.constant 0 : i32
    return %c0_i32, %c0_i32_0 : i32, i32
  }
  func.func @transform_4(%arg0: i32) -> (i32, i32) {
    %c0_i32 = arith.constant 0 : i32
    %c0_i32_0 = arith.constant 0 : i32
    %c0_i32_1 = arith.constant 0 : i32
    return %c0_i32, %c0_i32_0 : i32, i32
  }
  func.func @transform_5(%arg0: i32) -> (i32, i32, i32, i32) {
    %c0_i32 = arith.constant 0 : i32
    %c0_i32_0 = arith.constant 0 : i32
    %c0_i32_1 = arith.constant 0 : i32
    %c0_i32_2 = arith.constant 0 : i32
    return %arg0, %c0_i32, %c0_i32_0, %c0_i32_1 : i32, i32, i32, i32
  }
  func.func @transform_6(%arg0: i32) -> (i32, i32, i32, i32) {
    %c0_i32 = arith.constant 0 : i32
    %c0_i32_0 = arith.constant 0 : i32
    %c0_i32_1 = arith.constant 0 : i32
    %c0_i32_2 = arith.constant 0 : i32
    return %arg0, %c0_i32, %c0_i32_0, %c0_i32_1 : i32, i32, i32, i32
  }
  func.func @transform_7(%arg0: i32) -> (i32, i32) {
    %c0_i32 = arith.constant 0 : i32
    %c0_i32_0 = arith.constant 0 : i32
    %c0_i32_1 = arith.constant 0 : i32
    return %c0_i32, %c0_i32_0 : i32, i32
  }
  func.func @transform_8(%arg0: i32) -> (i32, i32, i32, i32) {
    %c0_i32 = arith.constant 0 : i32
    %c0_i32_0 = arith.constant 0 : i32
    %c0_i32_1 = arith.constant 0 : i32
    %c0_i32_2 = arith.constant 0 : i32
    return %arg0, %c0_i32, %c0_i32_0, %c0_i32_1 : i32, i32, i32, i32
  }
}

</mosaic_0001>

<llo_original>
// kernel: tpu_custom_call.1
$region0: #{tpu_custom_call.1}
  #allocation0 [shape = 'u32[]', space=smem, size = 0x4, offset = 0x4, fixed_abs, tag = 'smem constant byte address 0x4 - core index']
  #allocation1 [shape = 'u32[144,128]{1,0:T(1,128)}', space=vmem, size = 0x12000, scoped, tag = 'internal scratch']
  #allocation2 [shape = 'bf16[256,1152]{1,0:T(16,128)(2,1)}', space=vmem, size = 0x90000, scoped, tag = 'scratch operand']
  #allocation3 [shape = 'f32[1,1]{1,0:T(1,128)S(6)}', space=smem, size = 0x200, scoped, tag = 'scoped memory for tpu_custom_call.1']
  %s0 = inlined_call_operand.vmem [shape: f32[2,1,16], index: 0, kind: input, shape index: {}]
  %s1 = inlined_call_operand.vmem [shape: f32[16,128], index: 1, kind: input, shape index: {}]
  %s2 = inlined_call_operand.vmem [shape: f32[1,128], index: 2, kind: input, shape index: {}]
  %s3 = inlined_call_operand.vmem [shape: f32[128,128], index: 3, kind: input, shape index: {}]
  %s4 = inlined_call_operand.vmem [shape: bf16[1152,128], index: 4, kind: input, shape index: {}]
  %s5 = inlined_call_operand.vmem [shape: f32[2,18,18,128], index: 5, kind: input, shape index: {}]
  %s6 = inlined_call_operand.vmem [shape: f32[2,16,16,1], index: 6, kind: input, shape index: {}]
  %s7 = inlined_call_operand.<no memory space> [shape: f32[1,1], index: 7, kind: input, shape index: {}]
  %s8 = inlined_call_operand.hbm [shape: f32[2,16,16,128], index: 8, kind: output, shape index: {}]
  %s9 = sld [smem:[#allocation0]]
  $region65: #{tpu_custom_call.1} parent=0
    _
  %s11 = ssub.s32 1, %s9
  %s12 = scalar_select 0, %s11, %s9
  %13 = sst [smem:[#allocation3]] %s7
  $region1: #{tpu_custom_call.1} parent=0
    #allocation4 [shape = 'u8[262144]{0}', space=vmem, size = 0x40000, scoped, tag = 'output window, operand 0']
    #allocation5 [shape = 's32[2]{0}', space=sflag, size = 0x8, scoped, tag = 'scoped memory for tpu_custom_call.1']
    %14 = vsyncpa [#allocation5], 0
    %s15 = scalar_lea.sflag [#allocation5], 1
    %16 = vsyncpa %s15, 0
    loop: start=0, step=1, limit=4
    $region2: #{tpu_custom_call.1} parent=1 // loop_pre_header
      _
    $region3: #{tpu_custom_call.1} parent=1 // loop_header
      %s18 = sphi 0, %s22
      %p19 = scmp.ge.s32.totalorder %s18, 4
      %s28 = sphi 0, %s30
      %s31 = sphi 0, %s28
      %s32 = sphi 0, %s31
      %s48 = sphi 0, %s32
      %s52 = sphi 0, %s52
      %s54 = sphi 0, %s52
      %s55 = sphi 0, %s54
      %s69 = sphi 0, %s55
      %s73 = sphi 0, %s73
      %s75 = sphi 0, %s73
      %s76 = sphi 0, %s75
      %s90 = sphi 0, %s76
      %s94 = sphi 0, %s94
      %s96 = sphi 0, %s94
      %s97 = sphi 0, %s96
      %s111 = sphi 0, %s97
      %s115 = sphi 0, %s115
      %s117 = sphi 0, %s115
      %s118 = sphi 0, %s117
      %s132 = sphi 0, %s118
      %s138 = sphi 0, %s140
      %s141 = sphi 0, %s138
      %s142 = sphi 0, %s141
      %s158 = sphi 0, %s142
      %s164 = sphi 0, %s166
      %s167 = sphi 0, %s164
      %s168 = sphi 0, %s167
      %s184 = sphi 0, %s168
      %s188 = sphi 0, %s188
      %s190 = sphi 0, %s188
      %s191 = sphi 0, %s190
      %s205 = sphi 0, %s191
      %s211 = sphi 0, %s213
      %s214 = sphi 0, %s211
      %s215 = sphi 0, %s214
      %s231 = sphi 0, %s215
    $region4: #{tpu_custom_call.1} parent=1 // loop_header_branch
      %21 = sbr.rel (%p19) target = $region8
    $region5: #{tpu_custom_call.1} parent=1 // loop_body
      %s23 = ssub.s32 %s18, 1
      %s24 = ssub.s32 %s18, 2
      %s25 = sadd.s32 %s18, 1
      %s26 = ssub.s32 %s18, %s25
      %p27 = scmp.eq.s32.totalorder %s26, 0
      %s29 = sadd.s32 %s28, 1
      %s30 = scalar_select %p27, %s28, %s29
      %p33 = pneg %p27
      %p34 = scmp.eq.s32.totalorder %s18, 1
      %p35 = por %p33, %p34
      %p36 = scmp.ne.s32.totalorder %s28, %s31
      %p37 = scmp.eq.s32.totalorder %s18, 0
      %p38 = por %p36, %p37
      %p39 = scmp.ne.s32.totalorder %s28, %s31
      %p40 = scmp.eq.s32.totalorder %s23, 1
      %p41 = por %p39, %p40
      %p42 = scmp.ne.s32.totalorder %s31, %s32
      %p43 = scmp.eq.s32.totalorder %s23, 0
      %p44 = por %p42, %p43
      %p45 = scmp.ne.s32.totalorder %s31, %s32
      %p46 = scmp.eq.s32.totalorder %s24, 1
      %p47 = por %p45, %p46
      %p49 = scmp.ne.s32.totalorder %s32, %s48
      %p50 = scmp.eq.s32.totalorder %s24, 0
      %p51 = por %p49, %p50
      %s53 = sadd.s32 %s52, 1
      %p56 = scmp.eq.s32.totalorder %s18, 1
      %p57 = scmp.ne.s32.totalorder %s52, %s54
      %p58 = scmp.eq.s32.totalorder %s18, 0
      %p59 = por %p57, %p58
      %p60 = scmp.ne.s32.totalorder %s52, %s54
      %p61 = scmp.eq.s32.totalorder %s23, 1
      %p62 = por %p60, %p61
      %p63 = scmp.ne.s32.totalorder %s54, %s55
      %p64 = scmp.eq.s32.totalorder %s23, 0
      %p65 = por %p63, %p64
      %p66 = scmp.ne.s32.totalorder %s54, %s55
      %p67 = scmp.eq.s32.totalorder %s24, 1
      %p68 = por %p66, %p67
      %p70 = scmp.ne.s32.totalorder %s55, %s69
      %p71 = scmp.eq.s32.totalorder %s24, 0
      %p72 = por %p70, %p71
      %s74 = sadd.s32 %s73, 1
      %p77 = scmp.eq.s32.totalorder %s18, 1
      %p78 = scmp.ne.s32.totalorder %s73, %s75
      %p79 = scmp.eq.s32.totalorder %s18, 0
      %p80 = por %p78, %p79
      %p81 = scmp.ne.s32.totalorder %s73, %s75
      %p82 = scmp.eq.s32.totalorder %s23, 1
      %p83 = por %p81, %p82
      %p84 = scmp.ne.s32.totalorder %s75, %s76
      %p85 = scmp.eq.s32.totalorder %s23, 0
      %p86 = por %p84, %p85
      %p87 = scmp.ne.s32.totalorder %s75, %s76
      %p88 = scmp.eq.s32.totalorder %s24, 1
      %p89 = por %p87, %p88
      %p91 = scmp.ne.s32.totalorder %s76, %s90
      %p92 = scmp.eq.s32.totalorder %s24, 0
      %p93 = por %p91, %p92
      %s95 = sadd.s32 %s94, 1
      %p98 = scmp.eq.s32.totalorder %s18, 1
      %p99 = scmp.ne.s32.totalorder %s94, %s96
      %p100 = scmp.eq.s32.totalorder %s18, 0
      %p101 = por %p99, %p100
      %p102 = scmp.ne.s32.totalorder %s94, %s96
      %p103 = scmp.eq.s32.totalorder %s23, 1
      %p104 = por %p102, %p103
      %p105 = scmp.ne.s32.totalorder %s96, %s97
      %p106 = scmp.eq.s32.totalorder %s23, 0
      %p107 = por %p105, %p106
      %p108 = scmp.ne.s32.totalorder %s96, %s97
      %p109 = scmp.eq.s32.totalorder %s24, 1
      %p110 = por %p108, %p109
      %p112 = scmp.ne.s32.totalorder %s97, %s111
      %p113 = scmp.eq.s32.totalorder %s24, 0
      %p114 = por %p112, %p113
      %s116 = sadd.s32 %s115, 1
      %p119 = scmp.eq.s32.totalorder %s18, 1
      %p120 = scmp.ne.s32.totalorder %s115, %s117
      %p121 = scmp.eq.s32.totalorder %s18, 0
      %p122 = por %p120, %p121
      %p123 = scmp.ne.s32.totalorder %s115, %s117
      %p124 = scmp.eq.s32.totalorder %s23, 1
      %p125 = por %p123, %p124
      %p126 = scmp.ne.s32.totalorder %s117, %s118
      %p127 = scmp.eq.s32.totalorder %s23, 0
      %p128 = por %p126, %p127
      %p129 = scmp.ne.s32.totalorder %s117, %s118
      %p130 = scmp.eq.s32.totalorder %s24, 1
      %p131 = por %p129, %p130
      %p133 = scmp.ne.s32.totalorder %s118, %s132
      %p134 = scmp.eq.s32.totalorder %s24, 0
      %p135 = por %p133, %p134
      %s136 = ssub.s32 %s18, %s25
      %p137 = scmp.eq.s32.totalorder %s136, 0
      %s139 = sadd.s32 %s138, 1
      %s140 = scalar_select %p137, %s138, %s139
      %p143 = pneg %p137
      %p144 = scmp.eq.s32.totalorder %s18, 1
      %p145 = por %p143, %p144
      %p146 = scmp.ne.s32.totalorder %s138, %s141
      %p147 = scmp.eq.s32.totalorder %s18, 0
      %p148 = por %p146, %p147
      %p149 = scmp.ne.s32.totalorder %s138, %s141
      %p150 = scmp.eq.s32.totalorder %s23, 1
      %p151 = por %p149, %p150
      %p152 = scmp.ne.s32.totalorder %s141, %s142
      %p153 = scmp.eq.s32.totalorder %s23, 0
      %p154 = por %p152, %p153
      %p155 = scmp.ne.s32.totalorder %s141, %s142
      %p156 = scmp.eq.s32.totalorder %s24, 1
      %p157 = por %p155, %p156
      %p159 = scmp.ne.s32.totalorder %s142, %s158
      %p160 = scmp.eq.s32.totalorder %s24, 0
      %p161 = por %p159, %p160
      %s162 = ssub.s32 %s18, %s25
      %p163 = scmp.eq.s32.totalorder %s162, 0
      %s165 = sadd.s32 %s164, 1
      %s166 = scalar_select %p163, %s164, %s165
      %p169 = pneg %p163
      %p170 = scmp.eq.s32.totalorder %s18, 1
      %p171 = por %p169, %p170
      %p172 = scmp.ne.s32.totalorder %s164, %s167
      %p173 = scmp.eq.s32.totalorder %s18, 0
      %p174 = por %p172, %p173
      %p175 = scmp.ne.s32.totalorder %s164, %s167
      %p176 = scmp.eq.s32.totalorder %s23, 1
      %p177 = por %p175, %p176
      %p178 = scmp.ne.s32.totalorder %s167, %s168
      %p179 = scmp.eq.s32.totalorder %s23, 0
      %p180 = por %p178, %p179
      %p181 = scmp.ne.s32.totalorder %s167, %s168
      %p182 = scmp.eq.s32.totalorder %s24, 1
      %p183 = por %p181, %p182
      %p185 = scmp.ne.s32.totalorder %s168, %s184
      %p186 = scmp.eq.s32.totalorder %s24, 0
      %p187 = por %p185, %p186
      %s189 = sadd.s32 %s188, 1
      %p192 = scmp.eq.s32.totalorder %s18, 1
      %p193 = scmp.ne.s32.totalorder %s188, %s190
      %p194 = scmp.eq.s32.totalorder %s18, 0
      %p195 = por %p193, %p194
      %p196 = scmp.ne.s32.totalorder %s188, %s190
      %p197 = scmp.eq.s32.totalorder %s23, 1
      %p198 = por %p196, %p197
      %p199 = scmp.ne.s32.totalorder %s190, %s191
      %p200 = scmp.eq.s32.totalorder %s23, 0
      %p201 = por %p199, %p200
      %p202 = scmp.ne.s32.totalorder %s190, %s191
      %p203 = scmp.eq.s32.totalorder %s24, 1
      %p204 = por %p202, %p203
      %p206 = scmp.ne.s32.totalorder %s191, %s205
      %p207 = scmp.eq.s32.totalorder %s24, 0
      %p208 = por %p206, %p207
      %s209 = ssub.s32 %s18, %s25
      %p210 = scmp.eq.s32.totalorder %s209, 0
      %s212 = sadd.s32 %s211, 1
      %s213 = scalar_select %p210, %s211, %s212
      %p216 = pneg %p210
      %p217 = scmp.eq.s32.totalorder %s18, 1
      %p218 = por %p216, %p217
      %p219 = scmp.ne.s32.totalorder %s211, %s214
      %p220 = scmp.eq.s32.totalorder %s18, 0
      %p221 = por %p219, %p220
      %p222 = scmp.ne.s32.totalorder %s211, %s214
      %p223 = scmp.eq.s32.totalorder %s23, 1
      %p224 = por %p222, %p223
      %p225 = scmp.ne.s32.totalorder %s214, %s215
      %p226 = scmp.eq.s32.totalorder %s23, 0
      %p227 = por %p225, %p226
      %p228 = scmp.ne.s32.totalorder %s214, %s215
      %p229 = scmp.eq.s32.totalorder %s24, 1
      %p230 = por %p228, %p229
      %p232 = scmp.ne.s32.totalorder %s215, %s231
      %p233 = scmp.eq.s32.totalorder %s24, 0
      %p234 = por %p232, %p233
      %p235 = scmp.le.s32.totalorder 1, %s18
      %p236 = scmp.lt.s32.totalorder %s18, 3
      %p237 = pnand %p235, %p236
      %p238 = pneg %p237
      // Predicated region
      $region9: #{tpu_custom_call.1} parent=5 // pred_check
        _
      $region10: #{tpu_custom_call.1} parent=5 // pred_check_branch
        %240 = sbr.rel (%p237) target = $region12
      $region11: #{tpu_custom_call.1} parent=5 // pred_region
        %s241 = ssub.s32 %s18, 1
        // Predicated region
        $region13: #{tpu_custom_call.1} parent=11 // pred_check
          %p242 = pneg %p65
        $region14: #{tpu_custom_call.1} parent=11 // pred_check_branch
          %244 = sbr.rel (%p242) target = $region16
        $region15: #{tpu_custom_call.1} parent=11 // pred_region
          _
        $region16: #{tpu_custom_call.1} parent=11 // pred_fallthru
          _
        // Predicated region
        $region17: #{tpu_custom_call.1} parent=11 // pred_check
          %p245 = pneg %p86
        $region18: #{tpu_custom_call.1} parent=11 // pred_check_branch
          %247 = sbr.rel (%p245) target = $region20
        $region19: #{tpu_custom_call.1} parent=11 // pred_region
          _
        $region20: #{tpu_custom_call.1} parent=11 // pred_fallthru
          _
        // Predicated region
        $region21: #{tpu_custom_call.1} parent=11 // pred_check
          %p248 = pneg %p107
        $region22: #{tpu_custom_call.1} parent=11 // pred_check_branch
          %250 = sbr.rel (%p248) target = $region24
        $region23: #{tpu_custom_call.1} parent=11 // pred_region
          _
        $region24: #{tpu_custom_call.1} parent=11 // pred_fallthru
          _
        // Predicated region
        $region25: #{tpu_custom_call.1} parent=11 // pred_check
          %p251 = pneg %p128
        $region26: #{tpu_custom_call.1} parent=11 // pred_check_branch
          %253 = sbr.rel (%p251) target = $region28
        $region27: #{tpu_custom_call.1} parent=11 // pred_region
          _
        $region28: #{tpu_custom_call.1} parent=11 // pred_fallthru
          _
        // Predicated region
        $region29: #{tpu_custom_call.1} parent=11 // pred_check
          %p254 = pneg %p201
        $region30: #{tpu_custom_call.1} parent=11 // pred_check_branch
          %256 = sbr.rel (%p254) target = $region32
        $region31: #{tpu_custom_call.1} parent=11 // pred_region
          _
        $region32: #{tpu_custom_call.1} parent=11 // pred_fallthru
          _
      $region12: #{tpu_custom_call.1} parent=5 // pred_fallthru
        _
      %p257 = scmp.lt.s32.totalorder %s18, 2
      // Predicated region
      $region33: #{tpu_custom_call.1} parent=5 // pred_check
        %p258 = pneg %p257
      $region34: #{tpu_custom_call.1} parent=5 // pred_check_branch
        %260 = sbr.rel (%p258) target = $region36
      $region35: #{tpu_custom_call.1} parent=5 // pred_region
        // Predicated region
        $region37: #{tpu_custom_call.1} parent=35 // pred_check
          %p261 = pneg %p38
        $region38: #{tpu_custom_call.1} parent=35 // pred_check_branch
          %263 = sbr.rel (%p261) target = $region40
        $region39: #{tpu_custom_call.1} parent=35 // pred_region
          %p264 = scmp.lt.s32.totalorder %s18, 1
          %s265 = scalar_select %p264, %s18, 1
          %s266 = scalar_lea.vmem %s0, %s265
        $region40: #{tpu_custom_call.1} parent=35 // pred_fallthru
          _
        // Predicated region
        $region41: #{tpu_custom_call.1} parent=35 // pred_check
          %p267 = pneg %p148
        $region42: #{tpu_custom_call.1} parent=35 // pred_check_branch
          %269 = sbr.rel (%p267) target = $region44
        $region43: #{tpu_custom_call.1} parent=35 // pred_region
          %p270 = scmp.lt.s32.totalorder %s18, 1
          %s271 = scalar_select %p270, %s18, 1
          %s272 = smul.addr %s271, 54
          %s273 = smul.addr %s272, 8
          %s274 = scalar_lea.vmem %s5, %s273
        $region44: #{tpu_custom_call.1} parent=35 // pred_fallthru
          _
        // Predicated region
        $region45: #{tpu_custom_call.1} parent=35 // pred_check
          %p275 = pneg %p174
        $region46: #{tpu_custom_call.1} parent=35 // pred_check_branch
          %277 = sbr.rel (%p275) target = $region48
        $region47: #{tpu_custom_call.1} parent=35 // pred_region
          %p278 = scmp.lt.s32.totalorder %s18, 1
          %s279 = scalar_select %p278, %s18, 1
          %s280 = smul.addr %s279, 32
          %s281 = smul.addr %s280, 8
          %s282 = scalar_lea.vmem %s6, %s281
        $region48: #{tpu_custom_call.1} parent=35 // pred_fallthru
          _
      $region36: #{tpu_custom_call.1} parent=5 // pred_fallthru
        _
      %p283 = scmp.le.s32.totalorder 1, %s18
      %p284 = scmp.lt.s32.totalorder %s18, 3
      %p285 = pnand %p283, %p284
      %p286 = pneg %p285
      // Predicated region
      $region49: #{tpu_custom_call.1} parent=5 // pred_check
        _
      $region50: #{tpu_custom_call.1} parent=5 // pred_check_branch
        %288 = sbr.rel (%p285) target = $region52
      $region51: #{tpu_custom_call.1} parent=5 // pred_region
        %s289 = ssub.s32 %s18, 1
        %p290 = scmp.lt.s32.totalorder %s23, 1
        %s291 = scalar_select %p290, %s23, 1
        %s292 = scalar_lea.vmem %s0, %s291
        %p293 = pneg %p44
        %p294 = pneg %p41
        %p295 = pneg %p65
        %p296 = pneg %p62
        %p297 = pneg %p86
        %p298 = pneg %p83
        %p299 = pneg %p107
        %p300 = pneg %p104
        %p301 = pneg %p128
        %p302 = pneg %p125
        %p303 = scmp.lt.s32.totalorder %s23, 1
        %s304 = scalar_select %p303, %s23, 1
        %s305 = smul.addr %s304, 54
        %s306 = smul.addr %s305, 8
        %s307 = scalar_lea.vmem %s5, %s306
        %p308 = pneg %p154
        %p309 = pneg %p151
        %p310 = scmp.lt.s32.totalorder %s23, 1
        %s311 = scalar_select %p310, %s23, 1
        %s312 = smul.addr %s311, 32
        %s313 = smul.addr %s312, 8
        %s314 = scalar_lea.vmem %s6, %s313
        %p315 = pneg %p180
        %p316 = pneg %p177
        %p317 = pneg %p201
        %p318 = pneg %p198
        %p319 = pneg %p227
        %p320 = pneg %p224
        %s321 = sand.u32 %s214, 1
        %s322 = scalar_lea.sflag [#allocation5], %s321
        %s323 = sand.u32 %s214, 1
        %s324 = smul.addr %s323, 256
        %s325 = scalar_lea.vmem [#allocation4], %s324
        %p326 = scmp.lt.s32.totalorder %s23, 1
        %s327 = scalar_select %p326, %s23, 1
        %s328 = scalar_lea.vmem %s0, %s327
        %p329 = scmp.lt.s32.totalorder %s23, 1
        %s330 = scalar_select %p329, %s23, 1
        %s331 = smul.addr %s330, 54
        %s332 = smul.addr %s331, 8
        %s333 = scalar_lea.vmem %s5, %s332
        %p334 = scmp.lt.s32.totalorder %s23, 1
        %s335 = scalar_select %p334, %s23, 1
        %s336 = smul.addr %s335, 32
        %s337 = smul.addr %s336, 8
        %s338 = scalar_lea.vmem %s6, %s337
        %v340 = vld [vmem:[%s328] sm:$0x1]
        %v341 = vld [vmem:[%s1] sm:$0xff]
        %v342 = vld [vmem:[%s1 + $0x8] sm:$0xff]
        %v343 = vld [vmem:[%s2] sm:$0x1]
        %vm344 = vcmask 130048
        %v346 = vsel %vm344, %v340, 0
        %348 = vmatprep.subr.mxu0 0.0
        %349 = vmatpush1.msra.mxu0 %v341
        %350 = vmatprep.subr.mxu0 0.0
        %351 = vmatpush1.msra.mxu0 %v342
        %352 = vmatprep.subr.mxu0 0.0
        %353 = vmatpush1.msra.mxu0 0.0
        %354 = vmatprep.subr.mxu0 0.0
        %355 = vmatpush1.msra.mxu0 0.0
        %356 = vmatprep.subr.mxu0 0.0
        %357 = vmatpush1.msra.mxu0 0.0
        %358 = vmatprep.subr.mxu0 0.0
        %359 = vmatpush1.msra.mxu0 0.0
        %360 = vmatprep.subr.mxu0 0.0
        %361 = vmatpush1.msra.mxu0 0.0
        %362 = vmatprep.subr.mxu0 0.0
        %363 = vmatpush1.msra.mxu0 0.0
        %364 = vmatprep.subr.mxu0 0.0
        %365 = vmatpush1.msra.mxu0 0.0
        %366 = vmatprep.subr.mxu0 0.0
        %367 = vmatpush1.msra.mxu0 0.0
        %368 = vmatprep.subr.mxu0 0.0
        %369 = vmatpush1.msra.mxu0 0.0
        %370 = vmatprep.subr.mxu0 0.0
        %371 = vmatpush1.msra.mxu0 0.0
        %372 = vmatprep.subr.mxu0 0.0
        %373 = vmatpush1.msra.mxu0 0.0
        %374 = vmatprep.subr.mxu0 0.0
        %375 = vmatpush1.msra.mxu0 0.0
        %376 = vmatprep.subr.mxu0 0.0
        %377 = vmatpush1.msra.mxu0 0.0
        %378 = vmatprep.subr.mxu0 0.0
        %379 = vmatpush1.msra.mxu0 0.0
        %380 = vmatprep.subr.mxu0 0.0
        %381 = vmatpush1.msra.mxu0 0.0
        %382 = vmatprep.subr.mxu0 0.0
        %383 = vmatpush1.msra.mxu0 0.0
        %384 = vmatprep.subr.mxu0 0.0
        %385 = vmatpush1.msra.mxu0 0.0
        %386 = vmatprep.subr.mxu0 0.0
        %387 = vmatpush1.msra.mxu0 0.0
        %388 = vmatprep.subr.mxu0 0.0
        %389 = vmatpush1.msra.mxu0 0.0
        %390 = vmatprep.subr.mxu0 0.0
        %391 = vmatpush1.msra.mxu0 0.0
        %392 = vmatprep.subr.mxu0 0.0
        %393 = vmatpush1.msra.mxu0 0.0
        %394 = vmatprep.subr.mxu0 0.0
        %395 = vmatpush1.msra.mxu0 0.0
        %396 = vmatprep.subr.mxu0 0.0
        %397 = vmatpush1.msra.mxu0 0.0
        %398 = vmatprep.subr.mxu0 0.0
        %399 = vmatpush1.msra.mxu0 0.0
        %400 = vmatprep.subr.mxu0 0.0
        %401 = vmatpush1.msra.mxu0 0.0
        %402 = vmatprep.subr.mxu0 0.0
        %403 = vmatpush1.msra.mxu0 0.0
        %404 = vmatprep.subr.mxu0 0.0
        %405 = vmatpush1.msra.mxu0 0.0
        %406 = vmatprep.subr.mxu0 0.0
        %407 = vmatpush1.msra.mxu0 0.0
        %408 = vmatprep.subr.mxu0 0.0
        %409 = vmatpush1.msra.mxu0 0.0
        %410 = vmatprep.subr.mxu0 0.0
        %411 = vmatpush1.msra.mxu0 0.0
        %412 = vmatprep.mubr.f32.mxu0 0.0
        %413 = vmatmul.mubr.f32.gmra.mrb[0].mxu0 %v346
        %v414 = vpop.f32.mrb[0].mxu0
        %v415 = vadd.f32 %v343, %v414
        %v416 = vpop.f32.mrb[0].mxu0
        %417 = vdwg.mxu0
        %v418 = vmul.f32 %v415, %v415
        %v419 = vld [vmem:[%s3] sm:$0xff]
        %v420 = vld [vmem:[%s3 + $0x8] sm:$0xff]
        %v421 = vld [vmem:[%s3 + $0x10] sm:$0xff]
        %v422 = vld [vmem:[%s3 + $0x18] sm:$0xff]
        %v423 = vld [vmem:[%s3 + $0x20] sm:$0xff]
        %v424 = vld [vmem:[%s3 + $0x28] sm:$0xff]
        %v425 = vld [vmem:[%s3 + $0x30] sm:$0xff]
        %v426 = vld [vmem:[%s3 + $0x38] sm:$0xff]
        %v427 = vld [vmem:[%s3 + $0x40] sm:$0xff]
        %v428 = vld [vmem:[%s3 + $0x48] sm:$0xff]
        %v429 = vld [vmem:[%s3 + $0x50] sm:$0xff]
        %v430 = vld [vmem:[%s3 + $0x58] sm:$0xff]
        %v431 = vld [vmem:[%s3 + $0x60] sm:$0xff]
        %v432 = vld [vmem:[%s3 + $0x68] sm:$0xff]
        %v433 = vld [vmem:[%s3 + $0x70] sm:$0xff]
        %v434 = vld [vmem:[%s3 + $0x78] sm:$0xff]
        %435 = vmatprep.subr.mxu0 0.0
        %436 = vmatpush1.msra.mxu0 %v419
        %437 = vmatprep.subr.mxu0 0.0
        %438 = vmatpush1.msra.mxu0 %v420
        %439 = vmatprep.subr.mxu0 0.0
        %440 = vmatpush1.msra.mxu0 %v421
        %441 = vmatprep.subr.mxu0 0.0
        %442 = vmatpush1.msra.mxu0 %v422
        %443 = vmatprep.subr.mxu0 0.0
        %444 = vmatpush1.msra.mxu0 %v423
        %445 = vmatprep.subr.mxu0 0.0
        %446 = vmatpush1.msra.mxu0 %v424
        %447 = vmatprep.subr.mxu0 0.0
        %448 = vmatpush1.msra.mxu0 %v425
        %449 = vmatprep.subr.mxu0 0.0
        %450 = vmatpush1.msra.mxu0 %v426
        %451 = vmatprep.subr.mxu0 0.0
        %452 = vmatpush1.msra.mxu0 %v427
        %453 = vmatprep.subr.mxu0 0.0
        %454 = vmatpush1.msra.mxu0 %v428
        %455 = vmatprep.subr.mxu0 0.0
        %456 = vmatpush1.msra.mxu0 %v429
        %457 = vmatprep.subr.mxu0 0.0
        %458 = vmatpush1.msra.mxu0 %v430
        %459 = vmatprep.subr.mxu0 0.0
        %460 = vmatpush1.msra.mxu0 %v431
        %461 = vmatprep.subr.mxu0 0.0
        %462 = vmatpush1.msra.mxu0 %v432
        %463 = vmatprep.subr.mxu0 0.0
        %464 = vmatpush1.msra.mxu0 %v433
        %465 = vmatprep.subr.mxu0 0.0
        %466 = vmatpush1.msra.mxu0 %v434
        %467 = vmatprep.subr.mxu0 0.0
        %468 = vmatpush1.msra.mxu0 0.0
        %469 = vmatprep.subr.mxu0 0.0
        %470 = vmatpush1.msra.mxu0 0.0
        %471 = vmatprep.subr.mxu0 0.0
        %472 = vmatpush1.msra.mxu0 0.0
        %473 = vmatprep.subr.mxu0 0.0
        %474 = vmatpush1.msra.mxu0 0.0
        %475 = vmatprep.subr.mxu0 0.0
        %476 = vmatpush1.msra.mxu0 0.0
        %477 = vmatprep.subr.mxu0 0.0
        %478 = vmatpush1.msra.mxu0 0.0
        %479 = vmatprep.subr.mxu0 0.0
        %480 = vmatpush1.msra.mxu0 0.0
        %481 = vmatprep.subr.mxu0 0.0
        %482 = vmatpush1.msra.mxu0 0.0
        %483 = vmatprep.subr.mxu0 0.0
        %484 = vmatpush1.msra.mxu0 0.0
        %485 = vmatprep.subr.mxu0 0.0
        %486 = vmatpush1.msra.mxu0 0.0
        %487 = vmatprep.subr.mxu0 0.0
        %488 = vmatpush1.msra.mxu0 0.0
        %489 = vmatprep.subr.mxu0 0.0
        %490 = vmatpush1.msra.mxu0 0.0
        %491 = vmatprep.subr.mxu0 0.0
        %492 = vmatpush1.msra.mxu0 0.0
        %493 = vmatprep.subr.mxu0 0.0
        %494 = vmatpush1.msra.mxu0 0.0
        %495 = vmatprep.subr.mxu0 0.0
        %496 = vmatpush1.msra.mxu0 0.0
        %497 = vmatprep.subr.mxu0 0.0
        %498 = vmatpush1.msra.mxu0 0.0
        %499 = vmatprep.mubr.f32.mxu0 0.0
        %500 = vmatmul.mubr.f32.gmra.mrb[0].mxu0 %v418
        %v501 = vpop.f32.mrb[0].mxu0
        %v502 = vadd.f32 1e-08, %v501
        %v503 = vpop.f32.mrb[0].mxu0
        %504 = vdwg.mxu0
        %v505 = vrsqrt.pop %v502
        %v506 = vld [vmem:[%s333] sm:$0xff]
        %v507 = vld [vmem:[%s333 + $0x8] sm:$0xff]
        %v508 = vld [vmem:[%s333 + $0x18] sm:$0xff]
        %v509 = vld [vmem:[%s333 + $0x20] sm:$0xff]
        %v510 = vld [vmem:[%s333 + $0x30] sm:$0xff]
        %v511 = vld [vmem:[%s333 + $0x38] sm:$0xff]
        %v512 = vld [vmem:[%s333 + $0x48] sm:$0xff]
        %v513 = vld [vmem:[%s333 + $0x50] sm:$0xff]
        %v514 = vld [vmem:[%s333 + $0x60] sm:$0xff]
        %v515 = vld [vmem:[%s333 + $0x68] sm:$0xff]
        %v516 = vld [vmem:[%s333 + $0x78] sm:$0xff]
        %v517 = vld [vmem:[%s333 + $0x80] sm:$0xff]
        %v518 = vld [vmem:[%s333 + $0x90] sm:$0xff]
        %v519 = vld [vmem:[%s333 + $0x98] sm:$0xff]
        %v520 = vld [vmem:[%s333 + $0xa8] sm:$0xff]
        %v521 = vld [vmem:[%s333 + $0xb0] sm:$0xff]
        %v522 = vld [vmem:[%s333 + $0xc0] sm:$0xff]
        %v523 = vld [vmem:[%s333 + $0xc8] sm:$0xff]
        %v524 = vld [vmem:[%s333 + $0xd8] sm:$0xff]
        %v525 = vld [vmem:[%s333 + $0xe0] sm:$0xff]
        %v526 = vld [vmem:[%s333 + $0xf0] sm:$0xff]
        %v527 = vld [vmem:[%s333 + $0xf8] sm:$0xff]
        %v528 = vld [vmem:[%s333 + $0x108] sm:$0xff]
        %v529 = vld [vmem:[%s333 + $0x110] sm:$0xff]
        %v530 = vld [vmem:[%s333 + $0x120] sm:$0xff]
        %v531 = vld [vmem:[%s333 + $0x128] sm:$0xff]
        %v532 = vld [vmem:[%s333 + $0x138] sm:$0xff]
        %v533 = vld [vmem:[%s333 + $0x140] sm:$0xff]
        %v534 = vld [vmem:[%s333 + $0x150] sm:$0xff]
        %v535 = vld [vmem:[%s333 + $0x158] sm:$0xff]
        %v536 = vld [vmem:[%s333 + $0x168] sm:$0xff]
        %v537 = vld [vmem:[%s333 + $0x170] sm:$0xff]
        %v538 = vlaneseq
        %v539 = vshrl.u32 %v538, 7
        %v540 = vsub.s32 0, %v539
        %v541 = vrot.slane %v415, %v540
        %v542 = vmul.f32 %v506, %v541
        %v543 = vmul.f32 %v507, %v541
        %v544 = vmul.f32 %v508, %v541
        %v545 = vmul.f32 %v509, %v541
        %v546 = vmul.f32 %v510, %v541
        %v547 = vmul.f32 %v511, %v541
        %v548 = vmul.f32 %v512, %v541
        %v549 = vmul.f32 %v513, %v541
        %v550 = vmul.f32 %v514, %v541
        %v551 = vmul.f32 %v515, %v541
        %v552 = vmul.f32 %v516, %v541
        %v553 = vmul.f32 %v517, %v541
        %v554 = vmul.f32 %v518, %v541
        %v555 = vmul.f32 %v519, %v541
        %v556 = vmul.f32 %v520, %v541
        %v557 = vmul.f32 %v521, %v541
        %v558 = vmul.f32 %v522, %v541
        %v559 = vmul.f32 %v523, %v541
        %v560 = vmul.f32 %v524, %v541
        %v561 = vmul.f32 %v525, %v541
        %v562 = vmul.f32 %v526, %v541
        %v563 = vmul.f32 %v527, %v541
        %v564 = vmul.f32 %v528, %v541
        %v565 = vmul.f32 %v529, %v541
        %v566 = vmul.f32 %v530, %v541
        %v567 = vmul.f32 %v531, %v541
        %v568 = vmul.f32 %v532, %v541
        %v569 = vmul.f32 %v533, %v541
        %v570 = vmul.f32 %v534, %v541
        %v571 = vmul.f32 %v535, %v541
        %v572 = vmul.f32 %v536, %v541
        %v573 = vmul.f32 %v537, %v541
        %v574 = vpack.c.bf16 %v543, %v542
        %v575 = vpack.c.bf16 %v545, %v544
        %v576 = vpack.c.bf16 %v547, %v546
        %v577 = vpack.c.bf16 %v549, %v548
        %v578 = vpack.c.bf16 %v551, %v550
        %v579 = vpack.c.bf16 %v553, %v552
        %v580 = vpack.c.bf16 %v555, %v554
        %v581 = vpack.c.bf16 %v557, %v556
        %v582 = vpack.c.bf16 %v559, %v558
        %v583 = vpack.c.bf16 %v561, %v560
        %v584 = vpack.c.bf16 %v563, %v562
        %v585 = vpack.c.bf16 %v565, %v564
        %v586 = vpack.c.bf16 %v567, %v566
        %v587 = vpack.c.bf16 %v569, %v568
        %v588 = vpack.c.bf16 %v571, %v570
        %v589 = vpack.c.bf16 %v573, %v572
        %590 = vst [vmem:[#allocation2] sm:$0xff] %v574
        %591 = vst [vmem:[#allocation2 + $0x48] sm:$0xff] %v575
        %592 = vst [vmem:[#allocation2 + $0x90] sm:$0xff] %v576
        %593 = vst [vmem:[#allocation2 + $0xd8] sm:$0xff] %v577
        %594 = vst [vmem:[#allocation2 + $0x120] sm:$0xff] %v578
        %595 = vst [vmem:[#allocation2 + $0x168] sm:$0xff] %v579
        %596 = vst [vmem:[#allocation2 + $0x1b0] sm:$0xff] %v580
        %597 = vst [vmem:[#allocation2 + $0x1f8] sm:$0xff] %v581
        %598 = vst [vmem:[#allocation2 + $0x240] sm:$0xff] %v582
        %599 = vst [vmem:[#allocation2 + $0x288] sm:$0xff] %v583
        %600 = vst [vmem:[#allocation2 + $0x2d0] sm:$0xff] %v584
        %601 = vst [vmem:[#allocation2 + $0x318] sm:$0xff] %v585
        %602 = vst [vmem:[#allocation2 + $0x360] sm:$0xff] %v586
        %603 = vst [vmem:[#allocation2 + $0x3a8] sm:$0xff] %v587
        %604 = vst [vmem:[#allocation2 + $0x3f0] sm:$0xff] %v588
        %605 = vst [vmem:[#allocation2 + $0x438] sm:$0xff] %v589
        %v606 = vld [vmem:[%s333 + $0x1] sm:$0xff]
        %v607 = vld [vmem:[%s333 + $0x9] sm:$0xff]
        %v608 = vld [vmem:[%s333 + $0x19] sm:$0xff]
        %v609 = vld [vmem:[%s333 + $0x21] sm:$0xff]
        %v610 = vld [vmem:[%s333 + $0x31] sm:$0xff]
        %v611 = vld [vmem:[%s333 + $0x39] sm:$0xff]
        %v612 = vld [vmem:[%s333 + $0x49] sm:$0xff]
        %v613 = vld [vmem:[%s333 + $0x51] sm:$0xff]
        %v614 = vld [vmem:[%s333 + $0x61] sm:$0xff]
        %v615 = vld [vmem:[%s333 + $0x69] sm:$0xff]
        %v616 = vld [vmem:[%s333 + $0x79] sm:$0xff]
        %v617 = vld [vmem:[%s333 + $0x81] sm:$0xff]
        %v618 = vld [vmem:[%s333 + $0x91] sm:$0xff]
        %v619 = vld [vmem:[%s333 + $0x99] sm:$0xff]
        %v620 = vld [vmem:[%s333 + $0xa9] sm:$0xff]
        %v621 = vld [vmem:[%s333 + $0xb1] sm:$0xff]
        %v622 = vld [vmem:[%s333 + $0xc1] sm:$0xff]
        %v623 = vld [vmem:[%s333 + $0xc9] sm:$0xff]
        %v624 = vld [vmem:[%s333 + $0xd9] sm:$0xff]
        %v625 = vld [vmem:[%s333 + $0xe1] sm:$0xff]
        %v626 = vld [vmem:[%s333 + $0xf1] sm:$0xff]
        %v627 = vld [vmem:[%s333 + $0xf9] sm:$0xff]
        %v628 = vld [vmem:[%s333 + $0x109] sm:$0xff]
        %v629 = vld [vmem:[%s333 + $0x111] sm:$0xff]
        %v630 = vld [vmem:[%s333 + $0x121] sm:$0xff]
        %v631 = vld [vmem:[%s333 + $0x129] sm:$0xff]
        %v632 = vld [vmem:[%s333 + $0x139] sm:$0xff]
        %v633 = vld [vmem:[%s333 + $0x141] sm:$0xff]
        %v634 = vld [vmem:[%s333 + $0x151] sm:$0xff]
        %v635 = vld [vmem:[%s333 + $0x159] sm:$0xff]
        %v636 = vld [vmem:[%s333 + $0x169] sm:$0xff]
        %v637 = vld [vmem:[%s333 + $0x171] sm:$0xff]
        %v638 = vmul.f32 %v606, %v541
        %v639 = vmul.f32 %v607, %v541
        %v640 = vmul.f32 %v608, %v541
        %v641 = vmul.f32 %v609, %v541
        %v642 = vmul.f32 %v610, %v541
        %v643 = vmul.f32 %v611, %v541
        %v644 = vmul.f32 %v612, %v541
        %v645 = vmul.f32 %v613, %v541
        %v646 = vmul.f32 %v614, %v541
        %v647 = vmul.f32 %v615, %v541
        %v648 = vmul.f32 %v616, %v541
        %v649 = vmul.f32 %v617, %v541
        %v650 = vmul.f32 %v618, %v541
        %v651 = vmul.f32 %v619, %v541
        %v652 = vmul.f32 %v620, %v541
        %v653 = vmul.f32 %v621, %v541
        %v654 = vmul.f32 %v622, %v541
        %v655 = vmul.f32 %v623, %v541
        %v656 = vmul.f32 %v624, %v541
        %v657 = vmul.f32 %v625, %v541
        %v658 = vmul.f32 %v626, %v541
        %v659 = vmul.f32 %v627, %v541
        %v660 = vmul.f32 %v628, %v541
        %v661 = vmul.f32 %v629, %v541
        %v662 = vmul.f32 %v630, %v541
        %v663 = vmul.f32 %v631, %v541
        %v664 = vmul.f32 %v632, %v541
        %v665 = vmul.f32 %v633, %v541
        %v666 = vmul.f32 %v634, %v541
        %v667 = vmul.f32 %v635, %v541
        %v668 = vmul.f32 %v636, %v541
        %v669 = vmul.f32 %v637, %v541
        %v670 = vpack.c.bf16 %v639, %v638
        %v671 = vpack.c.bf16 %v641, %v640
        %v672 = vpack.c.bf16 %v643, %v642
        %v673 = vpack.c.bf16 %v645, %v644
        %v674 = vpack.c.bf16 %v647, %v646
        %v675 = vpack.c.bf16 %v649, %v648
        %v676 = vpack.c.bf16 %v651, %v650
        %v677 = vpack.c.bf16 %v653, %v652
        %v678 = vpack.c.bf16 %v655, %v654
        %v679 = vpack.c.bf16 %v657, %v656
        %v680 = vpack.c.bf16 %v659, %v658
        %v681 = vpack.c.bf16 %v661, %v660
        %v682 = vpack.c.bf16 %v663, %v662
        %v683 = vpack.c.bf16 %v665, %v664
        %v684 = vpack.c.bf16 %v667, %v666
        %v685 = vpack.c.bf16 %v669, %v668
        %686 = vst [vmem:[#allocation2 + $0x8] sm:$0xff] %v670
        %687 = vst [vmem:[#allocation2 + $0x50] sm:$0xff] %v671
        %688 = vst [vmem:[#allocation2 + $0x98] sm:$0xff] %v672
        %689 = vst [vmem:[#allocation2 + $0xe0] sm:$0xff] %v673
        %690 = vst [vmem:[#allocation2 + $0x128] sm:$0xff] %v674
        %691 = vst [vmem:[#allocation2 + $0x170] sm:$0xff] %v675
        %692 = vst [vmem:[#allocation2 + $0x1b8] sm:$0xff] %v676
        %693 = vst [vmem:[#allocation2 + $0x200] sm:$0xff] %v677
        %694 = vst [vmem:[#allocation2 + $0x248] sm:$0xff] %v678
        %695 = vst [vmem:[#allocation2 + $0x290] sm:$0xff] %v679
        %696 = vst [vmem:[#allocation2 + $0x2d8] sm:$0xff] %v680
        %697 = vst [vmem:[#allocation2 + $0x320] sm:$0xff] %v681
        %698 = vst [vmem:[#allocation2 + $0x368] sm:$0xff] %v682
        %699 = vst [vmem:[#allocation2 + $0x3b0] sm:$0xff] %v683
        %700 = vst [vmem:[#allocation2 + $0x3f8] sm:$0xff] %v684
        %701 = vst [vmem:[#allocation2 + $0x440] sm:$0xff] %v685
        %v702 = vld [vmem:[%s333 + $0x2] sm:$0xff]
        %v703 = vld [vmem:[%s333 + $0xa] sm:$0xff]
        %v704 = vld [vmem:[%s333 + $0x1a] sm:$0xff]
        %v705 = vld [vmem:[%s333 + $0x22] sm:$0xff]
        %v706 = vld [vmem:[%s333 + $0x32] sm:$0xff]
        %v707 = vld [vmem:[%s333 + $0x3a] sm:$0xff]
        %v708 = vld [vmem:[%s333 + $0x4a] sm:$0xff]
        %v709 = vld [vmem:[%s333 + $0x52] sm:$0xff]
        %v710 = vld [vmem:[%s333 + $0x62] sm:$0xff]
        %v711 = vld [vmem:[%s333 + $0x6a] sm:$0xff]
        %v712 = vld [vmem:[%s333 + $0x7a] sm:$0xff]
        %v713 = vld [vmem:[%s333 + $0x82] sm:$0xff]
        %v714 = vld [vmem:[%s333 + $0x92] sm:$0xff]
        %v715 = vld [vmem:[%s333 + $0x9a] sm:$0xff]
        %v716 = vld [vmem:[%s333 + $0xaa] sm:$0xff]
        %v717 = vld [vmem:[%s333 + $0xb2] sm:$0xff]
        %v718 = vld [vmem:[%s333 + $0xc2] sm:$0xff]
        %v719 = vld [vmem:[%s333 + $0xca] sm:$0xff]
        %v720 = vld [vmem:[%s333 + $0xda] sm:$0xff]
        %v721 = vld [vmem:[%s333 + $0xe2] sm:$0xff]
        %v722 = vld [vmem:[%s333 + $0xf2] sm:$0xff]
        %v723 = vld [vmem:[%s333 + $0xfa] sm:$0xff]
        %v724 = vld [vmem:[%s333 + $0x10a] sm:$0xff]
        %v725 = vld [vmem:[%s333 + $0x112] sm:$0xff]
        %v726 = vld [vmem:[%s333 + $0x122] sm:$0xff]
        %v727 = vld [vmem:[%s333 + $0x12a] sm:$0xff]
        %v728 = vld [vmem:[%s333 + $0x13a] sm:$0xff]
        %v729 = vld [vmem:[%s333 + $0x142] sm:$0xff]
        %v730 = vld [vmem:[%s333 + $0x152] sm:$0xff]
        %v731 = vld [vmem:[%s333 + $0x15a] sm:$0xff]
        %v732 = vld [vmem:[%s333 + $0x16a] sm:$0xff]
        %v733 = vld [vmem:[%s333 + $0x172] sm:$0xff]
        %v734 = vmul.f32 %v702, %v541
        %v735 = vmul.f32 %v703, %v541
        %v736 = vmul.f32 %v704, %v541
        %v737 = vmul.f32 %v705, %v541
        %v738 = vmul.f32 %v706, %v541
        %v739 = vmul.f32 %v707, %v541
        %v740 = vmul.f32 %v708, %v541
        %v741 = vmul.f32 %v709, %v541
        %v742 = vmul.f32 %v710, %v541
        %v743 = vmul.f32 %v711, %v541
        %v744 = vmul.f32 %v712, %v541
        %v745 = vmul.f32 %v713, %v541
        %v746 = vmul.f32 %v714, %v541
        %v747 = vmul.f32 %v715, %v541
        %v748 = vmul.f32 %v716, %v541
        %v749 = vmul.f32 %v717, %v541
        %v750 = vmul.f32 %v718, %v541
        %v751 = vmul.f32 %v719, %v541
        %v752 = vmul.f32 %v720, %v541
        %v753 = vmul.f32 %v721, %v541
        %v754 = vmul.f32 %v722, %v541
        %v755 = vmul.f32 %v723, %v541
        %v756 = vmul.f32 %v724, %v541
        %v757 = vmul.f32 %v725, %v541
        %v758 = vmul.f32 %v726, %v541
        %v759 = vmul.f32 %v727, %v541
        %v760 = vmul.f32 %v728, %v541
        %v761 = vmul.f32 %v729, %v541
        %v762 = vmul.f32 %v730, %v541
        %v763 = vmul.f32 %v731, %v541
        %v764 = vmul.f32 %v732, %v541
        %v765 = vmul.f32 %v733, %v541
        %v766 = vpack.c.bf16 %v735, %v734
        %v767 = vpack.c.bf16 %v737, %v736
        %v768 = vpack.c.bf16 %v739, %v738
        %v769 = vpack.c.bf16 %v741, %v740
        %v770 = vpack.c.bf16 %v743, %v742
        %v771 = vpack.c.bf16 %v745, %v744
        %v772 = vpack.c.bf16 %v747, %v746
        %v773 = vpack.c.bf16 %v749, %v748
        %v774 = vpack.c.bf16 %v751, %v750
        %v775 = vpack.c.bf16 %v753, %v752
        %v776 = vpack.c.bf16 %v755, %v754
        %v777 = vpack.c.bf16 %v757, %v756
        %v778 = vpack.c.bf16 %v759, %v758
        %v779 = vpack.c.bf16 %v761, %v760
        %v780 = vpack.c.bf16 %v763, %v762
        %v781 = vpack.c.bf16 %v765, %v764
        %782 = vst [vmem:[#allocation2 + $0x10] sm:$0xff] %v766
        %783 = vst [vmem:[#allocation2 + $0x58] sm:$0xff] %v767
        %784 = vst [vmem:[#allocation2 + $0xa0] sm:$0xff] %v768
        %785 = vst [vmem:[#allocation2 + $0xe8] sm:$0xff] %v769
        %786 = vst [vmem:[#allocation2 + $0x130] sm:$0xff] %v770
        %787 = vst [vmem:[#allocation2 + $0x178] sm:$0xff] %v771
        %788 = vst [vmem:[#allocation2 + $0x1c0] sm:$0xff] %v772
        %789 = vst [vmem:[#allocation2 + $0x208] sm:$0xff] %v773
        %790 = vst [vmem:[#allocation2 + $0x250] sm:$0xff] %v774
        %791 = vst [vmem:[#allocation2 + $0x298] sm:$0xff] %v775
        %792 = vst [vmem:[#allocation2 + $0x2e0] sm:$0xff] %v776
        %793 = vst [vmem:[#allocation2 + $0x328] sm:$0xff] %v777
        %794 = vst [vmem:[#allocation2 + $0x370] sm:$0xff] %v778
        %795 = vst [vmem:[#allocation2 + $0x3b8] sm:$0xff] %v779
        %796 = vst [vmem:[#allocation2 + $0x400] sm:$0xff] %v780
        %797 = vst [vmem:[#allocation2 + $0x448] sm:$0xff] %v781
        %s798 = scalar_lea.vmem %s333, 24
        %v799 = vld [vmem:[%s798] sm:$0xff]
        %v800 = vld [vmem:[%s798 + $0x8] sm:$0xff]
        %v801 = vld [vmem:[%s798 + $0x18] sm:$0xff]
        %v802 = vld [vmem:[%s798 + $0x20] sm:$0xff]
        %v803 = vld [vmem:[%s798 + $0x30] sm:$0xff]
        %v804 = vld [vmem:[%s798 + $0x38] sm:$0xff]
        %v805 = vld [vmem:[%s798 + $0x48] sm:$0xff]
        %v806 = vld [vmem:[%s798 + $0x50] sm:$0xff]
        %v807 = vld [vmem:[%s798 + $0x60] sm:$0xff]
        %v808 = vld [vmem:[%s798 + $0x68] sm:$0xff]
        %v809 = vld [vmem:[%s798 + $0x78] sm:$0xff]
        %v810 = vld [vmem:[%s798 + $0x80] sm:$0xff]
        %v811 = vld [vmem:[%s798 + $0x90] sm:$0xff]
        %v812 = vld [vmem:[%s798 + $0x98] sm:$0xff]
        %v813 = vld [vmem:[%s798 + $0xa8] sm:$0xff]
        %v814 = vld [vmem:[%s798 + $0xb0] sm:$0xff]
        %v815 = vld [vmem:[%s798 + $0xc0] sm:$0xff]
        %v816 = vld [vmem:[%s798 + $0xc8] sm:$0xff]
        %v817 = vld [vmem:[%s798 + $0xd8] sm:$0xff]
        %v818 = vld [vmem:[%s798 + $0xe0] sm:$0xff]
        %v819 = vld [vmem:[%s798 + $0xf0] sm:$0xff]
        %v820 = vld [vmem:[%s798 + $0xf8] sm:$0xff]
        %v821 = vld [vmem:[%s798 + $0x108] sm:$0xff]
        %v822 = vld [vmem:[%s798 + $0x110] sm:$0xff]
        %v823 = vld [vmem:[%s798 + $0x120] sm:$0xff]
        %v824 = vld [vmem:[%s798 + $0x128] sm:$0xff]
        %v825 = vld [vmem:[%s798 + $0x138] sm:$0xff]
        %v826 = vld [vmem:[%s798 + $0x140] sm:$0xff]
        %v827 = vld [vmem:[%s798 + $0x150] sm:$0xff]
        %v828 = vld [vmem:[%s798 + $0x158] sm:$0xff]
        %v829 = vld [vmem:[%s798 + $0x168] sm:$0xff]
        %v830 = vld [vmem:[%s798 + $0x170] sm:$0xff]
        %v831 = vmul.f32 %v799, %v541
        %v832 = vmul.f32 %v800, %v541
        %v833 = vmul.f32 %v801, %v541
        %v834 = vmul.f32 %v802, %v541
        %v835 = vmul.f32 %v803, %v541
        %v836 = vmul.f32 %v804, %v541
        %v837 = vmul.f32 %v805, %v541
        %v838 = vmul.f32 %v806, %v541
        %v839 = vmul.f32 %v807, %v541
        %v840 = vmul.f32 %v808, %v541
        %v841 = vmul.f32 %v809, %v541
        %v842 = vmul.f32 %v810, %v541
        %v843 = vmul.f32 %v811, %v541
        %v844 = vmul.f32 %v812, %v541
        %v845 = vmul.f32 %v813, %v541
        %v846 = vmul.f32 %v814, %v541
        %v847 = vmul.f32 %v815, %v541
        %v848 = vmul.f32 %v816, %v541
        %v849 = vmul.f32 %v817, %v541
        %v850 = vmul.f32 %v818, %v541
        %v851 = vmul.f32 %v819, %v541
        %v852 = vmul.f32 %v820, %v541
        %v853 = vmul.f32 %v821, %v541
        %v854 = vmul.f32 %v822, %v541
        %v855 = vmul.f32 %v823, %v541
        %v856 = vmul.f32 %v824, %v541
        %v857 = vmul.f32 %v825, %v541
        %v858 = vmul.f32 %v826, %v541
        %v859 = vmul.f32 %v827, %v541
        %v860 = vmul.f32 %v828, %v541
        %v861 = vmul.f32 %v829, %v541
        %v862 = vmul.f32 %v830, %v541
        %v863 = vpack.c.bf16 %v832, %v831
        %v864 = vpack.c.bf16 %v834, %v833
        %v865 = vpack.c.bf16 %v836, %v835
        %v866 = vpack.c.bf16 %v838, %v837
        %v867 = vpack.c.bf16 %v840, %v839
        %v868 = vpack.c.bf16 %v842, %v841
        %v869 = vpack.c.bf16 %v844, %v843
        %v870 = vpack.c.bf16 %v846, %v845
        %v871 = vpack.c.bf16 %v848, %v847
        %v872 = vpack.c.bf16 %v850, %v849
        %v873 = vpack.c.bf16 %v852, %v851
        %v874 = vpack.c.bf16 %v854, %v853
        %v875 = vpack.c.bf16 %v856, %v855
        %v876 = vpack.c.bf16 %v858, %v857
        %v877 = vpack.c.bf16 %v860, %v859
        %v878 = vpack.c.bf16 %v862, %v861
        %879 = vst [vmem:[#allocation2 + $0x18] sm:$0xff] %v863
        %880 = vst [vmem:[#allocation2 + $0x60] sm:$0xff] %v864
        %881 = vst [vmem:[#allocation2 + $0xa8] sm:$0xff] %v865
        %882 = vst [vmem:[#allocation2 + $0xf0] sm:$0xff] %v866
        %883 = vst [vmem:[#allocation2 + $0x138] sm:$0xff] %v867
        %884 = vst [vmem:[#allocation2 + $0x180] sm:$0xff] %v868
        %885 = vst [vmem:[#allocation2 + $0x1c8] sm:$0xff] %v869
        %886 = vst [vmem:[#allocation2 + $0x210] sm:$0xff] %v870
        %887 = vst [vmem:[#allocation2 + $0x258] sm:$0xff] %v871
        %888 = vst [vmem:[#allocation2 + $0x2a0] sm:$0xff] %v872
        %889 = vst [vmem:[#allocation2 + $0x2e8] sm:$0xff] %v873
        %890 = vst [vmem:[#allocation2 + $0x330] sm:$0xff] %v874
        %891 = vst [vmem:[#allocation2 + $0x378] sm:$0xff] %v875
        %892 = vst [vmem:[#allocation2 + $0x3c0] sm:$0xff] %v876
        %893 = vst [vmem:[#allocation2 + $0x408] sm:$0xff] %v877
        %894 = vst [vmem:[#allocation2 + $0x450] sm:$0xff] %v878
        %v895 = vld [vmem:[%s798 + $0x1] sm:$0xff]
        %v896 = vld [vmem:[%s798 + $0x9] sm:$0xff]
        %v897 = vld [vmem:[%s798 + $0x19] sm:$0xff]
        %v898 = vld [vmem:[%s798 + $0x21] sm:$0xff]
        %v899 = vld [vmem:[%s798 + $0x31] sm:$0xff]
        %v900 = vld [vmem:[%s798 + $0x39] sm:$0xff]
        %v901 = vld [vmem:[%s798 + $0x49] sm:$0xff]
        %v902 = vld [vmem:[%s798 + $0x51] sm:$0xff]
        %v903 = vld [vmem:[%s798 + $0x61] sm:$0xff]
        %v904 = vld [vmem:[%s798 + $0x69] sm:$0xff]
        %v905 = vld [vmem:[%s798 + $0x79] sm:$0xff]
        %v906 = vld [vmem:[%s798 + $0x81] sm:$0xff]
        %v907 = vld [vmem:[%s798 + $0x91] sm:$0xff]
        %v908 = vld [vmem:[%s798 + $0x99] sm:$0xff]
        %v909 = vld [vmem:[%s798 + $0xa9] sm:$0xff]
        %v910 = vld [vmem:[%s798 + $0xb1] sm:$0xff]
        %v911 = vld [vmem:[%s798 + $0xc1] sm:$0xff]
        %v912 = vld [vmem:[%s798 + $0xc9] sm:$0xff]
        %v913 = vld [vmem:[%s798 + $0xd9] sm:$0xff]
        %v914 = vld [vmem:[%s798 + $0xe1] sm:$0xff]
        %v915 = vld [vmem:[%s798 + $0xf1] sm:$0xff]
        %v916 = vld [vmem:[%s798 + $0xf9] sm:$0xff]
        %v917 = vld [vmem:[%s798 + $0x109] sm:$0xff]
        %v918 = vld [vmem:[%s798 + $0x111] sm:$0xff]
        %v919 = vld [vmem:[%s798 + $0x121] sm:$0xff]
        %v920 = vld [vmem:[%s798 + $0x129] sm:$0xff]
        %v921 = vld [vmem:[%s798 + $0x139] sm:$0xff]
        %v922 = vld [vmem:[%s798 + $0x141] sm:$0xff]
        %v923 = vld [vmem:[%s798 + $0x151] sm:$0xff]
        %v924 = vld [vmem:[%s798 + $0x159] sm:$0xff]
        %v925 = vld [vmem:[%s798 + $0x169] sm:$0xff]
        %v926 = vld [vmem:[%s798 + $0x171] sm:$0xff]
        %v927 = vmul.f32 %v895, %v541
        %v928 = vmul.f32 %v896, %v541
        %v929 = vmul.f32 %v897, %v541
        %v930 = vmul.f32 %v898, %v541
        %v931 = vmul.f32 %v899, %v541
        %v932 = vmul.f32 %v900, %v541
        %v933 = vmul.f32 %v901, %v541
        %v934 = vmul.f32 %v902, %v541
        %v935 = vmul.f32 %v903, %v541
        %v936 = vmul.f32 %v904, %v541
        %v937 = vmul.f32 %v905, %v541
        %v938 = vmul.f32 %v906, %v541
        %v939 = vmul.f32 %v907, %v541
        %v940 = vmul.f32 %v908, %v541
        %v941 = vmul.f32 %v909, %v541
        %v942 = vmul.f32 %v910, %v541
        %v943 = vmul.f32 %v911, %v541
        %v944 = vmul.f32 %v912, %v541
        %v945 = vmul.f32 %v913, %v541
        %v946 = vmul.f32 %v914, %v541
        %v947 = vmul.f32 %v915, %v541
        %v948 = vmul.f32 %v916, %v541
        %v949 = vmul.f32 %v917, %v541
        %v950 = vmul.f32 %v918, %v541
        %v951 = vmul.f32 %v919, %v541
        %v952 = vmul.f32 %v920, %v541
        %v953 = vmul.f32 %v921, %v541
        %v954 = vmul.f32 %v922, %v541
        %v955 = vmul.f32 %v923, %v541
        %v956 = vmul.f32 %v924, %v541
        %v957 = vmul.f32 %v925, %v541
        %v958 = vmul.f32 %v926, %v541
        %v959 = vpack.c.bf16 %v928, %v927
        %v960 = vpack.c.bf16 %v930, %v929
        %v961 = vpack.c.bf16 %v932, %v931
        %v962 = vpack.c.bf16 %v934, %v933
        %v963 = vpack.c.bf16 %v936, %v935
        %v964 = vpack.c.bf16 %v938, %v937
        %v965 = vpack.c.bf16 %v940, %v939
        %v966 = vpack.c.bf16 %v942, %v941
        %v967 = vpack.c.bf16 %v944, %v943
        %v968 = vpack.c.bf16 %v946, %v945
        %v969 = vpack.c.bf16 %v948, %v947
        %v970 = vpack.c.bf16 %v950, %v949
        %v971 = vpack.c.bf16 %v952, %v951
        %v972 = vpack.c.bf16 %v954, %v953
        %v973 = vpack.c.bf16 %v956, %v955
        %v974 = vpack.c.bf16 %v958, %v957
        %975 = vst [vmem:[#allocation2 + $0x20] sm:$0xff] %v959
        %976 = vst [vmem:[#allocation2 + $0x68] sm:$0xff] %v960
        %977 = vst [vmem:[#allocation2 + $0xb0] sm:$0xff] %v961
        %978 = vst [vmem:[#allocation2 + $0xf8] sm:$0xff] %v962
        %979 = vst [vmem:[#allocation2 + $0x140] sm:$0xff] %v963
        %980 = vst [vmem:[#allocation2 + $0x188] sm:$0xff] %v964
        %981 = vst [vmem:[#allocation2 + $0x1d0] sm:$0xff] %v965
        %982 = vst [vmem:[#allocation2 + $0x218] sm:$0xff] %v966
        %983 = vst [vmem:[#allocation2 + $0x260] sm:$0xff] %v967
        %984 = vst [vmem:[#allocation2 + $0x2a8] sm:$0xff] %v968
        %985 = vst [vmem:[#allocation2 + $0x2f0] sm:$0xff] %v969
        %986 = vst [vmem:[#allocation2 + $0x338] sm:$0xff] %v970
        %987 = vst [vmem:[#allocation2 + $0x380] sm:$0xff] %v971
        %988 = vst [vmem:[#allocation2 + $0x3c8] sm:$0xff] %v972
        %989 = vst [vmem:[#allocation2 + $0x410] sm:$0xff] %v973
        %990 = vst [vmem:[#allocation2 + $0x458] sm:$0xff] %v974
        %v991 = vld [vmem:[%s798 + $0x2] sm:$0xff]
        %v992 = vld [vmem:[%s798 + $0xa] sm:$0xff]
        %v993 = vld [vmem:[%s798 + $0x1a] sm:$0xff]
        %v994 = vld [vmem:[%s798 + $0x22] sm:$0xff]
        %v995 = vld [vmem:[%s798 + $0x32] sm:$0xff]
        %v996 = vld [vmem:[%s798 + $0x3a] sm:$0xff]
        %v997 = vld [vmem:[%s798 + $0x4a] sm:$0xff]
        %v998 = vld [vmem:[%s798 + $0x52] sm:$0xff]
        %v999 = vld [vmem:[%s798 + $0x62] sm:$0xff]
        %v1000 = vld [vmem:[%s798 + $0x6a] sm:$0xff]
        %v1001 = vld [vmem:[%s798 + $0x7a] sm:$0xff]
        %v1002 = vld [vmem:[%s798 + $0x82] sm:$0xff]
        %v1003 = vld [vmem:[%s798 + $0x92] sm:$0xff]
        %v1004 = vld [vmem:[%s798 + $0x9a] sm:$0xff]
        %v1005 = vld [vmem:[%s798 + $0xaa] sm:$0xff]
        %v1006 = vld [vmem:[%s798 + $0xb2] sm:$0xff]
        %v1007 = vld [vmem:[%s798 + $0xc2] sm:$0xff]
        %v1008 = vld [vmem:[%s798 + $0xca] sm:$0xff]
        %v1009 = vld [vmem:[%s798 + $0xda] sm:$0xff]
        %v1010 = vld [vmem:[%s798 + $0xe2] sm:$0xff]
        %v1011 = vld [vmem:[%s798 + $0xf2] sm:$0xff]
        %v1012 = vld [vmem:[%s798 + $0xfa] sm:$0xff]
        %v1013 = vld [vmem:[%s798 + $0x10a] sm:$0xff]
        %v1014 = vld [vmem:[%s798 + $0x112] sm:$0xff]
        %v1015 = vld [vmem:[%s798 + $0x122] sm:$0xff]
        %v1016 = vld [vmem:[%s798 + $0x12a] sm:$0xff]
        %v1017 = vld [vmem:[%s798 + $0x13a] sm:$0xff]
        %v1018 = vld [vmem:[%s798 + $0x142] sm:$0xff]
        %v1019 = vld [vmem:[%s798 + $0x152] sm:$0xff]
        %v1020 = vld [vmem:[%s798 + $0x15a] sm:$0xff]
        %v1021 = vld [vmem:[%s798 + $0x16a] sm:$0xff]
        %v1022 = vld [vmem:[%s798 + $0x172] sm:$0xff]
        %v1023 = vmul.f32 %v991, %v541
        %v1024 = vmul.f32 %v992, %v541
        %v1025 = vmul.f32 %v993, %v541
        %v1026 = vmul.f32 %v994, %v541
        %v1027 = vmul.f32 %v995, %v541
        %v1028 = vmul.f32 %v996, %v541
        %v1029 = vmul.f32 %v997, %v541
        %v1030 = vmul.f32 %v998, %v541
        %v1031 = vmul.f32 %v999, %v541
        %v1032 = vmul.f32 %v1000, %v541
        %v1033 = vmul.f32 %v1001, %v541
        %v1034 = vmul.f32 %v1002, %v541
        %v1035 = vmul.f32 %v1003, %v541
        %v1036 = vmul.f32 %v1004, %v541
        %v1037 = vmul.f32 %v1005, %v541
        %v1038 = vmul.f32 %v1006, %v541
        %v1039 = vmul.f32 %v1007, %v541
        %v1040 = vmul.f32 %v1008, %v541
        %v1041 = vmul.f32 %v1009, %v541
        %v1042 = vmul.f32 %v1010, %v541
        %v1043 = vmul.f32 %v1011, %v541
        %v1044 = vmul.f32 %v1012, %v541
        %v1045 = vmul.f32 %v1013, %v541
        %v1046 = vmul.f32 %v1014, %v541
        %v1047 = vmul.f32 %v1015, %v541
        %v1048 = vmul.f32 %v1016, %v541
        %v1049 = vmul.f32 %v1017, %v541
        %v1050 = vmul.f32 %v1018, %v541
        %v1051 = vmul.f32 %v1019, %v541
        %v1052 = vmul.f32 %v1020, %v541
        %v1053 = vmul.f32 %v1021, %v541
        %v1054 = vmul.f32 %v1022, %v541
        %v1055 = vpack.c.bf16 %v1024, %v1023
        %v1056 = vpack.c.bf16 %v1026, %v1025
        %v1057 = vpack.c.bf16 %v1028, %v1027
        %v1058 = vpack.c.bf16 %v1030, %v1029
        %v1059 = vpack.c.bf16 %v1032, %v1031
        %v1060 = vpack.c.bf16 %v1034, %v1033
        %v1061 = vpack.c.bf16 %v1036, %v1035
        %v1062 = vpack.c.bf16 %v1038, %v1037
        %v1063 = vpack.c.bf16 %v1040, %v1039
        %v1064 = vpack.c.bf16 %v1042, %v1041
        %v1065 = vpack.c.bf16 %v1044, %v1043
        %v1066 = vpack.c.bf16 %v1046, %v1045
        %v1067 = vpack.c.bf16 %v1048, %v1047
        %v1068 = vpack.c.bf16 %v1050, %v1049
        %v1069 = vpack.c.bf16 %v1052, %v1051
        %v1070 = vpack.c.bf16 %v1054, %v1053
        %1071 = vst [vmem:[#allocation2 + $0x28] sm:$0xff] %v1055
        %1072 = vst [vmem:[#allocation2 + $0x70] sm:$0xff] %v1056
        %1073 = vst [vmem:[#allocation2 + $0xb8] sm:$0xff] %v1057
        %1074 = vst [vmem:[#allocation2 + $0x100] sm:$0xff] %v1058
        %1075 = vst [vmem:[#allocation2 + $0x148] sm:$0xff] %v1059
        %1076 = vst [vmem:[#allocation2 + $0x190] sm:$0xff] %v1060
        %1077 = vst [vmem:[#allocation2 + $0x1d8] sm:$0xff] %v1061
        %1078 = vst [vmem:[#allocation2 + $0x220] sm:$0xff] %v1062
        %1079 = vst [vmem:[#allocation2 + $0x268] sm:$0xff] %v1063
        %1080 = vst [vmem:[#allocation2 + $0x2b0] sm:$0xff] %v1064
        %1081 = vst [vmem:[#allocation2 + $0x2f8] sm:$0xff] %v1065
        %1082 = vst [vmem:[#allocation2 + $0x340] sm:$0xff] %v1066
        %1083 = vst [vmem:[#allocation2 + $0x388] sm:$0xff] %v1067
        %1084 = vst [vmem:[#allocation2 + $0x3d0] sm:$0xff] %v1068
        %1085 = vst [vmem:[#allocation2 + $0x418] sm:$0xff] %v1069
        %1086 = vst [vmem:[#allocation2 + $0x460] sm:$0xff] %v1070
        %s1087 = scalar_lea.vmem %s333, 48
        %v1088 = vld [vmem:[%s1087] sm:$0xff]
        %v1089 = vld [vmem:[%s1087 + $0x8] sm:$0xff]
        %v1090 = vld [vmem:[%s1087 + $0x18] sm:$0xff]
        %v1091 = vld [vmem:[%s1087 + $0x20] sm:$0xff]
        %v1092 = vld [vmem:[%s1087 + $0x30] sm:$0xff]
        %v1093 = vld [vmem:[%s1087 + $0x38] sm:$0xff]
        %v1094 = vld [vmem:[%s1087 + $0x48] sm:$0xff]
        %v1095 = vld [vmem:[%s1087 + $0x50] sm:$0xff]
        %v1096 = vld [vmem:[%s1087 + $0x60] sm:$0xff]
        %v1097 = vld [vmem:[%s1087 + $0x68] sm:$0xff]
        %v1098 = vld [vmem:[%s1087 + $0x78] sm:$0xff]
        %v1099 = vld [vmem:[%s1087 + $0x80] sm:$0xff]
        %v1100 = vld [vmem:[%s1087 + $0x90] sm:$0xff]
        %v1101 = vld [vmem:[%s1087 + $0x98] sm:$0xff]
        %v1102 = vld [vmem:[%s1087 + $0xa8] sm:$0xff]
        %v1103 = vld [vmem:[%s1087 + $0xb0] sm:$0xff]
        %v1104 = vld [vmem:[%s1087 + $0xc0] sm:$0xff]
        %v1105 = vld [vmem:[%s1087 + $0xc8] sm:$0xff]
        %v1106 = vld [vmem:[%s1087 + $0xd8] sm:$0xff]
        %v1107 = vld [vmem:[%s1087 + $0xe0] sm:$0xff]
        %v1108 = vld [vmem:[%s1087 + $0xf0] sm:$0xff]
        %v1109 = vld [vmem:[%s1087 + $0xf8] sm:$0xff]
        %v1110 = vld [vmem:[%s1087 + $0x108] sm:$0xff]
        %v1111 = vld [vmem:[%s1087 + $0x110] sm:$0xff]
        %v1112 = vld [vmem:[%s1087 + $0x120] sm:$0xff]
        %v1113 = vld [vmem:[%s1087 + $0x128] sm:$0xff]
        %v1114 = vld [vmem:[%s1087 + $0x138] sm:$0xff]
        %v1115 = vld [vmem:[%s1087 + $0x140] sm:$0xff]
        %v1116 = vld [vmem:[%s1087 + $0x150] sm:$0xff]
        %v1117 = vld [vmem:[%s1087 + $0x158] sm:$0xff]
        %v1118 = vld [vmem:[%s1087 + $0x168] sm:$0xff]
        %v1119 = vld [vmem:[%s1087 + $0x170] sm:$0xff]
        %v1120 = vmul.f32 %v1088, %v541
        %v1121 = vmul.f32 %v1089, %v541
        %v1122 = vmul.f32 %v1090, %v541
        %v1123 = vmul.f32 %v1091, %v541
        %v1124 = vmul.f32 %v1092, %v541
        %v1125 = vmul.f32 %v1093, %v541
        %v1126 = vmul.f32 %v1094, %v541
        %v1127 = vmul.f32 %v1095, %v541
        %v1128 = vmul.f32 %v1096, %v541
        %v1129 = vmul.f32 %v1097, %v541
        %v1130 = vmul.f32 %v1098, %v541
        %v1131 = vmul.f32 %v1099, %v541
        %v1132 = vmul.f32 %v1100, %v541
        %v1133 = vmul.f32 %v1101, %v541
        %v1134 = vmul.f32 %v1102, %v541
        %v1135 = vmul.f32 %v1103, %v541
        %v1136 = vmul.f32 %v1104, %v541
        %v1137 = vmul.f32 %v1105, %v541
        %v1138 = vmul.f32 %v1106, %v541
        %v1139 = vmul.f32 %v1107, %v541
        %v1140 = vmul.f32 %v1108, %v541
        %v1141 = vmul.f32 %v1109, %v541
        %v1142 = vmul.f32 %v1110, %v541
        %v1143 = vmul.f32 %v1111, %v541
        %v1144 = vmul.f32 %v1112, %v541
        %v1145 = vmul.f32 %v1113, %v541
        %v1146 = vmul.f32 %v1114, %v541
        %v1147 = vmul.f32 %v1115, %v541
        %v1148 = vmul.f32 %v1116, %v541
        %v1149 = vmul.f32 %v1117, %v541
        %v1150 = vmul.f32 %v1118, %v541
        %v1151 = vmul.f32 %v1119, %v541
        %v1152 = vpack.c.bf16 %v1121, %v1120
        %v1153 = vpack.c.bf16 %v1123, %v1122
        %v1154 = vpack.c.bf16 %v1125, %v1124
        %v1155 = vpack.c.bf16 %v1127, %v1126
        %v1156 = vpack.c.bf16 %v1129, %v1128
        %v1157 = vpack.c.bf16 %v1131, %v1130
        %v1158 = vpack.c.bf16 %v1133, %v1132
        %v1159 = vpack.c.bf16 %v1135, %v1134
        %v1160 = vpack.c.bf16 %v1137, %v1136
        %v1161 = vpack.c.bf16 %v1139, %v1138
        %v1162 = vpack.c.bf16 %v1141, %v1140
        %v1163 = vpack.c.bf16 %v1143, %v1142
        %v1164 = vpack.c.bf16 %v1145, %v1144
        %v1165 = vpack.c.bf16 %v1147, %v1146
        %v1166 = vpack.c.bf16 %v1149, %v1148
        %v1167 = vpack.c.bf16 %v1151, %v1150
        %1168 = vst [vmem:[#allocation2 + $0x30] sm:$0xff] %v1152
        %1169 = vst [vmem:[#allocation2 + $0x78] sm:$0xff] %v1153
        %1170 = vst [vmem:[#allocation2 + $0xc0] sm:$0xff] %v1154
        %1171 = vst [vmem:[#allocation2 + $0x108] sm:$0xff] %v1155
        %1172 = vst [vmem:[#allocation2 + $0x150] sm:$0xff] %v1156
        %1173 = vst [vmem:[#allocation2 + $0x198] sm:$0xff] %v1157
        %1174 = vst [vmem:[#allocation2 + $0x1e0] sm:$0xff] %v1158
        %1175 = vst [vmem:[#allocation2 + $0x228] sm:$0xff] %v1159
        %1176 = vst [vmem:[#allocation2 + $0x270] sm:$0xff] %v1160
        %1177 = vst [vmem:[#allocation2 + $0x2b8] sm:$0xff] %v1161
        %1178 = vst [vmem:[#allocation2 + $0x300] sm:$0xff] %v1162
        %1179 = vst [vmem:[#allocation2 + $0x348] sm:$0xff] %v1163
        %1180 = vst [vmem:[#allocation2 + $0x390] sm:$0xff] %v1164
        %1181 = vst [vmem:[#allocation2 + $0x3d8] sm:$0xff] %v1165
        %1182 = vst [vmem:[#allocation2 + $0x420] sm:$0xff] %v1166
        %1183 = vst [vmem:[#allocation2 + $0x468] sm:$0xff] %v1167
        %v1184 = vld [vmem:[%s1087 + $0x1] sm:$0xff]
        %v1185 = vld [vmem:[%s1087 + $0x9] sm:$0xff]
        %v1186 = vld [vmem:[%s1087 + $0x19] sm:$0xff]
        %v1187 = vld [vmem:[%s1087 + $0x21] sm:$0xff]
        %v1188 = vld [vmem:[%s1087 + $0x31] sm:$0xff]
        %v1189 = vld [vmem:[%s1087 + $0x39] sm:$0xff]
        %v1190 = vld [vmem:[%s1087 + $0x49] sm:$0xff]
        %v1191 = vld [vmem:[%s1087 + $0x51] sm:$0xff]
        %v1192 = vld [vmem:[%s1087 + $0x61] sm:$0xff]
        %v1193 = vld [vmem:[%s1087 + $0x69] sm:$0xff]
        %v1194 = vld [vmem:[%s1087 + $0x79] sm:$0xff]
        %v1195 = vld [vmem:[%s1087 + $0x81] sm:$0xff]
        %v1196 = vld [vmem:[%s1087 + $0x91] sm:$0xff]
        %v1197 = vld [vmem:[%s1087 + $0x99] sm:$0xff]
        %v1198 = vld [vmem:[%s1087 + $0xa9] sm:$0xff]
        %v1199 = vld [vmem:[%s1087 + $0xb1] sm:$0xff]
        %v1200 = vld [vmem:[%s1087 + $0xc1] sm:$0xff]
        %v1201 = vld [vmem:[%s1087 + $0xc9] sm:$0xff]
        %v1202 = vld [vmem:[%s1087 + $0xd9] sm:$0xff]
        %v1203 = vld [vmem:[%s1087 + $0xe1] sm:$0xff]
        %v1204 = vld [vmem:[%s1087 + $0xf1] sm:$0xff]
        %v1205 = vld [vmem:[%s1087 + $0xf9] sm:$0xff]
        %v1206 = vld [vmem:[%s1087 + $0x109] sm:$0xff]
        %v1207 = vld [vmem:[%s1087 + $0x111] sm:$0xff]
        %v1208 = vld [vmem:[%s1087 + $0x121] sm:$0xff]
        %v1209 = vld [vmem:[%s1087 + $0x129] sm:$0xff]
        %v1210 = vld [vmem:[%s1087 + $0x139] sm:$0xff]
        %v1211 = vld [vmem:[%s1087 + $0x141] sm:$0xff]
        %v1212 = vld [vmem:[%s1087 + $0x151] sm:$0xff]
        %v1213 = vld [vmem:[%s1087 + $0x159] sm:$0xff]
        %v1214 = vld [vmem:[%s1087 + $0x169] sm:$0xff]
        %v1215 = vld [vmem:[%s1087 + $0x171] sm:$0xff]
        %v1216 = vmul.f32 %v1184, %v541
        %v1217 = vmul.f32 %v1185, %v541
        %v1218 = vmul.f32 %v1186, %v541
        %v1219 = vmul.f32 %v1187, %v541
        %v1220 = vmul.f32 %v1188, %v541
        %v1221 = vmul.f32 %v1189, %v541
        %v1222 = vmul.f32 %v1190, %v541
        %v1223 = vmul.f32 %v1191, %v541
        %v1224 = vmul.f32 %v1192, %v541
        %v1225 = vmul.f32 %v1193, %v541
        %v1226 = vmul.f32 %v1194, %v541
        %v1227 = vmul.f32 %v1195, %v541
        %v1228 = vmul.f32 %v1196, %v541
        %v1229 = vmul.f32 %v1197, %v541
        %v1230 = vmul.f32 %v1198, %v541
        %v1231 = vmul.f32 %v1199, %v541
        %v1232 = vmul.f32 %v1200, %v541
        %v1233 = vmul.f32 %v1201, %v541
        %v1234 = vmul.f32 %v1202, %v541
        %v1235 = vmul.f32 %v1203, %v541
        %v1236 = vmul.f32 %v1204, %v541
        %v1237 = vmul.f32 %v1205, %v541
        %v1238 = vmul.f32 %v1206, %v541
        %v1239 = vmul.f32 %v1207, %v541
        %v1240 = vmul.f32 %v1208, %v541
        %v1241 = vmul.f32 %v1209, %v541
        %v1242 = vmul.f32 %v1210, %v541
        %v1243 = vmul.f32 %v1211, %v541
        %v1244 = vmul.f32 %v1212, %v541
        %v1245 = vmul.f32 %v1213, %v541
        %v1246 = vmul.f32 %v1214, %v541
        %v1247 = vmul.f32 %v1215, %v541
        %v1248 = vpack.c.bf16 %v1217, %v1216
        %v1249 = vpack.c.bf16 %v1219, %v1218
        %v1250 = vpack.c.bf16 %v1221, %v1220
        %v1251 = vpack.c.bf16 %v1223, %v1222
        %v1252 = vpack.c.bf16 %v1225, %v1224
        %v1253 = vpack.c.bf16 %v1227, %v1226
        %v1254 = vpack.c.bf16 %v1229, %v1228
        %v1255 = vpack.c.bf16 %v1231, %v1230
        %v1256 = vpack.c.bf16 %v1233, %v1232
        %v1257 = vpack.c.bf16 %v1235, %v1234
        %v1258 = vpack.c.bf16 %v1237, %v1236
        %v1259 = vpack.c.bf16 %v1239, %v1238
        %v1260 = vpack.c.bf16 %v1241, %v1240
        %v1261 = vpack.c.bf16 %v1243, %v1242
        %v1262 = vpack.c.bf16 %v1245, %v1244
        %v1263 = vpack.c.bf16 %v1247, %v1246
        %1264 = vst [vmem:[#allocation2 + $0x38] sm:$0xff] %v1248
        %1265 = vst [vmem:[#allocation2 + $0x80] sm:$0xff] %v1249
        %1266 = vst [vmem:[#allocation2 + $0xc8] sm:$0xff] %v1250
        %1267 = vst [vmem:[#allocation2 + $0x110] sm:$0xff] %v1251
        %1268 = vst [vmem:[#allocation2 + $0x158] sm:$0xff] %v1252
        %1269 = vst [vmem:[#allocation2 + $0x1a0] sm:$0xff] %v1253
        %1270 = vst [vmem:[#allocation2 + $0x1e8] sm:$0xff] %v1254
        %1271 = vst [vmem:[#allocation2 + $0x230] sm:$0xff] %v1255
        %1272 = vst [vmem:[#allocation2 + $0x278] sm:$0xff] %v1256
        %1273 = vst [vmem:[#allocation2 + $0x2c0] sm:$0xff] %v1257
        %1274 = vst [vmem:[#allocation2 + $0x308] sm:$0xff] %v1258
        %1275 = vst [vmem:[#allocation2 + $0x350] sm:$0xff] %v1259
        %1276 = vst [vmem:[#allocation2 + $0x398] sm:$0xff] %v1260
        %1277 = vst [vmem:[#allocation2 + $0x3e0] sm:$0xff] %v1261
        %1278 = vst [vmem:[#allocation2 + $0x428] sm:$0xff] %v1262
        %1279 = vst [vmem:[#allocation2 + $0x470] sm:$0xff] %v1263
        %v1280 = vld [vmem:[%s1087 + $0x2] sm:$0xff]
        %v1281 = vld [vmem:[%s1087 + $0xa] sm:$0xff]
        %v1282 = vld [vmem:[%s1087 + $0x1a] sm:$0xff]
        %v1283 = vld [vmem:[%s1087 + $0x22] sm:$0xff]
        %v1284 = vld [vmem:[%s1087 + $0x32] sm:$0xff]
        %v1285 = vld [vmem:[%s1087 + $0x3a] sm:$0xff]
        %v1286 = vld [vmem:[%s1087 + $0x4a] sm:$0xff]
        %v1287 = vld [vmem:[%s1087 + $0x52] sm:$0xff]
        %v1288 = vld [vmem:[%s1087 + $0x62] sm:$0xff]
        %v1289 = vld [vmem:[%s1087 + $0x6a] sm:$0xff]
        %v1290 = vld [vmem:[%s1087 + $0x7a] sm:$0xff]
        %v1291 = vld [vmem:[%s1087 + $0x82] sm:$0xff]
        %v1292 = vld [vmem:[%s1087 + $0x92] sm:$0xff]
        %v1293 = vld [vmem:[%s1087 + $0x9a] sm:$0xff]
        %v1294 = vld [vmem:[%s1087 + $0xaa] sm:$0xff]
        %v1295 = vld [vmem:[%s1087 + $0xb2] sm:$0xff]
        %v1296 = vld [vmem:[%s1087 + $0xc2] sm:$0xff]
        %v1297 = vld [vmem:[%s1087 + $0xca] sm:$0xff]
        %v1298 = vld [vmem:[%s1087 + $0xda] sm:$0xff]
        %v1299 = vld [vmem:[%s1087 + $0xe2] sm:$0xff]
        %v1300 = vld [vmem:[%s1087 + $0xf2] sm:$0xff]
        %v1301 = vld [vmem:[%s1087 + $0xfa] sm:$0xff]
        %v1302 = vld [vmem:[%s1087 + $0x10a] sm:$0xff]
        %v1303 = vld [vmem:[%s1087 + $0x112] sm:$0xff]
        %v1304 = vld [vmem:[%s1087 + $0x122] sm:$0xff]
        %v1305 = vld [vmem:[%s1087 + $0x12a] sm:$0xff]
        %v1306 = vld [vmem:[%s1087 + $0x13a] sm:$0xff]
        %v1307 = vld [vmem:[%s1087 + $0x142] sm:$0xff]
        %v1308 = vld [vmem:[%s1087 + $0x152] sm:$0xff]
        %v1309 = vld [vmem:[%s1087 + $0x15a] sm:$0xff]
        %v1310 = vld [vmem:[%s1087 + $0x16a] sm:$0xff]
        %v1311 = vld [vmem:[%s1087 + $0x172] sm:$0xff]
        %v1312 = vmul.f32 %v1280, %v541
        %v1313 = vmul.f32 %v1281, %v541
        %v1314 = vmul.f32 %v1282, %v541
        %v1315 = vmul.f32 %v1283, %v541
        %v1316 = vmul.f32 %v1284, %v541
        %v1317 = vmul.f32 %v1285, %v541
        %v1318 = vmul.f32 %v1286, %v541
        %v1319 = vmul.f32 %v1287, %v541
        %v1320 = vmul.f32 %v1288, %v541
        %v1321 = vmul.f32 %v1289, %v541
        %v1322 = vmul.f32 %v1290, %v541
        %v1323 = vmul.f32 %v1291, %v541
        %v1324 = vmul.f32 %v1292, %v541
        %v1325 = vmul.f32 %v1293, %v541
        %v1326 = vmul.f32 %v1294, %v541
        %v1327 = vmul.f32 %v1295, %v541
        %v1328 = vmul.f32 %v1296, %v541
        %v1329 = vmul.f32 %v1297, %v541
        %v1330 = vmul.f32 %v1298, %v541
        %v1331 = vmul.f32 %v1299, %v541
        %v1332 = vmul.f32 %v1300, %v541
        %v1333 = vmul.f32 %v1301, %v541
        %v1334 = vmul.f32 %v1302, %v541
        %v1335 = vmul.f32 %v1303, %v541
        %v1336 = vmul.f32 %v1304, %v541
        %v1337 = vmul.f32 %v1305, %v541
        %v1338 = vmul.f32 %v1306, %v541
        %v1339 = vmul.f32 %v1307, %v541
        %v1340 = vmul.f32 %v1308, %v541
        %v1341 = vmul.f32 %v1309, %v541
        %v1342 = vmul.f32 %v1310, %v541
        %v1343 = vmul.f32 %v1311, %v541
        %v1344 = vpack.c.bf16 %v1313, %v1312
        %v1345 = vpack.c.bf16 %v1315, %v1314
        %v1346 = vpack.c.bf16 %v1317, %v1316
        %v1347 = vpack.c.bf16 %v1319, %v1318
        %v1348 = vpack.c.bf16 %v1321, %v1320
        %v1349 = vpack.c.bf16 %v1323, %v1322
        %v1350 = vpack.c.bf16 %v1325, %v1324
        %v1351 = vpack.c.bf16 %v1327, %v1326
        %v1352 = vpack.c.bf16 %v1329, %v1328
        %v1353 = vpack.c.bf16 %v1331, %v1330
        %v1354 = vpack.c.bf16 %v1333, %v1332
        %v1355 = vpack.c.bf16 %v1335, %v1334
        %v1356 = vpack.c.bf16 %v1337, %v1336
        %v1357 = vpack.c.bf16 %v1339, %v1338
        %v1358 = vpack.c.bf16 %v1341, %v1340
        %v1359 = vpack.c.bf16 %v1343, %v1342
        %1360 = vst [vmem:[#allocation2 + $0x40] sm:$0xff] %v1344
        %1361 = vst [vmem:[#allocation2 + $0x88] sm:$0xff] %v1345
        %1362 = vst [vmem:[#allocation2 + $0xd0] sm:$0xff] %v1346
        %1363 = vst [vmem:[#allocation2 + $0x118] sm:$0xff] %v1347
        %1364 = vst [vmem:[#allocation2 + $0x160] sm:$0xff] %v1348
        %1365 = vst [vmem:[#allocation2 + $0x1a8] sm:$0xff] %v1349
        %1366 = vst [vmem:[#allocation2 + $0x1f0] sm:$0xff] %v1350
        %1367 = vst [vmem:[#allocation2 + $0x238] sm:$0xff] %v1351
        %1368 = vst [vmem:[#allocation2 + $0x280] sm:$0xff] %v1352
        %1369 = vst [vmem:[#allocation2 + $0x2c8] sm:$0xff] %v1353
        %1370 = vst [vmem:[#allocation2 + $0x310] sm:$0xff] %v1354
        %1371 = vst [vmem:[#allocation2 + $0x358] sm:$0xff] %v1355
        %1372 = vst [vmem:[#allocation2 + $0x3a0] sm:$0xff] %v1356
        %1373 = vst [vmem:[#allocation2 + $0x3e8] sm:$0xff] %v1357
        %1374 = vst [vmem:[#allocation2 + $0x430] sm:$0xff] %v1358
        %1375 = vst [vmem:[#allocation2 + $0x478] sm:$0xff] %v1359
        %v1376 = vld [vmem:[#allocation2] sm:$0xff]
        %v1377 = vld [vmem:[#allocation2 + $0x8] sm:$0xff]
        %v1378 = vld [vmem:[#allocation2 + $0x10] sm:$0xff]
        %v1379 = vld [vmem:[#allocation2 + $0x18] sm:$0xff]
        %v1380 = vld [vmem:[#allocation2 + $0x20] sm:$0xff]
        %v1381 = vld [vmem:[#allocation2 + $0x28] sm:$0xff]
        %v1382 = vld [vmem:[#allocation2 + $0x30] sm:$0xff]
        %v1383 = vld [vmem:[#allocation2 + $0x38] sm:$0xff]
        %v1384 = vld [vmem:[#allocation2 + $0x40] sm:$0xff]
        %v1385 = vld [vmem:[#allocation2 + $0x48] sm:$0xff]
        %v1386 = vld [vmem:[#allocation2 + $0x50] sm:$0xff]
        %v1387 = vld [vmem:[#allocation2 + $0x58] sm:$0xff]
        %v1388 = vld [vmem:[#allocation2 + $0x60] sm:$0xff]
        %v1389 = vld [vmem:[#allocation2 + $0x68] sm:$0xff]
        %v1390 = vld [vmem:[#allocation2 + $0x70] sm:$0xff]
        %v1391 = vld [vmem:[#allocation2 + $0x78] sm:$0xff]
        %v1392 = vld [vmem:[#allocation2 + $0x80] sm:$0xff]
        %v1393 = vld [vmem:[#allocation2 + $0x88] sm:$0xff]
        %v1394 = vld [vmem:[#allocation2 + $0x90] sm:$0xff]
        %v1395 = vld [vmem:[#allocation2 + $0x98] sm:$0xff]
        %v1396 = vld [vmem:[#allocation2 + $0xa0] sm:$0xff]
        %v1397 = vld [vmem:[#allocation2 + $0xa8] sm:$0xff]
        %v1398 = vld [vmem:[#allocation2 + $0xb0] sm:$0xff]
        %v1399 = vld [vmem:[#allocation2 + $0xb8] sm:$0xff]
        %v1400 = vld [vmem:[#allocation2 + $0xc0] sm:$0xff]
        %v1401 = vld [vmem:[#allocation2 + $0xc8] sm:$0xff]
        %v1402 = vld [vmem:[#allocation2 + $0xd0] sm:$0xff]
        %v1403 = vld [vmem:[#allocation2 + $0xd8] sm:$0xff]
        %v1404 = vld [vmem:[#allocation2 + $0xe0] sm:$0xff]
        %v1405 = vld [vmem:[#allocation2 + $0xe8] sm:$0xff]
        %v1406 = vld [vmem:[#allocation2 + $0xf0] sm:$0xff]
        %v1407 = vld [vmem:[#allocation2 + $0xf8] sm:$0xff]
        %v1408 = vld [vmem:[#allocation2 + $0x100] sm:$0xff]
        %v1409 = vld [vmem:[#allocation2 + $0x108] sm:$0xff]
        %v1410 = vld [vmem:[#allocation2 + $0x110] sm:$0xff]
        %v1411 = vld [vmem:[#allocation2 + $0x118] sm:$0xff]
        %v1412 = vld [vmem:[#allocation2 + $0x120] sm:$0xff]
        %v1413 = vld [vmem:[#allocation2 + $0x128] sm:$0xff]
        %v1414 = vld [vmem:[#allocation2 + $0x130] sm:$0xff]
        %v1415 = vld [vmem:[#allocation2 + $0x138] sm:$0xff]
        %v1416 = vld [vmem:[#allocation2 + $0x140] sm:$0xff]
        %v1417 = vld [vmem:[#allocation2 + $0x148] sm:$0xff]
        %v1418 = vld [vmem:[#allocation2 + $0x150] sm:$0xff]
        %v1419 = vld [vmem:[#allocation2 + $0x158] sm:$0xff]
        %v1420 = vld [vmem:[#allocation2 + $0x160] sm:$0xff]
        %v1421 = vld [vmem:[#allocation2 + $0x168] sm:$0xff]
        %v1422 = vld [vmem:[#allocation2 + $0x170] sm:$0xff]
        %v1423 = vld [vmem:[#allocation2 + $0x178] sm:$0xff]
        %v1424 = vld [vmem:[#allocation2 + $0x180] sm:$0xff]
        %v1425 = vld [vmem:[#allocation2 + $0x188] sm:$0xff]
        %v1426 = vld [vmem:[#allocation2 + $0x190] sm:$0xff]
        %v1427 = vld [vmem:[#allocation2 + $0x198] sm:$0xff]
        %v1428 = vld [vmem:[#allocation2 + $0x1a0] sm:$0xff]
        %v1429 = vld [vmem:[#allocation2 + $0x1a8] sm:$0xff]
        %v1430 = vld [vmem:[#allocation2 + $0x1b0] sm:$0xff]
        %v1431 = vld [vmem:[#allocation2 + $0x1b8] sm:$0xff]
        %v1432 = vld [vmem:[#allocation2 + $0x1c0] sm:$0xff]
        %v1433 = vld [vmem:[#allocation2 + $0x1c8] sm:$0xff]
        %v1434 = vld [vmem:[#allocation2 + $0x1d0] sm:$0xff]
        %v1435 = vld [vmem:[#allocation2 + $0x1d8] sm:$0xff]
        %v1436 = vld [vmem:[#allocation2 + $0x1e0] sm:$0xff]
        %v1437 = vld [vmem:[#allocation2 + $0x1e8] sm:$0xff]
        %v1438 = vld [vmem:[#allocation2 + $0x1f0] sm:$0xff]
        %v1439 = vld [vmem:[#allocation2 + $0x1f8] sm:$0xff]
        %v1440 = vld [vmem:[#allocation2 + $0x200] sm:$0xff]
        %v1441 = vld [vmem:[#allocation2 + $0x208] sm:$0xff]
        %v1442 = vld [vmem:[#allocation2 + $0x210] sm:$0xff]
        %v1443 = vld [vmem:[#allocation2 + $0x218] sm:$0xff]
        %v1444 = vld [vmem:[#allocation2 + $0x220] sm:$0xff]
        %v1445 = vld [vmem:[#allocation2 + $0x228] sm:$0xff]
        %v1446 = vld [vmem:[#allocation2 + $0x230] sm:$0xff]
        %v1447 = vld [vmem:[#allocation2 + $0x238] sm:$0xff]
        %v1448 = vld [vmem:[#allocation2 + $0x240] sm:$0xff]
        %v1449 = vld [vmem:[#allocation2 + $0x248] sm:$0xff]
        %v1450 = vld [vmem:[#allocation2 + $0x250] sm:$0xff]
        %v1451 = vld [vmem:[#allocation2 + $0x258] sm:$0xff]
        %v1452 = vld [vmem:[#allocation2 + $0x260] sm:$0xff]
        %v1453 = vld [vmem:[#allocation2 + $0x268] sm:$0xff]
        %v1454 = vld [vmem:[#allocation2 + $0x270] sm:$0xff]
        %v1455 = vld [vmem:[#allocation2 + $0x278] sm:$0xff]
        %v1456 = vld [vmem:[#allocation2 + $0x280] sm:$0xff]
        %v1457 = vld [vmem:[#allocation2 + $0x288] sm:$0xff]
        %v1458 = vld [vmem:[#allocation2 + $0x290] sm:$0xff]
        %v1459 = vld [vmem:[#allocation2 + $0x298] sm:$0xff]
        %v1460 = vld [vmem:[#allocation2 + $0x2a0] sm:$0xff]
        %v1461 = vld [vmem:[#allocation2 + $0x2a8] sm:$0xff]
        %v1462 = vld [vmem:[#allocation2 + $0x2b0] sm:$0xff]
        %v1463 = vld [vmem:[#allocation2 + $0x2b8] sm:$0xff]
        %v1464 = vld [vmem:[#allocation2 + $0x2c0] sm:$0xff]
        %v1465 = vld [vmem:[#allocation2 + $0x2c8] sm:$0xff]
        %v1466 = vld [vmem:[#allocation2 + $0x2d0] sm:$0xff]
        %v1467 = vld [vmem:[#allocation2 + $0x2d8] sm:$0xff]
        %v1468 = vld [vmem:[#allocation2 + $0x2e0] sm:$0xff]
        %v1469 = vld [vmem:[#allocation2 + $0x2e8] sm:$0xff]
        %v1470 = vld [vmem:[#allocation2 + $0x2f0] sm:$0xff]
        %v1471 = vld [vmem:[#allocation2 + $0x2f8] sm:$0xff]
        %v1472 = vld [vmem:[#allocation2 + $0x300] sm:$0xff]
        %v1473 = vld [vmem:[#allocation2 + $0x308] sm:$0xff]
        %v1474 = vld [vmem:[#allocation2 + $0x310] sm:$0xff]
        %v1475 = vld [vmem:[#allocation2 + $0x318] sm:$0xff]
        %v1476 = vld [vmem:[#allocation2 + $0x320] sm:$0xff]
        %v1477 = vld [vmem:[#allocation2 + $0x328] sm:$0xff]
        %v1478 = vld [vmem:[#allocation2 + $0x330] sm:$0xff]
        %v1479 = vld [vmem:[#allocation2 + $0x338] sm:$0xff]
        %v1480 = vld [vmem:[#allocation2 + $0x340] sm:$0xff]
        %v1481 = vld [vmem:[#allocation2 + $0x348] sm:$0xff]
        %v1482 = vld [vmem:[#allocation2 + $0x350] sm:$0xff]
        %v1483 = vld [vmem:[#allocation2 + $0x358] sm:$0xff]
        %v1484 = vld [vmem:[#allocation2 + $0x360] sm:$0xff]
        %v1485 = vld [vmem:[#allocation2 + $0x368] sm:$0xff]
        %v1486 = vld [vmem:[#allocation2 + $0x370] sm:$0xff]
        %v1487 = vld [vmem:[#allocation2 + $0x378] sm:$0xff]
        %v1488 = vld [vmem:[#allocation2 + $0x380] sm:$0xff]
        %v1489 = vld [vmem:[#allocation2 + $0x388] sm:$0xff]
        %v1490 = vld [vmem:[#allocation2 + $0x390] sm:$0xff]
        %v1491 = vld [vmem:[#allocation2 + $0x398] sm:$0xff]
        %v1492 = vld [vmem:[#allocation2 + $0x3a0] sm:$0xff]
        %v1493 = vld [vmem:[#allocation2 + $0x3a8] sm:$0xff]
        %v1494 = vld [vmem:[#allocation2 + $0x3b0] sm:$0xff]
        %v1495 = vld [vmem:[#allocation2 + $0x3b8] sm:$0xff]
        %v1496 = vld [vmem:[#allocation2 + $0x3c0] sm:$0xff]
        %v1497 = vld [vmem:[#allocation2 + $0x3c8] sm:$0xff]
        %v1498 = vld [vmem:[#allocation2 + $0x3d0] sm:$0xff]
        %v1499 = vld [vmem:[#allocation2 + $0x3d8] sm:$0xff]
        %v1500 = vld [vmem:[#allocation2 + $0x3e0] sm:$0xff]
        %v1501 = vld [vmem:[#allocation2 + $0x3e8] sm:$0xff]
        %v1502 = vld [vmem:[#allocation2 + $0x3f0] sm:$0xff]
        %v1503 = vld [vmem:[#allocation2 + $0x3f8] sm:$0xff]
        %v1504 = vld [vmem:[#allocation2 + $0x400] sm:$0xff]
        %v1505 = vld [vmem:[#allocation2 + $0x408] sm:$0xff]
        %v1506 = vld [vmem:[#allocation2 + $0x410] sm:$0xff]
        %v1507 = vld [vmem:[#allocation2 + $0x418] sm:$0xff]
        %v1508 = vld [vmem:[#allocation2 + $0x420] sm:$0xff]
        %v1509 = vld [vmem:[#allocation2 + $0x428] sm:$0xff]
        %v1510 = vld [vmem:[#allocation2 + $0x430] sm:$0xff]
        %v1511 = vld [vmem:[#allocation2 + $0x438] sm:$0xff]
        %v1512 = vld [vmem:[#allocation2 + $0x440] sm:$0xff]
        %v1513 = vld [vmem:[#allocation2 + $0x448] sm:$0xff]
        %v1514 = vld [vmem:[#allocation2 + $0x450] sm:$0xff]
        %v1515 = vld [vmem:[#allocation2 + $0x458] sm:$0xff]
        %v1516 = vld [vmem:[#allocation2 + $0x460] sm:$0xff]
        %v1517 = vld [vmem:[#allocation2 + $0x468] sm:$0xff]
        %v1518 = vld [vmem:[#allocation2 + $0x470] sm:$0xff]
        %v1519 = vld [vmem:[#allocation2 + $0x478] sm:$0xff]
        %v1520 = vld [vmem:[%s4] sm:$0xf]
        %v1521 = vld [vmem:[%s4 + $0x4] sm:$0xf]
        %v1522 = vld [vmem:[%s4 + $0x8] sm:$0xf]
        %v1523 = vld [vmem:[%s4 + $0xc] sm:$0xf]
        %v1524 = vld [vmem:[%s4 + $0x10] sm:$0xf]
        %v1525 = vld [vmem:[%s4 + $0x14] sm:$0xf]
        %v1526 = vld [vmem:[%s4 + $0x18] sm:$0xf]
        %v1527 = vld [vmem:[%s4 + $0x1c] sm:$0xf]
        %v1528 = vld [vmem:[%s4 + $0x20] sm:$0xf]
        %v1529 = vld [vmem:[%s4 + $0x24] sm:$0xf]
        %v1530 = vld [vmem:[%s4 + $0x28] sm:$0xf]
        %v1531 = vld [vmem:[%s4 + $0x2c] sm:$0xf]
        %v1532 = vld [vmem:[%s4 + $0x30] sm:$0xf]
        %v1533 = vld [vmem:[%s4 + $0x34] sm:$0xf]
        %v1534 = vld [vmem:[%s4 + $0x38] sm:$0xf]
        %v1535 = vld [vmem:[%s4 + $0x3c] sm:$0xf]
        %v1536 = vld [vmem:[%s4 + $0x40] sm:$0xf]
        %v1537 = vld [vmem:[%s4 + $0x44] sm:$0xf]
        %v1538 = vld [vmem:[%s4 + $0x48] sm:$0xf]
        %v1539 = vld [vmem:[%s4 + $0x4c] sm:$0xf]
        %v1540 = vld [vmem:[%s4 + $0x50] sm:$0xf]
        %v1541 = vld [vmem:[%s4 + $0x54] sm:$0xf]
        %v1542 = vld [vmem:[%s4 + $0x58] sm:$0xf]
        %v1543 = vld [vmem:[%s4 + $0x5c] sm:$0xf]
        %v1544 = vld [vmem:[%s4 + $0x60] sm:$0xf]
        %v1545 = vld [vmem:[%s4 + $0x64] sm:$0xf]
        %v1546 = vld [vmem:[%s4 + $0x68] sm:$0xf]
        %v1547 = vld [vmem:[%s4 + $0x6c] sm:$0xf]
        %v1548 = vld [vmem:[%s4 + $0x70] sm:$0xf]
        %v1549 = vld [vmem:[%s4 + $0x74] sm:$0xf]
        %v1550 = vld [vmem:[%s4 + $0x78] sm:$0xf]
        %v1551 = vld [vmem:[%s4 + $0x7c] sm:$0xf]
        %v1552 = vld [vmem:[%s4 + $0x80] sm:$0xf]
        %v1553 = vld [vmem:[%s4 + $0x84] sm:$0xf]
        %v1554 = vld [vmem:[%s4 + $0x88] sm:$0xf]
        %v1555 = vld [vmem:[%s4 + $0x8c] sm:$0xf]
        %v1556 = vld [vmem:[%s4 + $0x90] sm:$0xf]
        %v1557 = vld [vmem:[%s4 + $0x94] sm:$0xf]
        %v1558 = vld [vmem:[%s4 + $0x98] sm:$0xf]
        %v1559 = vld [vmem:[%s4 + $0x9c] sm:$0xf]
        %v1560 = vld [vmem:[%s4 + $0xa0] sm:$0xf]
        %v1561 = vld [vmem:[%s4 + $0xa4] sm:$0xf]
        %v1562 = vld [vmem:[%s4 + $0xa8] sm:$0xf]
        %v1563 = vld [vmem:[%s4 + $0xac] sm:$0xf]
        %v1564 = vld [vmem:[%s4 + $0xb0] sm:$0xf]
        %v1565 = vld [vmem:[%s4 + $0xb4] sm:$0xf]
        %v1566 = vld [vmem:[%s4 + $0xb8] sm:$0xf]
        %v1567 = vld [vmem:[%s4 + $0xbc] sm:$0xf]
        %v1568 = vld [vmem:[%s4 + $0xc0] sm:$0xf]
        %v1569 = vld [vmem:[%s4 + $0xc4] sm:$0xf]
        %v1570 = vld [vmem:[%s4 + $0xc8] sm:$0xf]
        %v1571 = vld [vmem:[%s4 + $0xcc] sm:$0xf]
        %v1572 = vld [vmem:[%s4 + $0xd0] sm:$0xf]
        %v1573 = vld [vmem:[%s4 + $0xd4] sm:$0xf]
        %v1574 = vld [vmem:[%s4 + $0xd8] sm:$0xf]
        %v1575 = vld [vmem:[%s4 + $0xdc] sm:$0xf]
        %v1576 = vld [vmem:[%s4 + $0xe0] sm:$0xf]
        %v1577 = vld [vmem:[%s4 + $0xe4] sm:$0xf]
        %v1578 = vld [vmem:[%s4 + $0xe8] sm:$0xf]
        %v1579 = vld [vmem:[%s4 + $0xec] sm:$0xf]
        %v1580 = vld [vmem:[%s4 + $0xf0] sm:$0xf]
        %v1581 = vld [vmem:[%s4 + $0xf4] sm:$0xf]
        %v1582 = vld [vmem:[%s4 + $0xf8] sm:$0xf]
        %v1583 = vld [vmem:[%s4 + $0xfc] sm:$0xf]
        %v1584 = vld [vmem:[%s4 + $0x100] sm:$0xf]
        %v1585 = vld [vmem:[%s4 + $0x104] sm:$0xf]
        %v1586 = vld [vmem:[%s4 + $0x108] sm:$0xf]
        %v1587 = vld [vmem:[%s4 + $0x10c] sm:$0xf]
        %v1588 = vld [vmem:[%s4 + $0x110] sm:$0xf]
        %v1589 = vld [vmem:[%s4 + $0x114] sm:$0xf]
        %v1590 = vld [vmem:[%s4 + $0x118] sm:$0xf]
        %v1591 = vld [vmem:[%s4 + $0x11c] sm:$0xf]
        %v1592 = vld [vmem:[%s4 + $0x120] sm:$0xf]
        %v1593 = vld [vmem:[%s4 + $0x124] sm:$0xf]
        %v1594 = vld [vmem:[%s4 + $0x128] sm:$0xf]
        %v1595 = vld [vmem:[%s4 + $0x12c] sm:$0xf]
        %v1596 = vld [vmem:[%s4 + $0x130] sm:$0xf]
        %v1597 = vld [vmem:[%s4 + $0x134] sm:$0xf]
        %v1598 = vld [vmem:[%s4 + $0x138] sm:$0xf]
        %v1599 = vld [vmem:[%s4 + $0x13c] sm:$0xf]
        %v1600 = vld [vmem:[%s4 + $0x140] sm:$0xf]
        %v1601 = vld [vmem:[%s4 + $0x144] sm:$0xf]
        %v1602 = vld [vmem:[%s4 + $0x148] sm:$0xf]
        %v1603 = vld [vmem:[%s4 + $0x14c] sm:$0xf]
        %v1604 = vld [vmem:[%s4 + $0x150] sm:$0xf]
        %v1605 = vld [vmem:[%s4 + $0x154] sm:$0xf]
        %v1606 = vld [vmem:[%s4 + $0x158] sm:$0xf]
        %v1607 = vld [vmem:[%s4 + $0x15c] sm:$0xf]
        %v1608 = vld [vmem:[%s4 + $0x160] sm:$0xf]
        %v1609 = vld [vmem:[%s4 + $0x164] sm:$0xf]
        %v1610 = vld [vmem:[%s4 + $0x168] sm:$0xf]
        %v1611 = vld [vmem:[%s4 + $0x16c] sm:$0xf]
        %v1612 = vld [vmem:[%s4 + $0x170] sm:$0xf]
        %v1613 = vld [vmem:[%s4 + $0x174] sm:$0xf]
        %v1614 = vld [vmem:[%s4 + $0x178] sm:$0xf]
        %v1615 = vld [vmem:[%s4 + $0x17c] sm:$0xf]
        %v1616 = vld [vmem:[%s4 + $0x180] sm:$0xf]
        %v1617 = vld [vmem:[%s4 + $0x184] sm:$0xf]
        %v1618 = vld [vmem:[%s4 + $0x188] sm:$0xf]
        %v1619 = vld [vmem:[%s4 + $0x18c] sm:$0xf]
        %v1620 = vld [vmem:[%s4 + $0x190] sm:$0xf]
        %v1621 = vld [vmem:[%s4 + $0x194] sm:$0xf]
        %v1622 = vld [vmem:[%s4 + $0x198] sm:$0xf]
        %v1623 = vld [vmem:[%s4 + $0x19c] sm:$0xf]
        %v1624 = vld [vmem:[%s4 + $0x1a0] sm:$0xf]
        %v1625 = vld [vmem:[%s4 + $0x1a4] sm:$0xf]
        %v1626 = vld [vmem:[%s4 + $0x1a8] sm:$0xf]
        %v1627 = vld [vmem:[%s4 + $0x1ac] sm:$0xf]
        %v1628 = vld [vmem:[%s4 + $0x1b0] sm:$0xf]
        %v1629 = vld [vmem:[%s4 + $0x1b4] sm:$0xf]
        %v1630 = vld [vmem:[%s4 + $0x1b8] sm:$0xf]
        %v1631 = vld [vmem:[%s4 + $0x1bc] sm:$0xf]
        %v1632 = vld [vmem:[%s4 + $0x1c0] sm:$0xf]
        %v1633 = vld [vmem:[%s4 + $0x1c4] sm:$0xf]
        %v1634 = vld [vmem:[%s4 + $0x1c8] sm:$0xf]
        %v1635 = vld [vmem:[%s4 + $0x1cc] sm:$0xf]
        %v1636 = vld [vmem:[%s4 + $0x1d0] sm:$0xf]
        %v1637 = vld [vmem:[%s4 + $0x1d4] sm:$0xf]
        %v1638 = vld [vmem:[%s4 + $0x1d8] sm:$0xf]
        %v1639 = vld [vmem:[%s4 + $0x1dc] sm:$0xf]
        %v1640 = vld [vmem:[%s4 + $0x1e0] sm:$0xf]
        %v1641 = vld [vmem:[%s4 + $0x1e4] sm:$0xf]
        %v1642 = vld [vmem:[%s4 + $0x1e8] sm:$0xf]
        %v1643 = vld [vmem:[%s4 + $0x1ec] sm:$0xf]
        %v1644 = vld [vmem:[%s4 + $0x1f0] sm:$0xf]
        %v1645 = vld [vmem:[%s4 + $0x1f4] sm:$0xf]
        %v1646 = vld [vmem:[%s4 + $0x1f8] sm:$0xf]
        %v1647 = vld [vmem:[%s4 + $0x1fc] sm:$0xf]
        %v1648 = vld [vmem:[%s4 + $0x200] sm:$0xf]
        %v1649 = vld [vmem:[%s4 + $0x204] sm:$0xf]
        %v1650 = vld [vmem:[%s4 + $0x208] sm:$0xf]
        %v1651 = vld [vmem:[%s4 + $0x20c] sm:$0xf]
        %v1652 = vld [vmem:[%s4 + $0x210] sm:$0xf]
        %v1653 = vld [vmem:[%s4 + $0x214] sm:$0xf]
        %v1654 = vld [vmem:[%s4 + $0x218] sm:$0xf]
        %v1655 = vld [vmem:[%s4 + $0x21c] sm:$0xf]
        %v1656 = vld [vmem:[%s4 + $0x220] sm:$0xf]
        %v1657 = vld [vmem:[%s4 + $0x224] sm:$0xf]
        %v1658 = vld [vmem:[%s4 + $0x228] sm:$0xf]
        %v1659 = vld [vmem:[%s4 + $0x22c] sm:$0xf]
        %v1660 = vld [vmem:[%s4 + $0x230] sm:$0xf]
        %v1661 = vld [vmem:[%s4 + $0x234] sm:$0xf]
        %v1662 = vld [vmem:[%s4 + $0x238] sm:$0xf]
        %v1663 = vld [vmem:[%s4 + $0x23c] sm:$0xf]
        %v1808 = vunpack.c.l.b16 %v1520
        %v1809 = vunpack.c.l.b16 %v1521
        %v1810 = vunpack.c.l.b16 %v1522
        %v1811 = vunpack.c.l.b16 %v1523
        %v1812 = vunpack.c.l.b16 %v1524
        %v1813 = vunpack.c.l.b16 %v1525
        %v1814 = vunpack.c.l.b16 %v1526
        %v1815 = vunpack.c.l.b16 %v1527
        %v1816 = vunpack.c.l.b16 %v1528
        %v1817 = vunpack.c.l.b16 %v1529
        %v1818 = vunpack.c.l.b16 %v1530
        %v1819 = vunpack.c.l.b16 %v1531
        %v1820 = vunpack.c.l.b16 %v1532
        %v1821 = vunpack.c.l.b16 %v1533
        %v1822 = vunpack.c.l.b16 %v1534
        %v1823 = vunpack.c.l.b16 %v1535
        %v1824 = vunpack.c.l.b16 %v1536
        %v1825 = vunpack.c.l.b16 %v1537
        %v1826 = vunpack.c.l.b16 %v1538
        %v1827 = vunpack.c.l.b16 %v1539
        %v1828 = vunpack.c.l.b16 %v1540
        %v1829 = vunpack.c.l.b16 %v1541
        %v1830 = vunpack.c.l.b16 %v1542
        %v1831 = vunpack.c.l.b16 %v1543
        %v1832 = vunpack.c.l.b16 %v1544
        %v1833 = vunpack.c.l.b16 %v1545
        %v1834 = vunpack.c.l.b16 %v1546
        %v1835 = vunpack.c.l.b16 %v1547
        %v1836 = vunpack.c.l.b16 %v1548
        %v1837 = vunpack.c.l.b16 %v1549
        %v1838 = vunpack.c.l.b16 %v1550
        %v1839 = vunpack.c.l.b16 %v1551
        %v1840 = vunpack.c.l.b16 %v1552
        %v1841 = vunpack.c.l.b16 %v1553
        %v1842 = vunpack.c.l.b16 %v1554
        %v1843 = vunpack.c.l.b16 %v1555
        %v1844 = vunpack.c.l.b16 %v1556
        %v1845 = vunpack.c.l.b16 %v1557
        %v1846 = vunpack.c.l.b16 %v1558
        %v1847 = vunpack.c.l.b16 %v1559
        %v1848 = vunpack.c.l.b16 %v1560
        %v1849 = vunpack.c.l.b16 %v1561
        %v1850 = vunpack.c.l.b16 %v1562
        %v1851 = vunpack.c.l.b16 %v1563
        %v1852 = vunpack.c.l.b16 %v1564
        %v1853 = vunpack.c.l.b16 %v1565
        %v1854 = vunpack.c.l.b16 %v1566
        %v1855 = vunpack.c.l.b16 %v1567
        %v1856 = vunpack.c.l.b16 %v1568
        %v1857 = vunpack.c.l.b16 %v1569
        %v1858 = vunpack.c.l.b16 %v1570
        %v1859 = vunpack.c.l.b16 %v1571
        %v1860 = vunpack.c.l.b16 %v1572
        %v1861 = vunpack.c.l.b16 %v1573
        %v1862 = vunpack.c.l.b16 %v1574
        %v1863 = vunpack.c.l.b16 %v1575
        %v1864 = vunpack.c.l.b16 %v1576
        %v1865 = vunpack.c.l.b16 %v1577
        %v1866 = vunpack.c.l.b16 %v1578
        %v1867 = vunpack.c.l.b16 %v1579
        %v1868 = vunpack.c.l.b16 %v1580
        %v1869 = vunpack.c.l.b16 %v1581
        %v1870 = vunpack.c.l.b16 %v1582
        %v1871 = vunpack.c.l.b16 %v1583
        %v1872 = vunpack.c.l.b16 %v1584
        %v1873 = vunpack.c.l.b16 %v1585
        %v1874 = vunpack.c.l.b16 %v1586
        %v1875 = vunpack.c.l.b16 %v1587
        %v1876 = vunpack.c.l.b16 %v1588
        %v1877 = vunpack.c.l.b16 %v1589
        %v1878 = vunpack.c.l.b16 %v1590
        %v1879 = vunpack.c.l.b16 %v1591
        %v1880 = vunpack.c.l.b16 %v1592
        %v1881 = vunpack.c.l.b16 %v1593
        %v1882 = vunpack.c.l.b16 %v1594
        %v1883 = vunpack.c.l.b16 %v1595
        %v1884 = vunpack.c.l.b16 %v1596
        %v1885 = vunpack.c.l.b16 %v1597
        %v1886 = vunpack.c.l.b16 %v1598
        %v1887 = vunpack.c.l.b16 %v1599
        %v1888 = vunpack.c.l.b16 %v1600
        %v1889 = vunpack.c.l.b16 %v1601
        %v1890 = vunpack.c.l.b16 %v1602
        %v1891 = vunpack.c.l.b16 %v1603
        %v1892 = vunpack.c.l.b16 %v1604
        %v1893 = vunpack.c.l.b16 %v1605
        %v1894 = vunpack.c.l.b16 %v1606
        %v1895 = vunpack.c.l.b16 %v1607
        %v1896 = vunpack.c.l.b16 %v1608
        %v1897 = vunpack.c.l.b16 %v1609
        %v1898 = vunpack.c.l.b16 %v1610
        %v1899 = vunpack.c.l.b16 %v1611
        %v1900 = vunpack.c.l.b16 %v1612
        %v1901 = vunpack.c.l.b16 %v1613
        %v1902 = vunpack.c.l.b16 %v1614
        %v1903 = vunpack.c.l.b16 %v1615
        %v1904 = vunpack.c.l.b16 %v1616
        %v1905 = vunpack.c.l.b16 %v1617
        %v1906 = vunpack.c.l.b16 %v1618
        %v1907 = vunpack.c.l.b16 %v1619
        %v1908 = vunpack.c.l.b16 %v1620
        %v1909 = vunpack.c.l.b16 %v1621
        %v1910 = vunpack.c.l.b16 %v1622
        %v1911 = vunpack.c.l.b16 %v1623
        %v1912 = vunpack.c.l.b16 %v1624
        %v1913 = vunpack.c.l.b16 %v1625
        %v1914 = vunpack.c.l.b16 %v1626
        %v1915 = vunpack.c.l.b16 %v1627
        %v1916 = vunpack.c.l.b16 %v1628
        %v1917 = vunpack.c.l.b16 %v1629
        %v1918 = vunpack.c.l.b16 %v1630
        %v1919 = vunpack.c.l.b16 %v1631
        %v1920 = vunpack.c.l.b16 %v1632
        %v1921 = vunpack.c.l.b16 %v1633
        %v1922 = vunpack.c.l.b16 %v1634
        %v1923 = vunpack.c.l.b16 %v1635
        %v1924 = vunpack.c.l.b16 %v1636
        %v1925 = vunpack.c.l.b16 %v1637
        %v1926 = vunpack.c.l.b16 %v1638
        %v1927 = vunpack.c.l.b16 %v1639
        %v1928 = vunpack.c.l.b16 %v1640
        %v1929 = vunpack.c.l.b16 %v1641
        %v1930 = vunpack.c.l.b16 %v1642
        %v1931 = vunpack.c.l.b16 %v1643
        %v1932 = vunpack.c.l.b16 %v1644
        %v1933 = vunpack.c.l.b16 %v1645
        %v1934 = vunpack.c.l.b16 %v1646
        %v1935 = vunpack.c.l.b16 %v1647
        %v1936 = vunpack.c.l.b16 %v1648
        %v1937 = vunpack.c.l.b16 %v1649
        %v1938 = vunpack.c.l.b16 %v1650
        %v1939 = vunpack.c.l.b16 %v1651
        %v1940 = vunpack.c.l.b16 %v1652
        %v1941 = vunpack.c.l.b16 %v1653
        %v1942 = vunpack.c.l.b16 %v1654
        %v1943 = vunpack.c.l.b16 %v1655
        %v1944 = vunpack.c.l.b16 %v1656
        %v1945 = vunpack.c.l.b16 %v1657
        %v1946 = vunpack.c.l.b16 %v1658
        %v1947 = vunpack.c.l.b16 %v1659
        %v1948 = vunpack.c.l.b16 %v1660
        %v1949 = vunpack.c.l.b16 %v1661
        %v1950 = vunpack.c.l.b16 %v1662
        %v1951 = vunpack.c.l.b16 %v1663
        %v1952 = vpack.c.b16 %v1809, %v1808
        %v1953 = vpack.c.b16 %v1811, %v1810
        %v1954 = vpack.c.b16 %v1813, %v1812
        %v1955 = vpack.c.b16 %v1815, %v1814
        %v1956 = vpack.c.b16 %v1817, %v1816
        %v1957 = vpack.c.b16 %v1819, %v1818
        %v1958 = vpack.c.b16 %v1821, %v1820
        %v1959 = vpack.c.b16 %v1823, %v1822
        %v1960 = vpack.c.b16 %v1825, %v1824
        %v1961 = vpack.c.b16 %v1827, %v1826
        %v1962 = vpack.c.b16 %v1829, %v1828
        %v1963 = vpack.c.b16 %v1831, %v1830
        %v1964 = vpack.c.b16 %v1833, %v1832
        %v1965 = vpack.c.b16 %v1835, %v1834
        %v1966 = vpack.c.b16 %v1837, %v1836
        %v1967 = vpack.c.b16 %v1839, %v1838
        %v1968 = vpack.c.b16 %v1841, %v1840
        %v1969 = vpack.c.b16 %v1843, %v1842
        %v1970 = vpack.c.b16 %v1845, %v1844
        %v1971 = vpack.c.b16 %v1847, %v1846
        %v1972 = vpack.c.b16 %v1849, %v1848
        %v1973 = vpack.c.b16 %v1851, %v1850
        %v1974 = vpack.c.b16 %v1853, %v1852
        %v1975 = vpack.c.b16 %v1855, %v1854
        %v1976 = vpack.c.b16 %v1857, %v1856
        %v1977 = vpack.c.b16 %v1859, %v1858
        %v1978 = vpack.c.b16 %v1861, %v1860
        %v1979 = vpack.c.b16 %v1863, %v1862
        %v1980 = vpack.c.b16 %v1865, %v1864
        %v1981 = vpack.c.b16 %v1867, %v1866
        %v1982 = vpack.c.b16 %v1869, %v1868
        %v1983 = vpack.c.b16 %v1871, %v1870
        %v1984 = vpack.c.b16 %v1873, %v1872
        %v1985 = vpack.c.b16 %v1875, %v1874
        %v1986 = vpack.c.b16 %v1877, %v1876
        %v1987 = vpack.c.b16 %v1879, %v1878
        %v1988 = vpack.c.b16 %v1881, %v1880
        %v1989 = vpack.c.b16 %v1883, %v1882
        %v1990 = vpack.c.b16 %v1885, %v1884
        %v1991 = vpack.c.b16 %v1887, %v1886
        %v1992 = vpack.c.b16 %v1889, %v1888
        %v1993 = vpack.c.b16 %v1891, %v1890
        %v1994 = vpack.c.b16 %v1893, %v1892
        %v1995 = vpack.c.b16 %v1895, %v1894
        %v1996 = vpack.c.b16 %v1897, %v1896
        %v1997 = vpack.c.b16 %v1899, %v1898
        %v1998 = vpack.c.b16 %v1901, %v1900
        %v1999 = vpack.c.b16 %v1903, %v1902
        %v2000 = vpack.c.b16 %v1905, %v1904
        %v2001 = vpack.c.b16 %v1907, %v1906
        %v2002 = vpack.c.b16 %v1909, %v1908
        %v2003 = vpack.c.b16 %v1911, %v1910
        %v2004 = vpack.c.b16 %v1913, %v1912
        %v2005 = vpack.c.b16 %v1915, %v1914
        %v2006 = vpack.c.b16 %v1917, %v1916
        %v2007 = vpack.c.b16 %v1919, %v1918
        %v2008 = vpack.c.b16 %v1921, %v1920
        %v2009 = vpack.c.b16 %v1923, %v1922
        %v2010 = vpack.c.b16 %v1925, %v1924
        %v2011 = vpack.c.b16 %v1927, %v1926
        %v2012 = vpack.c.b16 %v1929, %v1928
        %v2013 = vpack.c.b16 %v1931, %v1930
        %v2014 = vpack.c.b16 %v1933, %v1932
        %v2015 = vpack.c.b16 %v1935, %v1934
        %v2016 = vpack.c.b16 %v1937, %v1936
        %v2017 = vpack.c.b16 %v1939, %v1938
        %v2018 = vpack.c.b16 %v1941, %v1940
        %v2019 = vpack.c.b16 %v1943, %v1942
        %v2020 = vpack.c.b16 %v1945, %v1944
        %v2021 = vpack.c.b16 %v1947, %v1946
        %v2022 = vpack.c.b16 %v1949, %v1948
        %v2023 = vpack.c.b16 %v1951, %v1950
        %2096 = vmatprep.subr.bf16.mxu0 0
        %2097 = vmatpush1.bf16.msra.mxu0 %v1952
        %2098 = vmatprep.subr.bf16.mxu0 0
        %2099 = vmatpush1.bf16.msra.mxu0 %v1953
        %2100 = vmatprep.subr.bf16.mxu0 0
        %2101 = vmatpush1.bf16.msra.mxu0 %v1954
        %2102 = vmatprep.subr.bf16.mxu0 0
        %2103 = vmatpush1.bf16.msra.mxu0 %v1955
        %2104 = vmatprep.subr.bf16.mxu0 0
        %2105 = vmatpush1.bf16.msra.mxu0 %v1956
        %2106 = vmatprep.subr.bf16.mxu0 0
        %2107 = vmatpush1.bf16.msra.mxu0 %v1957
        %2108 = vmatprep.subr.bf16.mxu0 0
        %2109 = vmatpush1.bf16.msra.mxu0 %v1958
        %2110 = vmatprep.subr.bf16.mxu0 0
        %2111 = vmatpush1.bf16.msra.mxu0 %v1959
        %2112 = vmatprep.subr.bf16.mxu0 0
        %2113 = vmatpush1.bf16.msra.mxu0 %v1960
        %2114 = vmatprep.subr.bf16.mxu0 0
        %2115 = vmatpush1.bf16.msra.mxu0 %v1961
        %2116 = vmatprep.subr.bf16.mxu0 0
        %2117 = vmatpush1.bf16.msra.mxu0 %v1962
        %2118 = vmatprep.subr.bf16.mxu0 0
        %2119 = vmatpush1.bf16.msra.mxu0 %v1963
        %2120 = vmatprep.subr.bf16.mxu0 0
        %2121 = vmatpush1.bf16.msra.mxu0 %v1964
        %2122 = vmatprep.subr.bf16.mxu0 0
        %2123 = vmatpush1.bf16.msra.mxu0 %v1965
        %2124 = vmatprep.subr.bf16.mxu0 0
        %2125 = vmatpush1.bf16.msra.mxu0 %v1966
        %2126 = vmatprep.subr.bf16.mxu0 0
        %2127 = vmatpush1.bf16.msra.mxu0 %v1967
        %2128 = vmatprep.mubr.bf16.mxu0 %v1377
        %2129 = vmatmul.mubr.bf16.gmra.mrb[0].mxu0 %v1376
        %v2130 = vpop.f32.mrb[0].mxu0
        %v2131 = vadd.f32 0.0, %v2130
        %v2132 = vpop.f32.mrb[0].mxu0
        %v2133 = vpop.f32.mrb[0].mxu0
        %v2134 = vadd.f32 0.0, %v2133
        %v2135 = vpop.f32.mrb[0].mxu0
        %2136 = vmatprep.mubr.bf16.mxu0 %v1386
        %2137 = vmatmul.mubr.bf16.gmra.mrb[0].mxu0 %v1385
        %v2138 = vpop.f32.mrb[0].mxu0
        %v2139 = vadd.f32 0.0, %v2138
        %v2140 = vpop.f32.mrb[0].mxu0
        %v2141 = vpop.f32.mrb[0].mxu0
        %v2142 = vadd.f32 0.0, %v2141
        %v2143 = vpop.f32.mrb[0].mxu0
        %2144 = vmatprep.mubr.bf16.mxu0 %v1395
        %2145 = vmatmul.mubr.bf16.gmra.mrb[0].mxu0 %v1394
        %v2146 = vpop.f32.mrb[0].mxu0
        %v2147 = vadd.f32 0.0, %v2146
        %v2148 = vpop.f32.mrb[0].mxu0
        %v2149 = vpop.f32.mrb[0].mxu0
        %v2150 = vadd.f32 0.0, %v2149
        %v2151 = vpop.f32.mrb[0].mxu0
        %2152 = vmatprep.mubr.bf16.mxu0 %v1404
        %2153 = vmatmul.mubr.bf16.gmra.mrb[0].mxu0 %v1403
        %v2154 = vpop.f32.mrb[0].mxu0
        %v2155 = vadd.f32 0.0, %v2154
        %v2156 = vpop.f32.mrb[0].mxu0
        %v2157 = vpop.f32.mrb[0].mxu0
        %v2158 = vadd.f32 0.0, %v2157
        %v2159 = vpop.f32.mrb[0].mxu0
        %2160 = vmatprep.mubr.bf16.mxu0 %v1413
        %2161 = vmatmul.mubr.bf16.gmra.mrb[0].mxu0 %v1412
        %v2162 = vpop.f32.mrb[0].mxu0
        %v2163 = vadd.f32 0.0, %v2162
        %v2164 = vpop.f32.mrb[0].mxu0
        %v2165 = vpop.f32.mrb[0].mxu0
        %v2166 = vadd.f32 0.0, %v2165
        %v2167 = vpop.f32.mrb[0].mxu0
        %2168 = vmatprep.mubr.bf16.mxu0 %v1422
        %2169 = vmatmul.mubr.bf16.gmra.mrb[0].mxu0 %v1421
        %v2170 = vpop.f32.mrb[0].mxu0
        %v2171 = vadd.f32 0.0, %v2170
        %v2172 = vpop.f32.mrb[0].mxu0
        %v2173 = vpop.f32.mrb[0].mxu0
        %v2174 = vadd.f32 0.0, %v2173
        %v2175 = vpop.f32.mrb[0].mxu0
        %2176 = vmatprep.mubr.bf16.mxu0 %v1431
        %2177 = vmatmul.mubr.bf16.gmra.mrb[0].mxu0 %v1430
        %v2178 = vpop.f32.mrb[0].mxu0
        %v2179 = vadd.f32 0.0, %v2178
        %v2180 = vpop.f32.mrb[0].mxu0
        %v2181 = vpop.f32.mrb[0].mxu0
        %v2182 = vadd.f32 0.0, %v2181
        %v2183 = vpop.f32.mrb[0].mxu0
        %2184 = vmatprep.mubr.bf16.mxu0 %v1440
        %2185 = vmatmul.mubr.bf16.gmra.mrb[0].mxu0 %v1439
        %v2186 = vpop.f32.mrb[0].mxu0
        %v2187 = vadd.f32 0.0, %v2186
        %v2188 = vpop.f32.mrb[0].mxu0
        %v2189 = vpop.f32.mrb[0].mxu0
        %v2190 = vadd.f32 0.0, %v2189
        %v2191 = vpop.f32.mrb[0].mxu0
        %2192 = vmatprep.mubr.bf16.mxu0 %v1449
        %2193 = vmatmul.mubr.bf16.gmra.mrb[0].mxu0 %v1448
        %v2194 = vpop.f32.mrb[0].mxu0
        %v2195 = vadd.f32 0.0, %v2194
        %v2196 = vpop.f32.mrb[0].mxu0
        %v2197 = vpop.f32.mrb[0].mxu0
        %v2198 = vadd.f32 0.0, %v2197
        %v2199 = vpop.f32.mrb[0].mxu0
        %2200 = vmatprep.mubr.bf16.mxu0 %v1458
        %2201 = vmatmul.mubr.bf16.gmra.mrb[0].mxu0 %v1457
        %v2202 = vpop.f32.mrb[0].mxu0
        %v2203 = vadd.f32 0.0, %v2202
        %v2204 = vpop.f32.mrb[0].mxu0
        %v2205 = vpop.f32.mrb[0].mxu0
        %v2206 = vadd.f32 0.0, %v2205
        %v2207 = vpop.f32.mrb[0].mxu0
        %2208 = vmatprep.mubr.bf16.mxu0 %v1467
        %2209 = vmatmul.mubr.bf16.gmra.mrb[0].mxu0 %v1466
        %v2210 = vpop.f32.mrb[0].mxu0
        %v2211 = vadd.f32 0.0, %v2210
        %v2212 = vpop.f32.mrb[0].mxu0
        %v2213 = vpop.f32.mrb[0].mxu0
        %v2214 = vadd.f32 0.0, %v2213
        %v2215 = vpop.f32.mrb[0].mxu0
        %2216 = vmatprep.mubr.bf16.mxu0 %v1476
        %2217 = vmatmul.mubr.bf16.gmra.mrb[0].mxu0 %v1475
        %v2218 = vpop.f32.mrb[0].mxu0
        %v2219 = vadd.f32 0.0, %v2218
        %v2220 = vpop.f32.mrb[0].mxu0
        %v2221 = vpop.f32.mrb[0].mxu0
        %v2222 = vadd.f32 0.0, %v2221
        %v2223 = vpop.f32.mrb[0].mxu0
        %2224 = vmatprep.mubr.bf16.mxu0 %v1485
        %2225 = vmatmul.mubr.bf16.gmra.mrb[0].mxu0 %v1484
        %v2226 = vpop.f32.mrb[0].mxu0
        %v2227 = vadd.f32 0.0, %v2226
        %v2228 = vpop.f32.mrb[0].mxu0
        %v2229 = vpop.f32.mrb[0].mxu0
        %v2230 = vadd.f32 0.0, %v2229
        %v2231 = vpop.f32.mrb[0].mxu0
        %2232 = vmatprep.mubr.bf16.mxu0 %v1494
        %2233 = vmatmul.mubr.bf16.gmra.mrb[0].mxu0 %v1493
        %v2234 = vpop.f32.mrb[0].mxu0
        %v2235 = vadd.f32 0.0, %v2234
        %v2236 = vpop.f32.mrb[0].mxu0
        %v2237 = vpop.f32.mrb[0].mxu0
        %v2238 = vadd.f32 0.0, %v2237
        %v2239 = vpop.f32.mrb[0].mxu0
        %2240 = vmatprep.mubr.bf16.mxu0 %v1503
        %2241 = vmatmul.mubr.bf16.gmra.mrb[0].mxu0 %v1502
        %v2242 = vpop.f32.mrb[0].mxu0
        %v2243 = vadd.f32 0.0, %v2242
        %v2244 = vpop.f32.mrb[0].mxu0
        %v2245 = vpop.f32.mrb[0].mxu0
        %v2246 = vadd.f32 0.0, %v2245
        %v2247 = vpop.f32.mrb[0].mxu0
        %2248 = vmatprep.mubr.bf16.mxu0 %v1512
        %2249 = vmatmul.mubr.bf16.gmra.mrb[0].mxu0 %v1511
        %v2250 = vpop.f32.mrb[0].mxu0
        %v2251 = vadd.f32 0.0, %v2250
        %v2252 = vpop.f32.mrb[0].mxu0
        %v2253 = vpop.f32.mrb[0].mxu0
        %v2254 = vadd.f32 0.0, %v2253
        %v2255 = vpop.f32.mrb[0].mxu0
        %2256 = vdwg.mxu0
        %2257 = vmatprep.subr.bf16.mxu0 0
        %2258 = vmatpush1.bf16.msra.mxu0 %v1968
        %2259 = vmatprep.subr.bf16.mxu0 0
        %2260 = vmatpush1.bf16.msra.mxu0 %v1969
        %2261 = vmatprep.subr.bf16.mxu0 0
        %2262 = vmatpush1.bf16.msra.mxu0 %v1970
        %2263 = vmatprep.subr.bf16.mxu0 0
        %2264 = vmatpush1.bf16.msra.mxu0 %v1971
        %2265 = vmatprep.subr.bf16.mxu0 0
        %2266 = vmatpush1.bf16.msra.mxu0 %v1972
        %2267 = vmatprep.subr.bf16.mxu0 0
        %2268 = vmatpush1.bf16.msra.mxu0 %v1973
        %2269 = vmatprep.subr.bf16.mxu0 0
        %2270 = vmatpush1.bf16.msra.mxu0 %v1974
        %2271 = vmatprep.subr.bf16.mxu0 0
        %2272 = vmatpush1.bf16.msra.mxu0 %v1975
        %2273 = vmatprep.subr.bf16.mxu0 0
        %2274 = vmatpush1.bf16.msra.mxu0 %v1976
        %2275 = vmatprep.subr.bf16.mxu0 0
        %2276 = vmatpush1.bf16.msra.mxu0 %v1977
        %2277 = vmatprep.subr.bf16.mxu0 0
        %2278 = vmatpush1.bf16.msra.mxu0 %v1978
        %2279 = vmatprep.subr.bf16.mxu0 0
        %2280 = vmatpush1.bf16.msra.mxu0 %v1979
        %2281 = vmatprep.subr.bf16.mxu0 0
        %2282 = vmatpush1.bf16.msra.mxu0 %v1980
        %2283 = vmatprep.subr.bf16.mxu0 0
        %2284 = vmatpush1.bf16.msra.mxu0 %v1981
        %2285 = vmatprep.subr.bf16.mxu0 0
        %2286 = vmatpush1.bf16.msra.mxu0 %v1982
        %2287 = vmatprep.subr.bf16.mxu0 0
        %2288 = vmatpush1.bf16.msra.mxu0 %v1983
        %2289 = vmatprep.mubr.bf16.mxu0 %v1379
        %2290 = vmatmul.mubr.bf16.gmra.mrb[0].mxu0 %v1378
        %v2291 = vpop.f32.mrb[0].mxu0
        %v2292 = vadd.f32 %v2131, %v2291
        %v2293 = vpop.f32.mrb[0].mxu0
        %v2294 = vpop.f32.mrb[0].mxu0
        %v2295 = vadd.f32 %v2134, %v2294
        %v2296 = vpop.f32.mrb[0].mxu0
        %2297 = vmatprep.mubr.bf16.mxu0 %v1388
        %2298 = vmatmul.mubr.bf16.gmra.mrb[0].mxu0 %v1387
        %v2299 = vpop.f32.mrb[0].mxu0
        %v2300 = vadd.f32 %v2139, %v2299
        %v2301 = vpop.f32.mrb[0].mxu0
        %v2302 = vpop.f32.mrb[0].mxu0
        %v2303 = vadd.f32 %v2142, %v2302
        %v2304 = vpop.f32.mrb[0].mxu0
        %2305 = vmatprep.mubr.bf16.mxu0 %v1397
        %2306 = vmatmul.mubr.bf16.gmra.mrb[0].mxu0 %v1396
        %v2307 = vpop.f32.mrb[0].mxu0
        %v2308 = vadd.f32 %v2147, %v2307
        %v2309 = vpop.f32.mrb[0].mxu0
        %v2310 = vpop.f32.mrb[0].mxu0
        %v2311 = vadd.f32 %v2150, %v2310
        %v2312 = vpop.f32.mrb[0].mxu0
        %2313 = vmatprep.mubr.bf16.mxu0 %v1406
        %2314 = vmatmul.mubr.bf16.gmra.mrb[0].mxu0 %v1405
        %v2315 = vpop.f32.mrb[0].mxu0
        %v2316 = vadd.f32 %v2155, %v2315
        %v2317 = vpop.f32.mrb[0].mxu0
        %v2318 = vpop.f32.mrb[0].mxu0
        %v2319 = vadd.f32 %v2158, %v2318
        %v2320 = vpop.f32.mrb[0].mxu0
        %2321 = vmatprep.mubr.bf16.mxu0 %v1415
        %2322 = vmatmul.mubr.bf16.gmra.mrb[0].mxu0 %v1414
        %v2323 = vpop.f32.mrb[0].mxu0
        %v2324 = vadd.f32 %v2163, %v2323
        %v2325 = vpop.f32.mrb[0].mxu0
        %v2326 = vpop.f32.mrb[0].mxu0
        %v2327 = vadd.f32 %v2166, %v2326
        %v2328 = vpop.f32.mrb[0].mxu0
        %2329 = vmatprep.mubr.bf16.mxu0 %v1424
        %2330 = vmatmul.mubr.bf16.gmra.mrb[0].mxu0 %v1423
        %v2331 = vpop.f32.mrb[0].mxu0
        %v2332 = vadd.f32 %v2171, %v2331
        %v2333 = vpop.f32.mrb[0].mxu0
        %v2334 = vpop.f32.mrb[0].mxu0
        %v2335 = vadd.f32 %v2174, %v2334
        %v2336 = vpop.f32.mrb[0].mxu0
        %2337 = vmatprep.mubr.bf16.mxu0 %v1433
        %2338 = vmatmul.mubr.bf16.gmra.mrb[0].mxu0 %v1432
        %v2339 = vpop.f32.mrb[0].mxu0
        %v2340 = vadd.f32 %v2179, %v2339
        %v2341 = vpop.f32.mrb[0].mxu0
        %v2342 = vpop.f32.mrb[0].mxu0
        %v2343 = vadd.f32 %v2182, %v2342
        %v2344 = vpop.f32.mrb[0].mxu0
        %2345 = vmatprep.mubr.bf16.mxu0 %v1442
        %2346 = vmatmul.mubr.bf16.gmra.mrb[0].mxu0 %v1441
        %v2347 = vpop.f32.mrb[0].mxu0
        %v2348 = vadd.f32 %v2187, %v2347
        %v2349 = vpop.f32.mrb[0].mxu0
        %v2350 = vpop.f32.mrb[0].mxu0
        %v2351 = vadd.f32 %v2190, %v2350
        %v2352 = vpop.f32.mrb[0].mxu0
        %2353 = vmatprep.mubr.bf16.mxu0 %v1451
        %2354 = vmatmul.mubr.bf16.gmra.mrb[0].mxu0 %v1450
        %v2355 = vpop.f32.mrb[0].mxu0
        %v2356 = vadd.f32 %v2195, %v2355
        %v2357 = vpop.f32.mrb[0].mxu0
        %v2358 = vpop.f32.mrb[0].mxu0
        %v2359 = vadd.f32 %v2198, %v2358
        %v2360 = vpop.f32.mrb[0].mxu0
        %2361 = vmatprep.mubr.bf16.mxu0 %v1460
        %2362 = vmatmul.mubr.bf16.gmra.mrb[0].mxu0 %v1459
        %v2363 = vpop.f32.mrb[0].mxu0
        %v2364 = vadd.f32 %v2203, %v2363
        %v2365 = vpop.f32.mrb[0].mxu0
        %v2366 = vpop.f32.mrb[0].mxu0
        %v2367 = vadd.f32 %v2206, %v2366
        %v2368 = vpop.f32.mrb[0].mxu0
        %2369 = vmatprep.mubr.bf16.mxu0 %v1469
        %2370 = vmatmul.mubr.bf16.gmra.mrb[0].mxu0 %v1468
        %v2371 = vpop.f32.mrb[0].mxu0
        %v2372 = vadd.f32 %v2211, %v2371
        %v2373 = vpop.f32.mrb[0].mxu0
        %v2374 = vpop.f32.mrb[0].mxu0
        %v2375 = vadd.f32 %v2214, %v2374
        %v2376 = vpop.f32.mrb[0].mxu0
        %2377 = vmatprep.mubr.bf16.mxu0 %v1478
        %2378 = vmatmul.mubr.bf16.gmra.mrb[0].mxu0 %v1477
        %v2379 = vpop.f32.mrb[0].mxu0
        %v2380 = vadd.f32 %v2219, %v2379
        %v2381 = vpop.f32.mrb[0].mxu0
        %v2382 = vpop.f32.mrb[0].mxu0
        %v2383 = vadd.f32 %v2222, %v2382
        %v2384 = vpop.f32.mrb[0].mxu0
        %2385 = vmatprep.mubr.bf16.mxu0 %v1487
        %2386 = vmatmul.mubr.bf16.gmra.mrb[0].mxu0 %v1486
        %v2387 = vpop.f32.mrb[0].mxu0
        %v2388 = vadd.f32 %v2227, %v2387
        %v2389 = vpop.f32.mrb[0].mxu0
        %v2390 = vpop.f32.mrb[0].mxu0
        %v2391 = vadd.f32 %v2230, %v2390
        %v2392 = vpop.f32.mrb[0].mxu0
        %2393 = vmatprep.mubr.bf16.mxu0 %v1496
        %2394 = vmatmul.mubr.bf16.gmra.mrb[0].mxu0 %v1495
        %v2395 = vpop.f32.mrb[0].mxu0
        %v2396 = vadd.f32 %v2235, %v2395
        %v2397 = vpop.f32.mrb[0].mxu0
        %v2398 = vpop.f32.mrb[0].mxu0
        %v2399 = vadd.f32 %v2238, %v2398
        %v2400 = vpop.f32.mrb[0].mxu0
        %2401 = vmatprep.mubr.bf16.mxu0 %v1505
        %2402 = vmatmul.mubr.bf16.gmra.mrb[0].mxu0 %v1504
        %v2403 = vpop.f32.mrb[0].mxu0
        %v2404 = vadd.f32 %v2243, %v2403
        %v2405 = vpop.f32.mrb[0].mxu0
        %v2406 = vpop.f32.mrb[0].mxu0
        %v2407 = vadd.f32 %v2246, %v2406
        %v2408 = vpop.f32.mrb[0].mxu0
        %2409 = vmatprep.mubr.bf16.mxu0 %v1514
        %2410 = vmatmul.mubr.bf16.gmra.mrb[0].mxu0 %v1513
        %v2411 = vpop.f32.mrb[0].mxu0
        %v2412 = vadd.f32 %v2251, %v2411
        %v2413 = vpop.f32.mrb[0].mxu0
        %v2414 = vpop.f32.mrb[0].mxu0
        %v2415 = vadd.f32 %v2254, %v2414
        %v2416 = vpop.f32.mrb[0].mxu0
        %2417 = vdwg.mxu0
        %2418 = vmatprep.subr.bf16.mxu0 0
        %2419 = vmatpush1.bf16.msra.mxu0 %v1984
        %2420 = vmatprep.subr.bf16.mxu0 0
        %2421 = vmatpush1.bf16.msra.mxu0 %v1985
        %2422 = vmatprep.subr.bf16.mxu0 0
        %2423 = vmatpush1.bf16.msra.mxu0 %v1986
        %2424 = vmatprep.subr.bf16.mxu0 0
        %2425 = vmatpush1.bf16.msra.mxu0 %v1987
        %2426 = vmatprep.subr.bf16.mxu0 0
        %2427 = vmatpush1.bf16.msra.mxu0 %v1988
        %2428 = vmatprep.subr.bf16.mxu0 0
        %2429 = vmatpush1.bf16.msra.mxu0 %v1989
        %2430 = vmatprep.subr.bf16.mxu0 0
        %2431 = vmatpush1.bf16.msra.mxu0 %v1990
        %2432 = vmatprep.subr.bf16.mxu0 0
        %2433 = vmatpush1.bf16.msra.mxu0 %v1991
        %2434 = vmatprep.subr.bf16.mxu0 0
        %2435 = vmatpush1.bf16.msra.mxu0 %v1992
        %2436 = vmatprep.subr.bf16.mxu0 0
        %2437 = vmatpush1.bf16.msra.mxu0 %v1993
        %2438 = vmatprep.subr.bf16.mxu0 0
        %2439 = vmatpush1.bf16.msra.mxu0 %v1994
        %2440 = vmatprep.subr.bf16.mxu0 0
        %2441 = vmatpush1.bf16.msra.mxu0 %v1995
        %2442 = vmatprep.subr.bf16.mxu0 0
        %2443 = vmatpush1.bf16.msra.mxu0 %v1996
        %2444 = vmatprep.subr.bf16.mxu0 0
        %2445 = vmatpush1.bf16.msra.mxu0 %v1997
        %2446 = vmatprep.subr.bf16.mxu0 0
        %2447 = vmatpush1.bf16.msra.mxu0 %v1998
        %2448 = vmatprep.subr.bf16.mxu0 0
        %2449 = vmatpush1.bf16.msra.mxu0 %v1999
        %2450 = vmatprep.mubr.bf16.mxu0 %v1381
        %2451 = vmatmul.mubr.bf16.gmra.mrb[0].mxu0 %v1380
        %v2452 = vpop.f32.mrb[0].mxu0
        %v2453 = vadd.f32 %v2292, %v2452
        %v2454 = vpop.f32.mrb[0].mxu0
        %v2455 = vpop.f32.mrb[0].mxu0
        %v2456 = vadd.f32 %v2295, %v2455
        %v2457 = vpop.f32.mrb[0].mxu0
        %2458 = vmatprep.mubr.bf16.mxu0 %v1390
        %2459 = vmatmul.mubr.bf16.gmra.mrb[0].mxu0 %v1389
        %v2460 = vpop.f32.mrb[0].mxu0
        %v2461 = vadd.f32 %v2300, %v2460
        %v2462 = vpop.f32.mrb[0].mxu0
        %v2463 = vpop.f32.mrb[0].mxu0
        %v2464 = vadd.f32 %v2303, %v2463
        %v2465 = vpop.f32.mrb[0].mxu0
        %2466 = vmatprep.mubr.bf16.mxu0 %v1399
        %2467 = vmatmul.mubr.bf16.gmra.mrb[0].mxu0 %v1398
        %v2468 = vpop.f32.mrb[0].mxu0
        %v2469 = vadd.f32 %v2308, %v2468
        %v2470 = vpop.f32.mrb[0].mxu0
        %v2471 = vpop.f32.mrb[0].mxu0
        %v2472 = vadd.f32 %v2311, %v2471
        %v2473 = vpop.f32.mrb[0].mxu0
        %2474 = vmatprep.mubr.bf16.mxu0 %v1408
        %2475 = vmatmul.mubr.bf16.gmra.mrb[0].mxu0 %v1407
        %v2476 = vpop.f32.mrb[0].mxu0
        %v2477 = vadd.f32 %v2316, %v2476
        %v2478 = vpop.f32.mrb[0].mxu0
        %v2479 = vpop.f32.mrb[0].mxu0
        %v2480 = vadd.f32 %v2319, %v2479
        %v2481 = vpop.f32.mrb[0].mxu0
        %2482 = vmatprep.mubr.bf16.mxu0 %v1417
        %2483 = vmatmul.mubr.bf16.gmra.mrb[0].mxu0 %v1416
        %v2484 = vpop.f32.mrb[0].mxu0
        %v2485 = vadd.f32 %v2324, %v2484
        %v2486 = vpop.f32.mrb[0].mxu0
        %v2487 = vpop.f32.mrb[0].mxu0
        %v2488 = vadd.f32 %v2327, %v2487
        %v2489 = vpop.f32.mrb[0].mxu0
        %2490 = vmatprep.mubr.bf16.mxu0 %v1426
        %2491 = vmatmul.mubr.bf16.gmra.mrb[0].mxu0 %v1425
        %v2492 = vpop.f32.mrb[0].mxu0
        %v2493 = vadd.f32 %v2332, %v2492
        %v2494 = vpop.f32.mrb[0].mxu0
        %v2495 = vpop.f32.mrb[0].mxu0
        %v2496 = vadd.f32 %v2335, %v2495
        %v2497 = vpop.f32.mrb[0].mxu0
        %2498 = vmatprep.mubr.bf16.mxu0 %v1435
        %2499 = vmatmul.mubr.bf16.gmra.mrb[0].mxu0 %v1434
        %v2500 = vpop.f32.mrb[0].mxu0
        %v2501 = vadd.f32 %v2340, %v2500
        %v2502 = vpop.f32.mrb[0].mxu0
        %v2503 = vpop.f32.mrb[0].mxu0
        %v2504 = vadd.f32 %v2343, %v2503
        %v2505 = vpop.f32.mrb[0].mxu0
        %2506 = vmatprep.mubr.bf16.mxu0 %v1444
        %2507 = vmatmul.mubr.bf16.gmra.mrb[0].mxu0 %v1443
        %v2508 = vpop.f32.mrb[0].mxu0
        %v2509 = vadd.f32 %v2348, %v2508
        %v2510 = vpop.f32.mrb[0].mxu0
        %v2511 = vpop.f32.mrb[0].mxu0
        %v2512 = vadd.f32 %v2351, %v2511
        %v2513 = vpop.f32.mrb[0].mxu0
        %2514 = vmatprep.mubr.bf16.mxu0 %v1453
        %2515 = vmatmul.mubr.bf16.gmra.mrb[0].mxu0 %v1452
        %v2516 = vpop.f32.mrb[0].mxu0
        %v2517 = vadd.f32 %v2356, %v2516
        %v2518 = vpop.f32.mrb[0].mxu0
        %v2519 = vpop.f32.mrb[0].mxu0
        %v2520 = vadd.f32 %v2359, %v2519
        %v2521 = vpop.f32.mrb[0].mxu0
        %2522 = vmatprep.mubr.bf16.mxu0 %v1462
        %2523 = vmatmul.mubr.bf16.gmra.mrb[0].mxu0 %v1461
        %v2524 = vpop.f32.mrb[0].mxu0
        %v2525 = vadd.f32 %v2364, %v2524
        %v2526 = vpop.f32.mrb[0].mxu0
        %v2527 = vpop.f32.mrb[0].mxu0
        %v2528 = vadd.f32 %v2367, %v2527
        %v2529 = vpop.f32.mrb[0].mxu0
        %2530 = vmatprep.mubr.bf16.mxu0 %v1471
        %2531 = vmatmul.mubr.bf16.gmra.mrb[0].mxu0 %v1470
        %v2532 = vpop.f32.mrb[0].mxu0
        %v2533 = vadd.f32 %v2372, %v2532
        %v2534 = vpop.f32.mrb[0].mxu0
        %v2535 = vpop.f32.mrb[0].mxu0
        %v2536 = vadd.f32 %v2375, %v2535
        %v2537 = vpop.f32.mrb[0].mxu0
        %2538 = vmatprep.mubr.bf16.mxu0 %v1480
        %2539 = vmatmul.mubr.bf16.gmra.mrb[0].mxu0 %v1479
        %v2540 = vpop.f32.mrb[0].mxu0
        %v2541 = vadd.f32 %v2380, %v2540
        %v2542 = vpop.f32.mrb[0].mxu0
        %v2543 = vpop.f32.mrb[0].mxu0
        %v2544 = vadd.f32 %v2383, %v2543
        %v2545 = vpop.f32.mrb[0].mxu0
        %2546 = vmatprep.mubr.bf16.mxu0 %v1489
        %2547 = vmatmul.mubr.bf16.gmra.mrb[0].mxu0 %v1488
        %v2548 = vpop.f32.mrb[0].mxu0
        %v2549 = vadd.f32 %v2388, %v2548
        %v2550 = vpop.f32.mrb[0].mxu0
        %v2551 = vpop.f32.mrb[0].mxu0
        %v2552 = vadd.f32 %v2391, %v2551
        %v2553 = vpop.f32.mrb[0].mxu0
        %2554 = vmatprep.mubr.bf16.mxu0 %v1498
        %2555 = vmatmul.mubr.bf16.gmra.mrb[0].mxu0 %v1497
        %v2556 = vpop.f32.mrb[0].mxu0
        %v2557 = vadd.f32 %v2396, %v2556
        %v2558 = vpop.f32.mrb[0].mxu0
        %v2559 = vpop.f32.mrb[0].mxu0
        %v2560 = vadd.f32 %v2399, %v2559
        %v2561 = vpop.f32.mrb[0].mxu0
        %2562 = vmatprep.mubr.bf16.mxu0 %v1507
        %2563 = vmatmul.mubr.bf16.gmra.mrb[0].mxu0 %v1506
        %v2564 = vpop.f32.mrb[0].mxu0
        %v2565 = vadd.f32 %v2404, %v2564
        %v2566 = vpop.f32.mrb[0].mxu0
        %v2567 = vpop.f32.mrb[0].mxu0
        %v2568 = vadd.f32 %v2407, %v2567
        %v2569 = vpop.f32.mrb[0].mxu0
        %2570 = vmatprep.mubr.bf16.mxu0 %v1516
        %2571 = vmatmul.mubr.bf16.gmra.mrb[0].mxu0 %v1515
        %v2572 = vpop.f32.mrb[0].mxu0
        %v2573 = vadd.f32 %v2412, %v2572
        %v2574 = vpop.f32.mrb[0].mxu0
        %v2575 = vpop.f32.mrb[0].mxu0
        %v2576 = vadd.f32 %v2415, %v2575
        %v2577 = vpop.f32.mrb[0].mxu0
        %2578 = vdwg.mxu0
        %2579 = vmatprep.subr.bf16.mxu0 0
        %2580 = vmatpush1.bf16.msra.mxu0 %v2000
        %2581 = vmatprep.subr.bf16.mxu0 0
        %2582 = vmatpush1.bf16.msra.mxu0 %v2001
        %2583 = vmatprep.subr.bf16.mxu0 0
        %2584 = vmatpush1.bf16.msra.mxu0 %v2002
        %2585 = vmatprep.subr.bf16.mxu0 0
        %2586 = vmatpush1.bf16.msra.mxu0 %v2003
        %2587 = vmatprep.subr.bf16.mxu0 0
        %2588 = vmatpush1.bf16.msra.mxu0 %v2004
        %2589 = vmatprep.subr.bf16.mxu0 0
        %2590 = vmatpush1.bf16.msra.mxu0 %v2005
        %2591 = vmatprep.subr.bf16.mxu0 0
        %2592 = vmatpush1.bf16.msra.mxu0 %v2006
        %2593 = vmatprep.subr.bf16.mxu0 0
        %2594 = vmatpush1.bf16.msra.mxu0 %v2007
        %2595 = vmatprep.subr.bf16.mxu0 0
        %2596 = vmatpush1.bf16.msra.mxu0 %v2008
        %2597 = vmatprep.subr.bf16.mxu0 0
        %2598 = vmatpush1.bf16.msra.mxu0 %v2009
        %2599 = vmatprep.subr.bf16.mxu0 0
        %2600 = vmatpush1.bf16.msra.mxu0 %v2010
        %2601 = vmatprep.subr.bf16.mxu0 0
        %2602 = vmatpush1.bf16.msra.mxu0 %v2011
        %2603 = vmatprep.subr.bf16.mxu0 0
        %2604 = vmatpush1.bf16.msra.mxu0 %v2012
        %2605 = vmatprep.subr.bf16.mxu0 0
        %2606 = vmatpush1.bf16.msra.mxu0 %v2013
        %2607 = vmatprep.subr.bf16.mxu0 0
        %2608 = vmatpush1.bf16.msra.mxu0 %v2014
        %2609 = vmatprep.subr.bf16.mxu0 0
        %2610 = vmatpush1.bf16.msra.mxu0 %v2015
        %2611 = vmatprep.mubr.bf16.mxu0 %v1383
        %2612 = vmatmul.mubr.bf16.gmra.mrb[0].mxu0 %v1382
        %v2613 = vpop.f32.mrb[0].mxu0
        %v2614 = vadd.f32 %v2453, %v2613
        %v2615 = vpop.f32.mrb[0].mxu0
        %v2616 = vpop.f32.mrb[0].mxu0
        %v2617 = vadd.f32 %v2456, %v2616
        %v2618 = vpop.f32.mrb[0].mxu0
        %2619 = vmatprep.mubr.bf16.mxu0 %v1392
        %2620 = vmatmul.mubr.bf16.gmra.mrb[0].mxu0 %v1391
        %v2621 = vpop.f32.mrb[0].mxu0
        %v2622 = vadd.f32 %v2461, %v2621
        %v2623 = vpop.f32.mrb[0].mxu0
        %v2624 = vpop.f32.mrb[0].mxu0
        %v2625 = vadd.f32 %v2464, %v2624
        %v2626 = vpop.f32.mrb[0].mxu0
        %2627 = vmatprep.mubr.bf16.mxu0 %v1401
        %2628 = vmatmul.mubr.bf16.gmra.mrb[0].mxu0 %v1400
        %v2629 = vpop.f32.mrb[0].mxu0
        %v2630 = vadd.f32 %v2469, %v2629
        %v2631 = vpop.f32.mrb[0].mxu0
        %v2632 = vpop.f32.mrb[0].mxu0
        %v2633 = vadd.f32 %v2472, %v2632
        %v2634 = vpop.f32.mrb[0].mxu0
        %2635 = vmatprep.mubr.bf16.mxu0 %v1410
        %2636 = vmatmul.mubr.bf16.gmra.mrb[0].mxu0 %v1409
        %v2637 = vpop.f32.mrb[0].mxu0
        %v2638 = vadd.f32 %v2477, %v2637
        %v2639 = vpop.f32.mrb[0].mxu0
        %v2640 = vpop.f32.mrb[0].mxu0
        %v2641 = vadd.f32 %v2480, %v2640
        %v2642 = vpop.f32.mrb[0].mxu0
        %2643 = vmatprep.mubr.bf16.mxu0 %v1419
        %2644 = vmatmul.mubr.bf16.gmra.mrb[0].mxu0 %v1418
        %v2645 = vpop.f32.mrb[0].mxu0
        %v2646 = vadd.f32 %v2485, %v2645
        %v2647 = vpop.f32.mrb[0].mxu0
        %v2648 = vpop.f32.mrb[0].mxu0
        %v2649 = vadd.f32 %v2488, %v2648
        %v2650 = vpop.f32.mrb[0].mxu0
        %2651 = vmatprep.mubr.bf16.mxu0 %v1428
        %2652 = vmatmul.mubr.bf16.gmra.mrb[0].mxu0 %v1427
        %v2653 = vpop.f32.mrb[0].mxu0
        %v2654 = vadd.f32 %v2493, %v2653
        %v2655 = vpop.f32.mrb[0].mxu0
        %v2656 = vpop.f32.mrb[0].mxu0
        %v2657 = vadd.f32 %v2496, %v2656
        %v2658 = vpop.f32.mrb[0].mxu0
        %2659 = vmatprep.mubr.bf16.mxu0 %v1437
        %2660 = vmatmul.mubr.bf16.gmra.mrb[0].mxu0 %v1436
        %v2661 = vpop.f32.mrb[0].mxu0
        %v2662 = vadd.f32 %v2501, %v2661
        %v2663 = vpop.f32.mrb[0].mxu0
        %v2664 = vpop.f32.mrb[0].mxu0
        %v2665 = vadd.f32 %v2504, %v2664
        %v2666 = vpop.f32.mrb[0].mxu0
        %2667 = vmatprep.mubr.bf16.mxu0 %v1446
        %2668 = vmatmul.mubr.bf16.gmra.mrb[0].mxu0 %v1445
        %v2669 = vpop.f32.mrb[0].mxu0
        %v2670 = vadd.f32 %v2509, %v2669
        %v2671 = vpop.f32.mrb[0].mxu0
        %v2672 = vpop.f32.mrb[0].mxu0
        %v2673 = vadd.f32 %v2512, %v2672
        %v2674 = vpop.f32.mrb[0].mxu0
        %2675 = vmatprep.mubr.bf16.mxu0 %v1455
        %2676 = vmatmul.mubr.bf16.gmra.mrb[0].mxu0 %v1454
        %v2677 = vpop.f32.mrb[0].mxu0
        %v2678 = vadd.f32 %v2517, %v2677
        %v2679 = vpop.f32.mrb[0].mxu0
        %v2680 = vpop.f32.mrb[0].mxu0
        %v2681 = vadd.f32 %v2520, %v2680
        %v2682 = vpop.f32.mrb[0].mxu0
        %2683 = vmatprep.mubr.bf16.mxu0 %v1464
        %2684 = vmatmul.mubr.bf16.gmra.mrb[0].mxu0 %v1463
        %v2685 = vpop.f32.mrb[0].mxu0
        %v2686 = vadd.f32 %v2525, %v2685
        %v2687 = vpop.f32.mrb[0].mxu0
        %v2688 = vpop.f32.mrb[0].mxu0
        %v2689 = vadd.f32 %v2528, %v2688
        %v2690 = vpop.f32.mrb[0].mxu0
        %2691 = vmatprep.mubr.bf16.mxu0 %v1473
        %2692 = vmatmul.mubr.bf16.gmra.mrb[0].mxu0 %v1472
        %v2693 = vpop.f32.mrb[0].mxu0
        %v2694 = vadd.f32 %v2533, %v2693
        %v2695 = vpop.f32.mrb[0].mxu0
        %v2696 = vpop.f32.mrb[0].mxu0
        %v2697 = vadd.f32 %v2536, %v2696
        %v2698 = vpop.f32.mrb[0].mxu0
        %2699 = vmatprep.mubr.bf16.mxu0 %v1482
        %2700 = vmatmul.mubr.bf16.gmra.mrb[0].mxu0 %v1481
        %v2701 = vpop.f32.mrb[0].mxu0
        %v2702 = vadd.f32 %v2541, %v2701
        %v2703 = vpop.f32.mrb[0].mxu0
        %v2704 = vpop.f32.mrb[0].mxu0
        %v2705 = vadd.f32 %v2544, %v2704
        %v2706 = vpop.f32.mrb[0].mxu0
        %2707 = vmatprep.mubr.bf16.mxu0 %v1491
        %2708 = vmatmul.mubr.bf16.gmra.mrb[0].mxu0 %v1490
        %v2709 = vpop.f32.mrb[0].mxu0
        %v2710 = vadd.f32 %v2549, %v2709
        %v2711 = vpop.f32.mrb[0].mxu0
        %v2712 = vpop.f32.mrb[0].mxu0
        %v2713 = vadd.f32 %v2552, %v2712
        %v2714 = vpop.f32.mrb[0].mxu0
        %2715 = vmatprep.mubr.bf16.mxu0 %v1500
        %2716 = vmatmul.mubr.bf16.gmra.mrb[0].mxu0 %v1499
        %v2717 = vpop.f32.mrb[0].mxu0
        %v2718 = vadd.f32 %v2557, %v2717
        %v2719 = vpop.f32.mrb[0].mxu0
        %v2720 = vpop.f32.mrb[0].mxu0
        %v2721 = vadd.f32 %v2560, %v2720
        %v2722 = vpop.f32.mrb[0].mxu0
        %2723 = vmatprep.mubr.bf16.mxu0 %v1509
        %2724 = vmatmul.mubr.bf16.gmra.mrb[0].mxu0 %v1508
        %v2725 = vpop.f32.mrb[0].mxu0
        %v2726 = vadd.f32 %v2565, %v2725
        %v2727 = vpop.f32.mrb[0].mxu0
        %v2728 = vpop.f32.mrb[0].mxu0
        %v2729 = vadd.f32 %v2568, %v2728
        %v2730 = vpop.f32.mrb[0].mxu0
        %2731 = vmatprep.mubr.bf16.mxu0 %v1518
        %2732 = vmatmul.mubr.bf16.gmra.mrb[0].mxu0 %v1517
        %v2733 = vpop.f32.mrb[0].mxu0
        %v2734 = vadd.f32 %v2573, %v2733
        %v2735 = vpop.f32.mrb[0].mxu0
        %v2736 = vpop.f32.mrb[0].mxu0
        %v2737 = vadd.f32 %v2576, %v2736
        %v2738 = vpop.f32.mrb[0].mxu0
        %2739 = vdwg.mxu0
        %2740 = vmatprep.subr.bf16.mxu0 0
        %2741 = vmatpush1.bf16.msra.mxu0 %v2016
        %2742 = vmatprep.subr.bf16.mxu0 0
        %2743 = vmatpush1.bf16.msra.mxu0 %v2017
        %2744 = vmatprep.subr.bf16.mxu0 0
        %2745 = vmatpush1.bf16.msra.mxu0 %v2018
        %2746 = vmatprep.subr.bf16.mxu0 0
        %2747 = vmatpush1.bf16.msra.mxu0 %v2019
        %2748 = vmatprep.subr.bf16.mxu0 0
        %2749 = vmatpush1.bf16.msra.mxu0 %v2020
        %2750 = vmatprep.subr.bf16.mxu0 0
        %2751 = vmatpush1.bf16.msra.mxu0 %v2021
        %2752 = vmatprep.subr.bf16.mxu0 0
        %2753 = vmatpush1.bf16.msra.mxu0 %v2022
        %2754 = vmatprep.subr.bf16.mxu0 0
        %2755 = vmatpush1.bf16.msra.mxu0 %v2023
        %2756 = vmatprep.subr.bf16.mxu0 0
        %2757 = vmatpush1.bf16.msra.mxu0 0
        %2758 = vmatprep.subr.bf16.mxu0 0
        %2759 = vmatpush1.bf16.msra.mxu0 0
        %2760 = vmatprep.subr.bf16.mxu0 0
        %2761 = vmatpush1.bf16.msra.mxu0 0
        %2762 = vmatprep.subr.bf16.mxu0 0
        %2763 = vmatpush1.bf16.msra.mxu0 0
        %2764 = vmatprep.subr.bf16.mxu0 0
        %2765 = vmatpush1.bf16.msra.mxu0 0
        %2766 = vmatprep.subr.bf16.mxu0 0
        %2767 = vmatpush1.bf16.msra.mxu0 0
        %2768 = vmatprep.subr.bf16.mxu0 0
        %2769 = vmatpush1.bf16.msra.mxu0 0
        %2770 = vmatprep.subr.bf16.mxu0 0
        %2771 = vmatpush1.bf16.msra.mxu0 0
        %2772 = vmatprep.mubr.bf16.mxu0 0
        %2773 = vmatmul.mubr.bf16.gmra.mrb[0].mxu0 %v1384
        %v2774 = vpop.f32.mrb[0].mxu0
        %v2775 = vadd.f32 %v2614, %v2774
        %v2776 = vpop.f32.mrb[0].mxu0
        %v2777 = vpop.f32.mrb[0].mxu0
        %v2778 = vadd.f32 %v2617, %v2777
        %v2779 = vpop.f32.mrb[0].mxu0
        %2780 = vmatprep.mubr.bf16.mxu0 0
        %2781 = vmatmul.mubr.bf16.gmra.mrb[0].mxu0 %v1393
        %v2782 = vpop.f32.mrb[0].mxu0
        %v2783 = vadd.f32 %v2622, %v2782
        %v2784 = vpop.f32.mrb[0].mxu0
        %v2785 = vpop.f32.mrb[0].mxu0
        %v2786 = vadd.f32 %v2625, %v2785
        %v2787 = vpop.f32.mrb[0].mxu0
        %2788 = vmatprep.mubr.bf16.mxu0 0
        %2789 = vmatmul.mubr.bf16.gmra.mrb[0].mxu0 %v1402
        %v2790 = vpop.f32.mrb[0].mxu0
        %v2791 = vadd.f32 %v2630, %v2790
        %v2792 = vpop.f32.mrb[0].mxu0
        %v2793 = vpop.f32.mrb[0].mxu0
        %v2794 = vadd.f32 %v2633, %v2793
        %v2795 = vpop.f32.mrb[0].mxu0
        %2796 = vmatprep.mubr.bf16.mxu0 0
        %2797 = vmatmul.mubr.bf16.gmra.mrb[0].mxu0 %v1411
        %v2798 = vpop.f32.mrb[0].mxu0
        %v2799 = vadd.f32 %v2638, %v2798
        %v2800 = vpop.f32.mrb[0].mxu0
        %v2801 = vpop.f32.mrb[0].mxu0
        %v2802 = vadd.f32 %v2641, %v2801
        %v2803 = vpop.f32.mrb[0].mxu0
        %2804 = vmatprep.mubr.bf16.mxu0 0
        %2805 = vmatmul.mubr.bf16.gmra.mrb[0].mxu0 %v1420
        %v2806 = vpop.f32.mrb[0].mxu0
        %v2807 = vadd.f32 %v2646, %v2806
        %v2808 = vpop.f32.mrb[0].mxu0
        %v2809 = vpop.f32.mrb[0].mxu0
        %v2810 = vadd.f32 %v2649, %v2809
        %v2811 = vpop.f32.mrb[0].mxu0
        %2812 = vmatprep.mubr.bf16.mxu0 0
        %2813 = vmatmul.mubr.bf16.gmra.mrb[0].mxu0 %v1429
        %v2814 = vpop.f32.mrb[0].mxu0
        %v2815 = vadd.f32 %v2654, %v2814
        %v2816 = vpop.f32.mrb[0].mxu0
        %v2817 = vpop.f32.mrb[0].mxu0
        %v2818 = vadd.f32 %v2657, %v2817
        %v2819 = vpop.f32.mrb[0].mxu0
        %2820 = vmatprep.mubr.bf16.mxu0 0
        %2821 = vmatmul.mubr.bf16.gmra.mrb[0].mxu0 %v1438
        %v2822 = vpop.f32.mrb[0].mxu0
        %v2823 = vadd.f32 %v2662, %v2822
        %v2824 = vpop.f32.mrb[0].mxu0
        %v2825 = vpop.f32.mrb[0].mxu0
        %v2826 = vadd.f32 %v2665, %v2825
        %v2827 = vpop.f32.mrb[0].mxu0
        %2828 = vmatprep.mubr.bf16.mxu0 0
        %2829 = vmatmul.mubr.bf16.gmra.mrb[0].mxu0 %v1447
        %v2830 = vpop.f32.mrb[0].mxu0
        %v2831 = vadd.f32 %v2670, %v2830
        %v2832 = vpop.f32.mrb[0].mxu0
        %v2833 = vpop.f32.mrb[0].mxu0
        %v2834 = vadd.f32 %v2673, %v2833
        %v2835 = vpop.f32.mrb[0].mxu0
        %2836 = vmatprep.mubr.bf16.mxu0 0
        %2837 = vmatmul.mubr.bf16.gmra.mrb[0].mxu0 %v1456
        %v2838 = vpop.f32.mrb[0].mxu0
        %v2839 = vadd.f32 %v2678, %v2838
        %v2840 = vpop.f32.mrb[0].mxu0
        %v2841 = vpop.f32.mrb[0].mxu0
        %v2842 = vadd.f32 %v2681, %v2841
        %v2843 = vpop.f32.mrb[0].mxu0
        %2844 = vmatprep.mubr.bf16.mxu0 0
        %2845 = vmatmul.mubr.bf16.gmra.mrb[0].mxu0 %v1465
        %v2846 = vpop.f32.mrb[0].mxu0
        %v2847 = vadd.f32 %v2686, %v2846
        %v2848 = vpop.f32.mrb[0].mxu0
        %v2849 = vpop.f32.mrb[0].mxu0
        %v2850 = vadd.f32 %v2689, %v2849
        %v2851 = vpop.f32.mrb[0].mxu0
        %2852 = vmatprep.mubr.bf16.mxu0 0
        %2853 = vmatmul.mubr.bf16.gmra.mrb[0].mxu0 %v1474
        %v2854 = vpop.f32.mrb[0].mxu0
        %v2855 = vadd.f32 %v2694, %v2854
        %v2856 = vpop.f32.mrb[0].mxu0
        %v2857 = vpop.f32.mrb[0].mxu0
        %v2858 = vadd.f32 %v2697, %v2857
        %v2859 = vpop.f32.mrb[0].mxu0
        %2860 = vmatprep.mubr.bf16.mxu0 0
        %2861 = vmatmul.mubr.bf16.gmra.mrb[0].mxu0 %v1483
        %v2862 = vpop.f32.mrb[0].mxu0
        %v2863 = vadd.f32 %v2702, %v2862
        %v2864 = vpop.f32.mrb[0].mxu0
        %v2865 = vpop.f32.mrb[0].mxu0
        %v2866 = vadd.f32 %v2705, %v2865
        %v2867 = vpop.f32.mrb[0].mxu0
        %2868 = vmatprep.mubr.bf16.mxu0 0
        %2869 = vmatmul.mubr.bf16.gmra.mrb[0].mxu0 %v1492
        %v2870 = vpop.f32.mrb[0].mxu0
        %v2871 = vadd.f32 %v2710, %v2870
        %v2872 = vpop.f32.mrb[0].mxu0
        %v2873 = vpop.f32.mrb[0].mxu0
        %v2874 = vadd.f32 %v2713, %v2873
        %v2875 = vpop.f32.mrb[0].mxu0
        %2876 = vmatprep.mubr.bf16.mxu0 0
        %2877 = vmatmul.mubr.bf16.gmra.mrb[0].mxu0 %v1501
        %v2878 = vpop.f32.mrb[0].mxu0
        %v2879 = vadd.f32 %v2718, %v2878
        %v2880 = vpop.f32.mrb[0].mxu0
        %v2881 = vpop.f32.mrb[0].mxu0
        %v2882 = vadd.f32 %v2721, %v2881
        %v2883 = vpop.f32.mrb[0].mxu0
        %2884 = vmatprep.mubr.bf16.mxu0 0
        %2885 = vmatmul.mubr.bf16.gmra.mrb[0].mxu0 %v1510
        %v2886 = vpop.f32.mrb[0].mxu0
        %v2887 = vadd.f32 %v2726, %v2886
        %v2888 = vpop.f32.mrb[0].mxu0
        %v2889 = vpop.f32.mrb[0].mxu0
        %v2890 = vadd.f32 %v2729, %v2889
        %v2891 = vpop.f32.mrb[0].mxu0
        %2892 = vmatprep.mubr.bf16.mxu0 0
        %2893 = vmatmul.mubr.bf16.gmra.mrb[0].mxu0 %v1519
        %v2894 = vpop.f32.mrb[0].mxu0
        %v2895 = vadd.f32 %v2734, %v2894
        %v2896 = vpop.f32.mrb[0].mxu0
        %v2897 = vpop.f32.mrb[0].mxu0
        %v2898 = vadd.f32 %v2737, %v2897
        %v2899 = vpop.f32.mrb[0].mxu0
        %2900 = vdwg.mxu0
        %v2901 = vlaneseq
        %v2902 = vshrl.u32 %v2901, 7
        %v2903 = vsub.s32 0, %v2902
        %v2904 = vrot.slane %v505, %v2903
        %v2905 = vmul.f32 %v2775, %v2904
        %v2906 = vmul.f32 %v2778, %v2904
        %v2907 = vmul.f32 %v2783, %v2904
        %v2908 = vmul.f32 %v2786, %v2904
        %v2909 = vmul.f32 %v2791, %v2904
        %v2910 = vmul.f32 %v2794, %v2904
        %v2911 = vmul.f32 %v2799, %v2904
        %v2912 = vmul.f32 %v2802, %v2904
        %v2913 = vmul.f32 %v2807, %v2904
        %v2914 = vmul.f32 %v2810, %v2904
        %v2915 = vmul.f32 %v2815, %v2904
        %v2916 = vmul.f32 %v2818, %v2904
        %v2917 = vmul.f32 %v2823, %v2904
        %v2918 = vmul.f32 %v2826, %v2904
        %v2919 = vmul.f32 %v2831, %v2904
        %v2920 = vmul.f32 %v2834, %v2904
        %v2921 = vmul.f32 %v2839, %v2904
        %v2922 = vmul.f32 %v2842, %v2904
        %v2923 = vmul.f32 %v2847, %v2904
        %v2924 = vmul.f32 %v2850, %v2904
        %v2925 = vmul.f32 %v2855, %v2904
        %v2926 = vmul.f32 %v2858, %v2904
        %v2927 = vmul.f32 %v2863, %v2904
        %v2928 = vmul.f32 %v2866, %v2904
        %v2929 = vmul.f32 %v2871, %v2904
        %v2930 = vmul.f32 %v2874, %v2904
        %v2931 = vmul.f32 %v2879, %v2904
        %v2932 = vmul.f32 %v2882, %v2904
        %v2933 = vmul.f32 %v2887, %v2904
        %v2934 = vmul.f32 %v2890, %v2904
        %v2935 = vmul.f32 %v2895, %v2904
        %v2936 = vmul.f32 %v2898, %v2904
        %s2937 = sld [smem:[#allocation3]]
        %v2938 = vld [vmem:[%s338] sm:$0xff]
        %v2939 = vld [vmem:[%s338 + $0x8] sm:$0xff]
        %v2940 = vld [vmem:[%s338 + $0x10] sm:$0xff]
        %v2941 = vld [vmem:[%s338 + $0x18] sm:$0xff]
        %v2942 = vld [vmem:[%s338 + $0x20] sm:$0xff]
        %v2943 = vld [vmem:[%s338 + $0x28] sm:$0xff]
        %v2944 = vld [vmem:[%s338 + $0x30] sm:$0xff]
        %v2945 = vld [vmem:[%s338 + $0x38] sm:$0xff]
        %v2946 = vld [vmem:[%s338 + $0x40] sm:$0xff]
        %v2947 = vld [vmem:[%s338 + $0x48] sm:$0xff]
        %v2948 = vld [vmem:[%s338 + $0x50] sm:$0xff]
        %v2949 = vld [vmem:[%s338 + $0x58] sm:$0xff]
        %v2950 = vld [vmem:[%s338 + $0x60] sm:$0xff]
        %v2951 = vld [vmem:[%s338 + $0x68] sm:$0xff]
        %v2952 = vld [vmem:[%s338 + $0x70] sm:$0xff]
        %v2953 = vld [vmem:[%s338 + $0x78] sm:$0xff]
        %v2954 = vld [vmem:[%s338 + $0x80] sm:$0xff]
        %v2955 = vld [vmem:[%s338 + $0x88] sm:$0xff]
        %v2956 = vld [vmem:[%s338 + $0x90] sm:$0xff]
        %v2957 = vld [vmem:[%s338 + $0x98] sm:$0xff]
        %v2958 = vld [vmem:[%s338 + $0xa0] sm:$0xff]
        %v2959 = vld [vmem:[%s338 + $0xa8] sm:$0xff]
        %v2960 = vld [vmem:[%s338 + $0xb0] sm:$0xff]
        %v2961 = vld [vmem:[%s338 + $0xb8] sm:$0xff]
        %v2962 = vld [vmem:[%s338 + $0xc0] sm:$0xff]
        %v2963 = vld [vmem:[%s338 + $0xc8] sm:$0xff]
        %v2964 = vld [vmem:[%s338 + $0xd0] sm:$0xff]
        %v2965 = vld [vmem:[%s338 + $0xd8] sm:$0xff]
        %v2966 = vld [vmem:[%s338 + $0xe0] sm:$0xff]
        %v2967 = vld [vmem:[%s338 + $0xe8] sm:$0xff]
        %v2968 = vld [vmem:[%s338 + $0xf0] sm:$0xff]
        %v2969 = vld [vmem:[%s338 + $0xf8] sm:$0xff]
        %v2970 = vstv %s2937
        %v2971 = vmul.f32 %v2970, %v2938
        %v2972 = vmul.f32 %v2970, %v2939
        %v2973 = vmul.f32 %v2970, %v2940
        %v2974 = vmul.f32 %v2970, %v2941
        %v2975 = vmul.f32 %v2970, %v2942
        %v2976 = vmul.f32 %v2970, %v2943
        %v2977 = vmul.f32 %v2970, %v2944
        %v2978 = vmul.f32 %v2970, %v2945
        %v2979 = vmul.f32 %v2970, %v2946
        %v2980 = vmul.f32 %v2970, %v2947
        %v2981 = vmul.f32 %v2970, %v2948
        %v2982 = vmul.f32 %v2970, %v2949
        %v2983 = vmul.f32 %v2970, %v2950
        %v2984 = vmul.f32 %v2970, %v2951
        %v2985 = vmul.f32 %v2970, %v2952
        %v2986 = vmul.f32 %v2970, %v2953
        %v2987 = vmul.f32 %v2970, %v2954
        %v2988 = vmul.f32 %v2970, %v2955
        %v2989 = vmul.f32 %v2970, %v2956
        %v2990 = vmul.f32 %v2970, %v2957
        %v2991 = vmul.f32 %v2970, %v2958
        %v2992 = vmul.f32 %v2970, %v2959
        %v2993 = vmul.f32 %v2970, %v2960
        %v2994 = vmul.f32 %v2970, %v2961
        %v2995 = vmul.f32 %v2970, %v2962
        %v2996 = vmul.f32 %v2970, %v2963
        %v2997 = vmul.f32 %v2970, %v2964
        %v2998 = vmul.f32 %v2970, %v2965
        %v2999 = vmul.f32 %v2970, %v2966
        %v3000 = vmul.f32 %v2970, %v2967
        %v3001 = vmul.f32 %v2970, %v2968
        %v3002 = vmul.f32 %v2970, %v2969
        %3004 = vset.pattern.permute.xlu0 0
        %3005 = vperm.xlu0 %3004, %v2971
        %v3006 = vpop.permute.xlu0 %3005
        %3009 = vset.pattern.permute.xlu0 0
        %3010 = vperm.xlu0 %3009, %v2972
        %v3011 = vpop.permute.xlu0 %3010
        %3014 = vset.pattern.permute.xlu0 0
        %3015 = vperm.xlu0 %3014, %v2973
        %v3016 = vpop.permute.xlu0 %3015
        %3019 = vset.pattern.permute.xlu0 0
        %3020 = vperm.xlu0 %3019, %v2974
        %v3021 = vpop.permute.xlu0 %3020
        %3024 = vset.pattern.permute.xlu0 0
        %3025 = vperm.xlu0 %3024, %v2975
        %v3026 = vpop.permute.xlu0 %3025
        %3029 = vset.pattern.permute.xlu0 0
        %3030 = vperm.xlu0 %3029, %v2976
        %v3031 = vpop.permute.xlu0 %3030
        %3034 = vset.pattern.permute.xlu0 0
        %3035 = vperm.xlu0 %3034, %v2977
        %v3036 = vpop.permute.xlu0 %3035
        %3039 = vset.pattern.permute.xlu0 0
        %3040 = vperm.xlu0 %3039, %v2978
        %v3041 = vpop.permute.xlu0 %3040
        %3044 = vset.pattern.permute.xlu0 0
        %3045 = vperm.xlu0 %3044, %v2979
        %v3046 = vpop.permute.xlu0 %3045
        %3049 = vset.pattern.permute.xlu0 0
        %3050 = vperm.xlu0 %3049, %v2980
        %v3051 = vpop.permute.xlu0 %3050
        %3054 = vset.pattern.permute.xlu0 0
        %3055 = vperm.xlu0 %3054, %v2981
        %v3056 = vpop.permute.xlu0 %3055
        %3059 = vset.pattern.permute.xlu0 0
        %3060 = vperm.xlu0 %3059, %v2982
        %v3061 = vpop.permute.xlu0 %3060
        %3064 = vset.pattern.permute.xlu0 0
        %3065 = vperm.xlu0 %3064, %v2983
        %v3066 = vpop.permute.xlu0 %3065
        %3069 = vset.pattern.permute.xlu0 0
        %3070 = vperm.xlu0 %3069, %v2984
        %v3071 = vpop.permute.xlu0 %3070
        %3074 = vset.pattern.permute.xlu0 0
        %3075 = vperm.xlu0 %3074, %v2985
        %v3076 = vpop.permute.xlu0 %3075
        %3079 = vset.pattern.permute.xlu0 0
        %3080 = vperm.xlu0 %3079, %v2986
        %v3081 = vpop.permute.xlu0 %3080
        %3084 = vset.pattern.permute.xlu0 0
        %3085 = vperm.xlu0 %3084, %v2987
        %v3086 = vpop.permute.xlu0 %3085
        %3089 = vset.pattern.permute.xlu0 0
        %3090 = vperm.xlu0 %3089, %v2988
        %v3091 = vpop.permute.xlu0 %3090
        %3094 = vset.pattern.permute.xlu0 0
        %3095 = vperm.xlu0 %3094, %v2989
        %v3096 = vpop.permute.xlu0 %3095
        %3099 = vset.pattern.permute.xlu0 0
        %3100 = vperm.xlu0 %3099, %v2990
        %v3101 = vpop.permute.xlu0 %3100
        %3104 = vset.pattern.permute.xlu0 0
        %3105 = vperm.xlu0 %3104, %v2991
        %v3106 = vpop.permute.xlu0 %3105
        %3109 = vset.pattern.permute.xlu0 0
        %3110 = vperm.xlu0 %3109, %v2992
        %v3111 = vpop.permute.xlu0 %3110
        %3114 = vset.pattern.permute.xlu0 0
        %3115 = vperm.xlu0 %3114, %v2993
        %v3116 = vpop.permute.xlu0 %3115
        %3119 = vset.pattern.permute.xlu0 0
        %3120 = vperm.xlu0 %3119, %v2994
        %v3121 = vpop.permute.xlu0 %3120
        %3124 = vset.pattern.permute.xlu0 0
        %3125 = vperm.xlu0 %3124, %v2995
        %v3126 = vpop.permute.xlu0 %3125
        %3129 = vset.pattern.permute.xlu0 0
        %3130 = vperm.xlu0 %3129, %v2996
        %v3131 = vpop.permute.xlu0 %3130
        %3134 = vset.pattern.permute.xlu0 0
        %3135 = vperm.xlu0 %3134, %v2997
        %v3136 = vpop.permute.xlu0 %3135
        %3139 = vset.pattern.permute.xlu0 0
        %3140 = vperm.xlu0 %3139, %v2998
        %v3141 = vpop.permute.xlu0 %3140
        %3144 = vset.pattern.permute.xlu0 0
        %3145 = vperm.xlu0 %3144, %v2999
        %v3146 = vpop.permute.xlu0 %3145
        %3149 = vset.pattern.permute.xlu0 0
        %3150 = vperm.xlu0 %3149, %v3000
        %v3151 = vpop.permute.xlu0 %3150
        %3154 = vset.pattern.permute.xlu0 0
        %3155 = vperm.xlu0 %3154, %v3001
        %v3156 = vpop.permute.xlu0 %3155
        %3159 = vset.pattern.permute.xlu0 0
        %3160 = vperm.xlu0 %3159, %v3002
        %v3161 = vpop.permute.xlu0 %3160
        %v3163 = vadd.f32 %v2905, %v3006
        %v3164 = vadd.f32 %v2906, %v3011
        %v3165 = vadd.f32 %v2907, %v3016
        %v3166 = vadd.f32 %v2908, %v3021
        %v3167 = vadd.f32 %v2909, %v3026
        %v3168 = vadd.f32 %v2910, %v3031
        %v3169 = vadd.f32 %v2911, %v3036
        %v3170 = vadd.f32 %v2912, %v3041
        %v3171 = vadd.f32 %v2913, %v3046
        %v3172 = vadd.f32 %v2914, %v3051
        %v3173 = vadd.f32 %v2915, %v3056
        %v3174 = vadd.f32 %v2916, %v3061
        %v3175 = vadd.f32 %v2917, %v3066
        %v3176 = vadd.f32 %v2918, %v3071
        %v3177 = vadd.f32 %v2919, %v3076
        %v3178 = vadd.f32 %v2920, %v3081
        %v3179 = vadd.f32 %v2921, %v3086
        %v3180 = vadd.f32 %v2922, %v3091
        %v3181 = vadd.f32 %v2923, %v3096
        %v3182 = vadd.f32 %v2924, %v3101
        %v3183 = vadd.f32 %v2925, %v3106
        %v3184 = vadd.f32 %v2926, %v3111
        %v3185 = vadd.f32 %v2927, %v3116
        %v3186 = vadd.f32 %v2928, %v3121
        %v3187 = vadd.f32 %v2929, %v3126
        %v3188 = vadd.f32 %v2930, %v3131
        %v3189 = vadd.f32 %v2931, %v3136
        %v3190 = vadd.f32 %v2932, %v3141
        %v3191 = vadd.f32 %v2933, %v3146
        %v3192 = vadd.f32 %v2934, %v3151
        %v3193 = vadd.f32 %v2935, %v3156
        %v3194 = vadd.f32 %v2936, %v3161
        %vm3195 = vcmp.ge.f32.partialorder %v3163, 0.0
        %vm3196 = vcmp.ge.f32.partialorder %v3164, 0.0
        %vm3197 = vcmp.ge.f32.partialorder %v3165, 0.0
        %vm3198 = vcmp.ge.f32.partialorder %v3166, 0.0
        %vm3199 = vcmp.ge.f32.partialorder %v3167, 0.0
        %vm3200 = vcmp.ge.f32.partialorder %v3168, 0.0
        %vm3201 = vcmp.ge.f32.partialorder %v3169, 0.0
        %vm3202 = vcmp.ge.f32.partialorder %v3170, 0.0
        %vm3203 = vcmp.ge.f32.partialorder %v3171, 0.0
        %vm3204 = vcmp.ge.f32.partialorder %v3172, 0.0
        %vm3205 = vcmp.ge.f32.partialorder %v3173, 0.0
        %vm3206 = vcmp.ge.f32.partialorder %v3174, 0.0
        %vm3207 = vcmp.ge.f32.partialorder %v3175, 0.0
        %vm3208 = vcmp.ge.f32.partialorder %v3176, 0.0
        %vm3209 = vcmp.ge.f32.partialorder %v3177, 0.0
        %vm3210 = vcmp.ge.f32.partialorder %v3178, 0.0
        %vm3211 = vcmp.ge.f32.partialorder %v3179, 0.0
        %vm3212 = vcmp.ge.f32.partialorder %v3180, 0.0
        %vm3213 = vcmp.ge.f32.partialorder %v3181, 0.0
        %vm3214 = vcmp.ge.f32.partialorder %v3182, 0.0
        %vm3215 = vcmp.ge.f32.partialorder %v3183, 0.0
        %vm3216 = vcmp.ge.f32.partialorder %v3184, 0.0
        %vm3217 = vcmp.ge.f32.partialorder %v3185, 0.0
        %vm3218 = vcmp.ge.f32.partialorder %v3186, 0.0
        %vm3219 = vcmp.ge.f32.partialorder %v3187, 0.0
        %vm3220 = vcmp.ge.f32.partialorder %v3188, 0.0
        %vm3221 = vcmp.ge.f32.partialorder %v3189, 0.0
        %vm3222 = vcmp.ge.f32.partialorder %v3190, 0.0
        %vm3223 = vcmp.ge.f32.partialorder %v3191, 0.0
        %vm3224 = vcmp.ge.f32.partialorder %v3192, 0.0
        %vm3225 = vcmp.ge.f32.partialorder %v3193, 0.0
        %vm3226 = vcmp.ge.f32.partialorder %v3194, 0.0
        %v3227 = vmul.f32 %v3163, 0.2
        %v3228 = vmul.f32 %v3164, 0.2
        %v3229 = vmul.f32 %v3165, 0.2
        %v3230 = vmul.f32 %v3166, 0.2
        %v3231 = vmul.f32 %v3167, 0.2
        %v3232 = vmul.f32 %v3168, 0.2
        %v3233 = vmul.f32 %v3169, 0.2
        %v3234 = vmul.f32 %v3170, 0.2
        %v3235 = vmul.f32 %v3171, 0.2
        %v3236 = vmul.f32 %v3172, 0.2
        %v3237 = vmul.f32 %v3173, 0.2
        %v3238 = vmul.f32 %v3174, 0.2
        %v3239 = vmul.f32 %v3175, 0.2
        %v3240 = vmul.f32 %v3176, 0.2
        %v3241 = vmul.f32 %v3177, 0.2
        %v3242 = vmul.f32 %v3178, 0.2
        %v3243 = vmul.f32 %v3179, 0.2
        %v3244 = vmul.f32 %v3180, 0.2
        %v3245 = vmul.f32 %v3181, 0.2
        %v3246 = vmul.f32 %v3182, 0.2
        %v3247 = vmul.f32 %v3183, 0.2
        %v3248 = vmul.f32 %v3184, 0.2
        %v3249 = vmul.f32 %v3185, 0.2
        %v3250 = vmul.f32 %v3186, 0.2
        %v3251 = vmul.f32 %v3187, 0.2
        %v3252 = vmul.f32 %v3188, 0.2
        %v3253 = vmul.f32 %v3189, 0.2
        %v3254 = vmul.f32 %v3190, 0.2
        %v3255 = vmul.f32 %v3191, 0.2
        %v3256 = vmul.f32 %v3192, 0.2
        %v3257 = vmul.f32 %v3193, 0.2
        %v3258 = vmul.f32 %v3194, 0.2
        %v3259 = vsel %vm3195, %v3163, %v3227
        %v3260 = vsel %vm3196, %v3164, %v3228
        %v3261 = vsel %vm3197, %v3165, %v3229
        %v3262 = vsel %vm3198, %v3166, %v3230
        %v3263 = vsel %vm3199, %v3167, %v3231
        %v3264 = vsel %vm3200, %v3168, %v3232
        %v3265 = vsel %vm3201, %v3169, %v3233
        %v3266 = vsel %vm3202, %v3170, %v3234
        %v3267 = vsel %vm3203, %v3171, %v3235
        %v3268 = vsel %vm3204, %v3172, %v3236
        %v3269 = vsel %vm3205, %v3173, %v3237
        %v3270 = vsel %vm3206, %v3174, %v3238
        %v3271 = vsel %vm3207, %v3175, %v3239
        %v3272 = vsel %vm3208, %v3176, %v3240
        %v3273 = vsel %vm3209, %v3177, %v3241
        %v3274 = vsel %vm3210, %v3178, %v3242
        %v3275 = vsel %vm3211, %v3179, %v3243
        %v3276 = vsel %vm3212, %v3180, %v3244
        %v3277 = vsel %vm3213, %v3181, %v3245
        %v3278 = vsel %vm3214, %v3182, %v3246
        %v3279 = vsel %vm3215, %v3183, %v3247
        %v3280 = vsel %vm3216, %v3184, %v3248
        %v3281 = vsel %vm3217, %v3185, %v3249
        %v3282 = vsel %vm3218, %v3186, %v3250
        %v3283 = vsel %vm3219, %v3187, %v3251
        %v3284 = vsel %vm3220, %v3188, %v3252
        %v3285 = vsel %vm3221, %v3189, %v3253
        %v3286 = vsel %vm3222, %v3190, %v3254
        %v3287 = vsel %vm3223, %v3191, %v3255
        %v3288 = vsel %vm3224, %v3192, %v3256
        %v3289 = vsel %vm3225, %v3193, %v3257
        %v3290 = vsel %vm3226, %v3194, %v3258
        %3291 = vst [vmem:[%s325] sm:$0xff] %v3259
        %3292 = vst [vmem:[%s325 + $0x8] sm:$0xff] %v3260
        %3293 = vst [vmem:[%s325 + $0x10] sm:$0xff] %v3261
        %3294 = vst [vmem:[%s325 + $0x18] sm:$0xff] %v3262
        %3295 = vst [vmem:[%s325 + $0x20] sm:$0xff] %v3263
        %3296 = vst [vmem:[%s325 + $0x28] sm:$0xff] %v3264
        %3297 = vst [vmem:[%s325 + $0x30] sm:$0xff] %v3265
        %3298 = vst [vmem:[%s325 + $0x38] sm:$0xff] %v3266
        %3299 = vst [vmem:[%s325 + $0x40] sm:$0xff] %v3267
        %3300 = vst [vmem:[%s325 + $0x48] sm:$0xff] %v3268
        %3301 = vst [vmem:[%s325 + $0x50] sm:$0xff] %v3269
        %3302 = vst [vmem:[%s325 + $0x58] sm:$0xff] %v3270
        %3303 = vst [vmem:[%s325 + $0x60] sm:$0xff] %v3271
        %3304 = vst [vmem:[%s325 + $0x68] sm:$0xff] %v3272
        %3305 = vst [vmem:[%s325 + $0x70] sm:$0xff] %v3273
        %3306 = vst [vmem:[%s325 + $0x78] sm:$0xff] %v3274
        %3307 = vst [vmem:[%s325 + $0x80] sm:$0xff] %v3275
        %3308 = vst [vmem:[%s325 + $0x88] sm:$0xff] %v3276
        %3309 = vst [vmem:[%s325 + $0x90] sm:$0xff] %v3277
        %3310 = vst [vmem:[%s325 + $0x98] sm:$0xff] %v3278
        %3311 = vst [vmem:[%s325 + $0xa0] sm:$0xff] %v3279
        %3312 = vst [vmem:[%s325 + $0xa8] sm:$0xff] %v3280
        %3313 = vst [vmem:[%s325 + $0xb0] sm:$0xff] %v3281
        %3314 = vst [vmem:[%s325 + $0xb8] sm:$0xff] %v3282
        %3315 = vst [vmem:[%s325 + $0xc0] sm:$0xff] %v3283
        %3316 = vst [vmem:[%s325 + $0xc8] sm:$0xff] %v3284
        %3317 = vst [vmem:[%s325 + $0xd0] sm:$0xff] %v3285
        %3318 = vst [vmem:[%s325 + $0xd8] sm:$0xff] %v3286
        %3319 = vst [vmem:[%s325 + $0xe0] sm:$0xff] %v3287
        %3320 = vst [vmem:[%s325 + $0xe8] sm:$0xff] %v3288
        %3321 = vst [vmem:[%s325 + $0xf0] sm:$0xff] %v3289
        %3322 = vst [vmem:[%s325 + $0xf8] sm:$0xff] %v3290
        %s3323 = sand.u32 %s214, 1
        %s3324 = scalar_lea.sflag [#allocation5], %s3323
        %s3325 = sand.u32 %s214, 1
        %s3326 = smul.addr %s3325, 256
        %s3327 = scalar_lea.vmem [#allocation4], %s3326
        // Predicated region
        $region53: #{tpu_custom_call.1} parent=51 // pred_check
          %p3328 = pneg %p224
        $region54: #{tpu_custom_call.1} parent=51 // pred_check_branch
          %3330 = sbr.rel (%p3328) target = $region56
        $region55: #{tpu_custom_call.1} parent=51 // pred_region
          %s3332 = ssub.s32 4096, 4096
          %3333 = vsyncadd %s3324, %s3332
          %s3334 = smul.addr %s23, 32
          %s3335 = smul.addr %s3334, 128
          %s3336 = scalar_lea.hbm %s8, %s3335
          %s3337 = sshll.u32 %s3327, 4
          %s3338 = int_to_ptr.vmem [resolvable:$true] %s3337
          %3343 = dma.vmem_to_hbm [thread:$0]  %s3338, 4096, %s3336, %s3324, 128, 128, 8
        $region56: #{tpu_custom_call.1} parent=51 // pred_fallthru
          _
      $region52: #{tpu_custom_call.1} parent=5 // pred_fallthru
        _
      %p3344 = scmp.le.s32.totalorder 2, %s18
      // Predicated region
      $region57: #{tpu_custom_call.1} parent=5 // pred_check
        %p3345 = pneg %p3344
      $region58: #{tpu_custom_call.1} parent=5 // pred_check_branch
        %3347 = sbr.rel (%p3345) target = $region60
      $region59: #{tpu_custom_call.1} parent=5 // pred_region
        %s3348 = ssub.s32 %s18, 2
        // Predicated region
        $region61: #{tpu_custom_call.1} parent=59 // pred_check
          %p3349 = pneg %p230
        $region62: #{tpu_custom_call.1} parent=59 // pred_check_branch
          %3351 = sbr.rel (%p3349) target = $region64
        $region63: #{tpu_custom_call.1} parent=59 // pred_region
          %s3352 = sand.u32 %s215, 1
          %s3353 = scalar_lea.sflag [#allocation5], %s3352
          %s3354 = sand.u32 %s215, 1
          %s3355 = smul.addr %s3354, 256
          %s3356 = scalar_lea.vmem [#allocation4], %s3355
          %3357 = dma.done %s3353, 4096
        $region64: #{tpu_custom_call.1} parent=59 // pred_fallthru
          _
      $region60: #{tpu_custom_call.1} parent=5 // pred_fallthru
        _
    $region6: #{tpu_custom_call.1} parent=1 // loop_footer
      %s22 = sadd.s32 1, %s18
    $region7: #{tpu_custom_call.1} parent=1 // loop_footer_branch
      %17 = sbr.rel target = $region3
    $region8: #{tpu_custom_call.1} parent=1 // loop_exit
      _
    %3358 = vsyncpa [#allocation5], 1
    %s3359 = scalar_lea.sflag [#allocation5], 1
    %3360 = vsyncpa %s3359, 1

</llo_original>
